<compile_context>
chip_gen: v7x
topology: tpu7x:2x2x1
jax: 0.10.0
libtpu: 0.0.40
codegen_flags: <defaults>
</compile_context>

<pallas_src>
import functools

import jax
import jax.numpy as jnp
from jax.experimental import pallas as pl
from jax.experimental.pallas import tpu as pltpu


# ----------------------------------------------------------------------------
# In-kernel helpers (traced values + refs, all shapes static)
# ----------------------------------------------------------------------------
def _dyn_conv(x, w_ref, fc1_ref, fc2_ref, fc2b_ref, cols_ref, out_ref,
              *, ksize, pad, temperature):
    """Dynamic_conv1d (stride=1, no bias) for the whole batch.

    x        : (B, C_in, L) value
    w_ref    : (K, C_out, ksize*C_in) ref   (columns ordered t*C_in + c)
    fc1_ref  : (C_in, hidden) ref           (attention 1x1 conv #1, pre-transposed)
    fc2_ref  : (hidden, K) ref              (attention 1x1 conv #2, pre-transposed)
    fc2b_ref : (1, K) ref
    cols_ref : (B, ksize*C_in, L_out) VMEM scratch (None iff ksize==1 and pad==0)
    out_ref  : (B, C_out, L_out) ref
    """
    b_sz, c_in, length = x.shape
    num_k = w_ref.shape[0]
    l_out = length + 2 * pad - ksize + 1

    # --- attention over the K candidate kernels (batched over B) ---
    gap = jnp.mean(x, axis=2)                                             # (B, C_in)
    h = jnp.maximum(
        jnp.dot(gap, fc1_ref[...], preferred_element_type=jnp.float32), 0.0)
    logits = (jnp.dot(h, fc2_ref[...], preferred_element_type=jnp.float32)
              + fc2b_ref[...]) * (1.0 / temperature)                      # (B, K)
    m = jnp.max(logits, axis=1, keepdims=True)
    e = jnp.exp(logits - m)
    attn = e * pl.reciprocal(jnp.sum(e, axis=1, keepdims=True), approx=True)

    # --- im2col staging (zero padding handled by zero-init + interior stores) ---
    if cols_ref is not None:
        cols_ref[...] = jnp.zeros(cols_ref.shape, cols_ref.dtype)
        for t in range(ksize):
            lo = max(0, pad - t)
            hi = min(l_out, length + pad - t)
            if hi > lo:
                cols_ref[:, t * c_in:(t + 1) * c_in, lo:hi] = (
                    x[:, :, lo + t - pad:hi + t - pad])

    # --- per sample: aggregate the K kernels, then ONE deep matmul ---
    for b in range(b_sz):
        w_agg = attn[b, 0] * w_ref[0]
        for k in range(1, num_k):
            w_agg = w_agg + attn[b, k] * w_ref[k]                         # (C_out, ksize*C_in)
        rhs = cols_ref[b] if cols_ref is not None else x[b]               # (ksize*C_in, L_out)
        out_ref[b] = jnp.dot(w_agg, rhs, preferred_element_type=jnp.float32)


def _batchnorm1d(x, g, b, *, eps, relu):
    """Training-mode BatchNorm1d over (B, C, L) with optional fused ReLU."""
    mean = jnp.mean(jnp.mean(x, axis=2, keepdims=True), axis=0, keepdims=True)
    d = x - mean
    var = jnp.mean(jnp.mean(d * d, axis=2, keepdims=True), axis=0, keepdims=True)
    y = d * jax.lax.rsqrt(var + eps) * g + b
    return jnp.maximum(y, 0.0) if relu else y


def _shrinkage(x, w1t, b1, g, be, w2t, b2, *, eps):
    """Soft thresholding with a learned per-(B, C) threshold."""
    x_abs = jnp.abs(x)
    gap = jnp.mean(x_abs, axis=2)                              # (B, C)
    average = jnp.mean(gap, axis=1, keepdims=True)             # (B, 1)
    t = jnp.dot(gap, w1t, preferred_element_type=jnp.float32) + b1
    mu = jnp.mean(t, axis=0, keepdims=True)
    var = jnp.mean(jnp.square(t - mu), axis=0, keepdims=True)
    t = (t - mu) * jax.lax.rsqrt(var + eps) * g + be
    t = jnp.maximum(t, 0.0)
    t = jnp.dot(t, w2t, preferred_element_type=jnp.float32) + b2
    s = pl.reciprocal(1.0 + jnp.exp(-t), approx=True)          # sigmoid (EUP)
    thr = (average * s)[:, :, None]                            # (B, C, 1)
    n_sub = jnp.maximum(x_abs - thr, 0.0)
    sgn = jnp.where(x > 0, 1.0, jnp.where(x < 0, -1.0, 0.0))   # torch.sign
    return sgn * n_sub


# ----------------------------------------------------------------------------
# Fused ASU block kernel
# ----------------------------------------------------------------------------
def asu_fused_kernel(
    x_ref,
    w1_ref, a11_ref, a12_ref, a1b_ref,        # residual dyn-conv (ksize=3, pad=1)
    w2_ref, a21_ref, a22_ref, a2b_ref,        # conv2             (ksize=3, pad=1)
    ws_ref, as1_ref, as2_ref, asb_ref,        # shortcut dyn-conv (ksize=1, pad=0)
    bn1g_ref, bn1b_ref, bn2g_ref, bn2b_ref, bnsg_ref, bnsb_ref,
    sw1_ref, sb1_ref, sg_ref, sbe_ref, sw2_ref, sb2_ref,
    o_ref,
    cols1_ref, r1_ref, cols2_ref, r2_ref, sc_ref,
    *, k1, p1, t1, k2, p2, t2, ks, ps, ts, eps, has_shortcut):
    x = x_ref[...]

    # residual branch: dynconv -> BN+ReLU -> dynconv -> BN -> shrinkage
    _dyn_conv(x, w1_ref, a11_ref, a12_ref, a1b_ref, cols1_ref, r1_ref,
              ksize=k1, pad=p1, temperature=t1)
    r = _batchnorm1d(r1_ref[...], bn1g_ref[...], bn1b_ref[...], eps=eps, relu=True)
    _dyn_conv(r, w2_ref, a21_ref, a22_ref, a2b_ref, cols2_ref, r2_ref,
              ksize=k2, pad=p2, temperature=t2)
    r = _batchnorm1d(r2_ref[...], bn2g_ref[...], bn2b_ref[...], eps=eps, relu=False)
    r = _shrinkage(r, sw1_ref[...], sb1_ref[...], sg_ref[...], sbe_ref[...],
                   sw2_ref[...], sb2_ref[...], eps=eps)

    # shortcut branch
    if has_shortcut:
        _dyn_conv(x, ws_ref, as1_ref, as2_ref, asb_ref, None, sc_ref,
                  ksize=ks, pad=ps, temperature=ts)
        s = _batchnorm1d(sc_ref[...], bnsg_ref[...], bnsb_ref[...],
                         eps=eps, relu=False)
    else:
        s = x

    o_ref[...] = jnp.maximum(r + s, 0.0)


# ----------------------------------------------------------------------------
# Wrapper (one pallas_call for the whole block)
# ----------------------------------------------------------------------------
def asu_block_forward(x, p, stride=1):
    assert stride == 1, "stride > 1 not implemented"  # TODO(synk): strided Dynamic_conv1d
    b, c_in, length = x.shape
    rc, c2, sc = p["res_conv"], p["conv2"], p["short_conv"]
    c_out = rc["w"].shape[1]
    assert sc["ksize"] == 1 and sc["pad"] == 0
    has_shortcut = (stride != 1) or (c_in != c_out)

    l1 = length + 2 * rc["pad"] - rc["ksize"] + 1      # after residual conv
    l2 = l1 + 2 * c2["pad"] - c2["ksize"] + 1          # after conv2
    ls = length + 2 * sc["pad"] - sc["ksize"] + 1      # after shortcut conv
    assert l2 == (ls if has_shortcut else length)

    kernel = functools.partial(
        asu_fused_kernel,
        k1=rc["ksize"], p1=rc["pad"], t1=rc["temperature"],
        k2=c2["ksize"], p2=c2["pad"], t2=c2["temperature"],
        ks=sc["ksize"], ps=sc["pad"], ts=sc["temperature"],
        eps=1e-5, has_shortcut=has_shortcut)

    scratch = [
        pltpu.VMEM((b, rc["ksize"] * c_in, l1), jnp.float32),     # im2col conv1
        pltpu.VMEM((b, c_out, l1), jnp.float32),                  # conv1 output
        pltpu.VMEM((b, c2["ksize"] * c_out, l2), jnp.float32),    # im2col conv2
        pltpu.VMEM((b, c_out, l2), jnp.float32),                  # conv2 output
        pltpu.VMEM((b, c_out, ls), jnp.float32),                  # shortcut conv output
    ]
    sh = p["shrink"]
    return pl.pallas_call(
        kernel,
        out_shape=jax.ShapeDtypeStruct((b, c_out, l2), jnp.float32),
        scratch_shapes=scratch,
    )(x,
      rc["w"], rc["fc1_t"], rc["fc2_t"], rc["fc2_b"],
      c2["w"], c2["fc1_t"], c2["fc2_t"], c2["fc2_b"],
      sc["w"], sc["fc1_t"], sc["fc2_t"], sc["fc2_b"],
      p["bn1_g"], p["bn1_b"], p["bn2_g"], p["bn2_b"], p["bns_g"], p["bns_b"],
      sh["w1_t"], sh["b1"], sh["bn_g"], sh["bn_b"], sh["w2_t"], sh["b2"])


# ----------------------------------------------------------------------------
# Deterministic parameter construction + one-time kernel-layout preparation
# ----------------------------------------------------------------------------
def make_dynconv_params(key, c_in, c_out, ksize, pad, num_k=4, ratio=0.25,
                        temperature=34.0):
    hidden = int(c_in * ratio) + 1
    k1, k2, k3 = jax.random.split(key, 3)
    return dict(
        weight=0.1 * jax.random.normal(k1, (num_k, c_out, c_in, ksize), jnp.float32),
        fc1_w=0.1 * jax.random.normal(k2, (hidden, c_in), jnp.float32),
        fc2_w=0.1 * jax.random.normal(k3, (num_k, hidden), jnp.float32),
        fc2_b=jnp.zeros((num_k, 1), jnp.float32),
        ksize=ksize, pad=pad, temperature=temperature,
    )


def make_bn_params(key, c):
    k1, k2 = jax.random.split(key)
    g = 1.0 + 0.1 * jax.random.normal(k1, (1, c, 1), jnp.float32)
    b = 0.1 * jax.random.normal(k2, (1, c, 1), jnp.float32)
    return g, b


def make_shrinkage_params(key, c):
    k1, k2, k3, k4, k5, k6 = jax.random.split(key, 6)
    return dict(
        w1_t=0.1 * jax.random.normal(k1, (c, c), jnp.float32),   # (in, out)
        b1=0.1 * jax.random.normal(k2, (1, c), jnp.float32),
        bn_g=1.0 + 0.1 * jax.random.normal(k3, (1, c), jnp.float32),
        bn_b=0.1 * jax.random.normal(k4, (1, c), jnp.float32),
        w2_t=0.1 * jax.random.normal(k5, (c, c), jnp.float32),
        b2=0.1 * jax.random.normal(k6, (1, c), jnp.float32),
    )


def make_asu_params(key, c_in, c_out):
    keys = jax.random.split(key, 8)
    bn1_g, bn1_b = make_bn_params(keys[3], c_out)
    bn2_g, bn2_b = make_bn_params(keys[4], c_out)
    bns_g, bns_b = make_bn_params(keys[5], c_out)
    return dict(
        res_conv=make_dynconv_params(keys[0], c_in, c_out, ksize=3, pad=1),
        conv2=make_dynconv_params(keys[1], c_out, c_out, ksize=3, pad=1),
        short_conv=make_dynconv_params(keys[2], c_in, c_out, ksize=1, pad=0),
        bn1_g=bn1_g, bn1_b=bn1_b,
        bn2_g=bn2_g, bn2_b=bn2_b,
        bns_g=bns_g, bns_b=bns_b,
        shrink=make_shrinkage_params(keys[6], c_out),
    )


def prepare_asu_params(params):
    """One-time re-layout of parameters for the fused kernel (hoisted transposes)."""
    def prep_conv(p):
        w = p["weight"]                                   # (K, C_out, C_in, ksize)
        num_k, c_out, c_in, ks = w.shape
        # columns ordered t*C_in + c, matching the in-kernel im2col layout
        w3 = jnp.transpose(w, (0, 1, 3, 2)).reshape(num_k, c_out, ks * c_in)
        return dict(w=w3,
                    fc1_t=jnp.transpose(p["fc1_w"]),      # (C_in, hidden)
                    fc2_t=jnp.transpose(p["fc2_w"]),      # (hidden, K)
                    fc2_b=jnp.reshape(p["fc2_b"], (1, -1)),
                    ksize=ks, pad=p["pad"],
                    temperature=float(p["temperature"]))

    out = dict(params)
    out["res_conv"] = prep_conv(params["res_conv"])
    out["conv2"] = prep_conv(params["conv2"])
    out["short_conv"] = prep_conv(params["short_conv"])
    return out


# ----------------------------------------------------------------------------
if __name__ == "__main__":
    B, C_IN, C_OUT, L = 2, 8, 16, 16
    key = jax.random.PRNGKey(0)
    kx, kp = jax.random.split(key)
    x = jax.random.normal(kx, (B, C_IN, L), jnp.float32)
    params = prepare_asu_params(make_asu_params(kp, C_IN, C_OUT))

    out = asu_block_forward(x, params, stride=1)
    out = jax.block_until_ready(out)

    assert out.shape == (B, C_OUT, L)
    assert bool(jnp.all(out >= 0.0))          # final ReLU
    assert bool(jnp.all(jnp.isfinite(out)))
    print("KERNEL_OK")
</pallas_src>

<mosaic_0001>
module attributes {stable_mosaic.version = 11 : i64} {
  func.func @asu_fused_kernel(%arg0: memref<2x8x16xf32, #tpu.memory_space<vmem>>, %arg1: memref<4x16x24xf32, #tpu.memory_space<vmem>>, %arg2: memref<8x3xf32, #tpu.memory_space<vmem>>, %arg3: memref<3x4xf32, #tpu.memory_space<vmem>>, %arg4: memref<1x4xf32, #tpu.memory_space<vmem>>, %arg5: memref<4x16x48xf32, #tpu.memory_space<vmem>>, %arg6: memref<16x5xf32, #tpu.memory_space<vmem>>, %arg7: memref<5x4xf32, #tpu.memory_space<vmem>>, %arg8: memref<1x4xf32, #tpu.memory_space<vmem>>, %arg9: memref<4x16x8xf32, #tpu.memory_space<vmem>>, %arg10: memref<8x3xf32, #tpu.memory_space<vmem>>, %arg11: memref<3x4xf32, #tpu.memory_space<vmem>>, %arg12: memref<1x4xf32, #tpu.memory_space<vmem>>, %arg13: memref<1x16x1xf32, #tpu.memory_space<vmem>>, %arg14: memref<1x16x1xf32, #tpu.memory_space<vmem>>, %arg15: memref<1x16x1xf32, #tpu.memory_space<vmem>>, %arg16: memref<1x16x1xf32, #tpu.memory_space<vmem>>, %arg17: memref<1x16x1xf32, #tpu.memory_space<vmem>>, %arg18: memref<1x16x1xf32, #tpu.memory_space<vmem>>, %arg19: memref<16x16xf32, #tpu.memory_space<vmem>>, %arg20: memref<1x16xf32, #tpu.memory_space<vmem>>, %arg21: memref<1x16xf32, #tpu.memory_space<vmem>>, %arg22: memref<1x16xf32, #tpu.memory_space<vmem>>, %arg23: memref<16x16xf32, #tpu.memory_space<vmem>>, %arg24: memref<1x16xf32, #tpu.memory_space<vmem>>, %arg25: memref<2x16x16xf32, #tpu.memory_space<vmem>>, %arg26: memref<2x24x16xf32, #tpu.memory_space<vmem>>, %arg27: memref<2x16x16xf32, #tpu.memory_space<vmem>>, %arg28: memref<2x48x16xf32, #tpu.memory_space<vmem>>, %arg29: memref<2x16x16xf32, #tpu.memory_space<vmem>>, %arg30: memref<2x16x16xf32, #tpu.memory_space<vmem>>) attributes {dimension_semantics = [], scalar_prefetch = 0 : i64, scratch_operands = 5 : i64, tpu.core_type = #tpu.core_type<tc>} {
    %c0 = arith.constant 0 : index
    %c0_0 = arith.constant 0 : index
    %c0_1 = arith.constant 0 : index
    %0 = vector.load %arg0[%c0, %c0_0, %c0_1] : memref<2x8x16xf32, #tpu.memory_space<vmem>>, vector<2x8x16xf32>
    %cst = arith.constant dense<0.000000e+00> : vector<2x8xf32>
    %1 = vector.multi_reduction <add>, %0, %cst [2] : vector<2x8x16xf32> to vector<2x8xf32>
    %cst_2 = arith.constant 1.600000e+01 : f32
    %2 = vector.broadcast %cst_2 : f32 to vector<2x8xf32>
    %3 = arith.divf %1, %2 : vector<2x8xf32>
    %c0_3 = arith.constant 0 : index
    %c0_4 = arith.constant 0 : index
    %4 = vector.load %arg2[%c0_3, %c0_4] : memref<8x3xf32, #tpu.memory_space<vmem>>, vector<8x3xf32>
    %cst_5 = arith.constant dense<0.000000e+00> : vector<2x3xf32>
    %5 = tpu.matmul %3, %4, %cst_5 {dimension_numbers = #tpu.dot_dimension_numbers<[1], [0], [0], [1], [0, 0, 1, 1], [], []>} : vector<2x8xf32>, vector<8x3xf32>, vector<2x3xf32> -> vector<2x3xf32>
    %cst_6 = arith.constant 0.000000e+00 : f32
    %6 = vector.broadcast %cst_6 : f32 to vector<2x3xf32>
    %7 = arith.maximumf %5, %6 : vector<2x3xf32>
    %c0_7 = arith.constant 0 : index
    %c0_8 = arith.constant 0 : index
    %8 = vector.load %arg3[%c0_7, %c0_8] : memref<3x4xf32, #tpu.memory_space<vmem>>, vector<3x4xf32>
    %cst_9 = arith.constant dense<0.000000e+00> : vector<2x4xf32>
    %9 = tpu.matmul %7, %8, %cst_9 {dimension_numbers = #tpu.dot_dimension_numbers<[1], [0], [0], [1], [0, 0, 1, 1], [], []>} : vector<2x3xf32>, vector<3x4xf32>, vector<2x4xf32> -> vector<2x4xf32>
    %c0_10 = arith.constant 0 : index
    %c0_11 = arith.constant 0 : index
    %10 = vector.load %arg4[%c0_10, %c0_11] : memref<1x4xf32, #tpu.memory_space<vmem>>, vector<1x4xf32>
    %11 = vector.broadcast %10 : vector<1x4xf32> to vector<2x4xf32>
    %12 = arith.addf %9, %11 : vector<2x4xf32>
    %cst_12 = arith.constant 0.0294117648 : f32
    %13 = vector.broadcast %cst_12 : f32 to vector<2x4xf32>
    %14 = arith.mulf %12, %13 : vector<2x4xf32>
    %cst_13 = arith.constant dense<0xFF800000> : vector<2xf32>
    %15 = vector.multi_reduction <maximumf>, %14, %cst_13 [1] : vector<2x4xf32> to vector<2xf32>
    %16 = vector.shape_cast %15 : vector<2xf32> to vector<2x1xf32>
    %17 = vector.broadcast %16 : vector<2x1xf32> to vector<2x4xf32>
    %18 = arith.subf %14, %17 : vector<2x4xf32>
    %19 = math.exp %18 : vector<2x4xf32>
    %cst_14 = arith.constant dense<0.000000e+00> : vector<2xf32>
    %20 = vector.multi_reduction <add>, %19, %cst_14 [1] : vector<2x4xf32> to vector<2xf32>
    %21 = vector.shape_cast %20 : vector<2xf32> to vector<2x1xf32>
    %22 = tpu.reciprocal %21 {approx = true} : vector<2x1xf32> -> vector<2x1xf32>
    %23 = vector.broadcast %22 : vector<2x1xf32> to vector<2x4xf32>
    %24 = arith.mulf %19, %23 : vector<2x4xf32>
    %cst_15 = arith.constant 0.000000e+00 : f32
    %25 = vector.broadcast %cst_15 : f32 to vector<2x24x16xf32>
    %c0_16 = arith.constant 0 : index
    %c0_17 = arith.constant 0 : index
    %c0_18 = arith.constant 0 : index
    %26 = vector.load %arg26[%c0_16, %c0_17, %c0_18] : memref<2x24x16xf32, #tpu.memory_space<vmem>>, vector<2x24x16xf32>
    tpu.vector_store %arg26[%c0_16, %c0_17, %c0_18], %25 {strides = array<i32>} : memref<2x24x16xf32, #tpu.memory_space<vmem>>, vector<2x24x16xf32>,
    %27 = vector.extract_strided_slice %0 {offsets = [0, 0, 0], sizes = [2, 8, 15], strides = [1, 1, 1]} : vector<2x8x16xf32> to vector<2x8x15xf32>
    %c0_19 = arith.constant 0 : index
    %c0_20 = arith.constant 0 : index
    %c1 = arith.constant 1 : index
    %28 = vector.load %arg26[%c0_19, %c0_20, %c1] : memref<2x24x16xf32, #tpu.memory_space<vmem>>, vector<2x8x15xf32>
    tpu.vector_store %arg26[%c0_19, %c0_20, %c1], %27 {strides = array<i32>} : memref<2x24x16xf32, #tpu.memory_space<vmem>>, vector<2x8x15xf32>,
    %c0_21 = arith.constant 0 : index
    %c8 = arith.constant 8 : index
    %c0_22 = arith.constant 0 : index
    %29 = vector.load %arg26[%c0_21, %c8, %c0_22] : memref<2x24x16xf32, #tpu.memory_space<vmem>>, vector<2x8x16xf32>
    tpu.vector_store %arg26[%c0_21, %c8, %c0_22], %0 {strides = array<i32>} : memref<2x24x16xf32, #tpu.memory_space<vmem>>, vector<2x8x16xf32>,
    %30 = vector.extract_strided_slice %0 {offsets = [0, 0, 1], sizes = [2, 8, 15], strides = [1, 1, 1]} : vector<2x8x16xf32> to vector<2x8x15xf32>
    %c0_23 = arith.constant 0 : index
    %c16 = arith.constant 16 : index
    %c0_24 = arith.constant 0 : index
    %31 = vector.load %arg26[%c0_23, %c16, %c0_24] : memref<2x24x16xf32, #tpu.memory_space<vmem>>, vector<2x8x15xf32>
    tpu.vector_store %arg26[%c0_23, %c16, %c0_24], %30 {strides = array<i32>} : memref<2x24x16xf32, #tpu.memory_space<vmem>>, vector<2x8x15xf32>,
    %32 = vector.extract_strided_slice %24 {offsets = [0, 0], sizes = [1, 1], strides = [1, 1]} : vector<2x4xf32> to vector<1x1xf32>
    %33 = vector.extract %32[0, 0] : f32 from vector<1x1xf32>
    %c0_25 = arith.constant 0 : index
    %c0_26 = arith.constant 0 : index
    %c0_27 = arith.constant 0 : index
    %34 = vector.load %arg1[%c0_25, %c0_26, %c0_27] : memref<4x16x24xf32, #tpu.memory_space<vmem>>, vector<1x16x24xf32>
    %35 = vector.shape_cast %34 : vector<1x16x24xf32> to vector<16x24xf32>
    %36 = vector.broadcast %33 : f32 to vector<16x24xf32>
    %37 = arith.mulf %36, %35 : vector<16x24xf32>
    %38 = vector.extract_strided_slice %24 {offsets = [0, 1], sizes = [1, 1], strides = [1, 1]} : vector<2x4xf32> to vector<1x1xf32>
    %39 = vector.extract %38[0, 0] : f32 from vector<1x1xf32>
    %c1_28 = arith.constant 1 : index
    %c0_29 = arith.constant 0 : index
    %c0_30 = arith.constant 0 : index
    %40 = vector.load %arg1[%c1_28, %c0_29, %c0_30] : memref<4x16x24xf32, #tpu.memory_space<vmem>>, vector<1x16x24xf32>
    %41 = vector.shape_cast %40 : vector<1x16x24xf32> to vector<16x24xf32>
    %42 = vector.broadcast %39 : f32 to vector<16x24xf32>
    %43 = arith.mulf %42, %41 : vector<16x24xf32>
    %44 = arith.addf %37, %43 : vector<16x24xf32>
    %45 = vector.extract_strided_slice %24 {offsets = [0, 2], sizes = [1, 1], strides = [1, 1]} : vector<2x4xf32> to vector<1x1xf32>
    %46 = vector.extract %45[0, 0] : f32 from vector<1x1xf32>
    %c2 = arith.constant 2 : index
    %c0_31 = arith.constant 0 : index
    %c0_32 = arith.constant 0 : index
    %47 = vector.load %arg1[%c2, %c0_31, %c0_32] : memref<4x16x24xf32, #tpu.memory_space<vmem>>, vector<1x16x24xf32>
    %48 = vector.shape_cast %47 : vector<1x16x24xf32> to vector<16x24xf32>
    %49 = vector.broadcast %46 : f32 to vector<16x24xf32>
    %50 = arith.mulf %49, %48 : vector<16x24xf32>
    %51 = arith.addf %44, %50 : vector<16x24xf32>
    %52 = vector.extract_strided_slice %24 {offsets = [0, 3], sizes = [1, 1], strides = [1, 1]} : vector<2x4xf32> to vector<1x1xf32>
    %53 = vector.extract %52[0, 0] : f32 from vector<1x1xf32>
    %c3 = arith.constant 3 : index
    %c0_33 = arith.constant 0 : index
    %c0_34 = arith.constant 0 : index
    %54 = vector.load %arg1[%c3, %c0_33, %c0_34] : memref<4x16x24xf32, #tpu.memory_space<vmem>>, vector<1x16x24xf32>
    %55 = vector.shape_cast %54 : vector<1x16x24xf32> to vector<16x24xf32>
    %56 = vector.broadcast %53 : f32 to vector<16x24xf32>
    %57 = arith.mulf %56, %55 : vector<16x24xf32>
    %58 = arith.addf %51, %57 : vector<16x24xf32>
    %c0_35 = arith.constant 0 : index
    %c0_36 = arith.constant 0 : index
    %c0_37 = arith.constant 0 : index
    %59 = vector.load %arg26[%c0_35, %c0_36, %c0_37] : memref<2x24x16xf32, #tpu.memory_space<vmem>>, vector<1x24x16xf32>
    %60 = vector.shape_cast %59 : vector<1x24x16xf32> to vector<24x16xf32>
    %cst_38 = arith.constant dense<0.000000e+00> : vector<16x16xf32>
    %61 = tpu.matmul %58, %60, %cst_38 {dimension_numbers = #tpu.dot_dimension_numbers<[1], [0], [0], [1], [0, 0, 1, 1], [], []>} : vector<16x24xf32>, vector<24x16xf32>, vector<16x16xf32> -> vector<16x16xf32>
    %c0_39 = arith.constant 0 : index
    %c0_40 = arith.constant 0 : index
    %c0_41 = arith.constant 0 : index
    %62 = vector.load %arg27[%c0_39, %c0_40, %c0_41] : memref<2x16x16xf32, #tpu.memory_space<vmem>>, vector<1x16x16xf32>
    %63 = vector.shape_cast %62 : vector<1x16x16xf32> to vector<16x16xf32>
    %64 = vector.shape_cast %61 : vector<16x16xf32> to vector<1x16x16xf32>
    tpu.vector_store %arg27[%c0_39, %c0_40, %c0_41], %64 {strides = array<i32>} : memref<2x16x16xf32, #tpu.memory_space<vmem>>, vector<1x16x16xf32>,
    %65 = vector.extract_strided_slice %24 {offsets = [1, 0], sizes = [1, 1], strides = [1, 1]} : vector<2x4xf32> to vector<1x1xf32>
    %66 = vector.extract %65[0, 0] : f32 from vector<1x1xf32>
    %c0_42 = arith.constant 0 : index
    %c0_43 = arith.constant 0 : index
    %c0_44 = arith.constant 0 : index
    %67 = vector.load %arg1[%c0_42, %c0_43, %c0_44] : memref<4x16x24xf32, #tpu.memory_space<vmem>>, vector<1x16x24xf32>
    %68 = vector.shape_cast %67 : vector<1x16x24xf32> to vector<16x24xf32>
    %69 = vector.broadcast %66 : f32 to vector<16x24xf32>
    %70 = arith.mulf %69, %68 : vector<16x24xf32>
    %71 = vector.extract_strided_slice %24 {offsets = [1, 1], sizes = [1, 1], strides = [1, 1]} : vector<2x4xf32> to vector<1x1xf32>
    %72 = vector.extract %71[0, 0] : f32 from vector<1x1xf32>
    %c1_45 = arith.constant 1 : index
    %c0_46 = arith.constant 0 : index
    %c0_47 = arith.constant 0 : index
    %73 = vector.load %arg1[%c1_45, %c0_46, %c0_47] : memref<4x16x24xf32, #tpu.memory_space<vmem>>, vector<1x16x24xf32>
    %74 = vector.shape_cast %73 : vector<1x16x24xf32> to vector<16x24xf32>
    %75 = vector.broadcast %72 : f32 to vector<16x24xf32>
    %76 = arith.mulf %75, %74 : vector<16x24xf32>
    %77 = arith.addf %70, %76 : vector<16x24xf32>
    %78 = vector.extract_strided_slice %24 {offsets = [1, 2], sizes = [1, 1], strides = [1, 1]} : vector<2x4xf32> to vector<1x1xf32>
    %79 = vector.extract %78[0, 0] : f32 from vector<1x1xf32>
    %c2_48 = arith.constant 2 : index
    %c0_49 = arith.constant 0 : index
    %c0_50 = arith.constant 0 : index
    %80 = vector.load %arg1[%c2_48, %c0_49, %c0_50] : memref<4x16x24xf32, #tpu.memory_space<vmem>>, vector<1x16x24xf32>
    %81 = vector.shape_cast %80 : vector<1x16x24xf32> to vector<16x24xf32>
    %82 = vector.broadcast %79 : f32 to vector<16x24xf32>
    %83 = arith.mulf %82, %81 : vector<16x24xf32>
    %84 = arith.addf %77, %83 : vector<16x24xf32>
    %85 = vector.extract_strided_slice %24 {offsets = [1, 3], sizes = [1, 1], strides = [1, 1]} : vector<2x4xf32> to vector<1x1xf32>
    %86 = vector.extract %85[0, 0] : f32 from vector<1x1xf32>
    %c3_51 = arith.constant 3 : index
    %c0_52 = arith.constant 0 : index
    %c0_53 = arith.constant 0 : index
    %87 = vector.load %arg1[%c3_51, %c0_52, %c0_53] : memref<4x16x24xf32, #tpu.memory_space<vmem>>, vector<1x16x24xf32>
    %88 = vector.shape_cast %87 : vector<1x16x24xf32> to vector<16x24xf32>
    %89 = vector.broadcast %86 : f32 to vector<16x24xf32>
    %90 = arith.mulf %89, %88 : vector<16x24xf32>
    %91 = arith.addf %84, %90 : vector<16x24xf32>
    %c1_54 = arith.constant 1 : index
    %c0_55 = arith.constant 0 : index
    %c0_56 = arith.constant 0 : index
    %92 = vector.load %arg26[%c1_54, %c0_55, %c0_56] : memref<2x24x16xf32, #tpu.memory_space<vmem>>, vector<1x24x16xf32>
    %93 = vector.shape_cast %92 : vector<1x24x16xf32> to vector<24x16xf32>
    %cst_57 = arith.constant dense<0.000000e+00> : vector<16x16xf32>
    %94 = tpu.matmul %91, %93, %cst_57 {dimension_numbers = #tpu.dot_dimension_numbers<[1], [0], [0], [1], [0, 0, 1, 1], [], []>} : vector<16x24xf32>, vector<24x16xf32>, vector<16x16xf32> -> vector<16x16xf32>
    %c1_58 = arith.constant 1 : index
    %c0_59 = arith.constant 0 : index
    %c0_60 = arith.constant 0 : index
    %95 = vector.load %arg27[%c1_58, %c0_59, %c0_60] : memref<2x16x16xf32, #tpu.memory_space<vmem>>, vector<1x16x16xf32>
    %96 = vector.shape_cast %95 : vector<1x16x16xf32> to vector<16x16xf32>
    %97 = vector.shape_cast %94 : vector<16x16xf32> to vector<1x16x16xf32>
    tpu.vector_store %arg27[%c1_58, %c0_59, %c0_60], %97 {strides = array<i32>} : memref<2x16x16xf32, #tpu.memory_space<vmem>>, vector<1x16x16xf32>,
    %c0_61 = arith.constant 0 : index
    %c0_62 = arith.constant 0 : index
    %c0_63 = arith.constant 0 : index
    %98 = vector.load %arg27[%c0_61, %c0_62, %c0_63] : memref<2x16x16xf32, #tpu.memory_space<vmem>>, vector<2x16x16xf32>
    %c0_64 = arith.constant 0 : index
    %c0_65 = arith.constant 0 : index
    %c0_66 = arith.constant 0 : index
    %99 = vector.load %arg13[%c0_64, %c0_65, %c0_66] : memref<1x16x1xf32, #tpu.memory_space<vmem>>, vector<1x16x1xf32>
    %c0_67 = arith.constant 0 : index
    %c0_68 = arith.constant 0 : index
    %c0_69 = arith.constant 0 : index
    %100 = vector.load %arg14[%c0_67, %c0_68, %c0_69] : memref<1x16x1xf32, #tpu.memory_space<vmem>>, vector<1x16x1xf32>
    %cst_70 = arith.constant dense<0.000000e+00> : vector<2x16xf32>
    %101 = vector.multi_reduction <add>, %98, %cst_70 [2] : vector<2x16x16xf32> to vector<2x16xf32>
    %102 = vector.shape_cast %101 : vector<2x16xf32> to vector<2x16x1xf32>
    %cst_71 = arith.constant 1.600000e+01 : f32
    %103 = vector.broadcast %cst_71 : f32 to vector<2x16x1xf32>
    %104 = arith.divf %102, %103 : vector<2x16x1xf32>
    %cst_72 = arith.constant dense<0.000000e+00> : vector<16x1xf32>
    %105 = vector.multi_reduction <add>, %104, %cst_72 [0] : vector<2x16x1xf32> to vector<16x1xf32>
    %106 = vector.shape_cast %105 : vector<16x1xf32> to vector<1x16x1xf32>
    %cst_73 = arith.constant 2.000000e+00 : f32
    %107 = vector.broadcast %cst_73 : f32 to vector<1x16x1xf32>
    %108 = arith.divf %106, %107 : vector<1x16x1xf32>
    %109 = vector.broadcast %108 : vector<1x16x1xf32> to vector<2x16x16xf32>
    %110 = arith.subf %98, %109 : vector<2x16x16xf32>
    %111 = arith.mulf %110, %110 : vector<2x16x16xf32>
    %cst_74 = arith.constant dense<0.000000e+00> : vector<2x16xf32>
    %112 = vector.multi_reduction <add>, %111, %cst_74 [2] : vector<2x16x16xf32> to vector<2x16xf32>
    %113 = vector.shape_cast %112 : vector<2x16xf32> to vector<2x16x1xf32>
    %cst_75 = arith.constant 1.600000e+01 : f32
    %114 = vector.broadcast %cst_75 : f32 to vector<2x16x1xf32>
    %115 = arith.divf %113, %114 : vector<2x16x1xf32>
    %cst_76 = arith.constant dense<0.000000e+00> : vector<16x1xf32>
    %116 = vector.multi_reduction <add>, %115, %cst_76 [0] : vector<2x16x1xf32> to vector<16x1xf32>
    %117 = vector.shape_cast %116 : vector<16x1xf32> to vector<1x16x1xf32>
    %cst_77 = arith.constant 2.000000e+00 : f32
    %118 = vector.broadcast %cst_77 : f32 to vector<1x16x1xf32>
    %119 = arith.divf %117, %118 : vector<1x16x1xf32>
    %cst_78 = arith.constant 9.99999974E-6 : f32
    %120 = vector.broadcast %cst_78 : f32 to vector<1x16x1xf32>
    %121 = arith.addf %119, %120 : vector<1x16x1xf32>
    %122 = math.rsqrt %121 : vector<1x16x1xf32>
    %123 = vector.broadcast %122 : vector<1x16x1xf32> to vector<2x16x16xf32>
    %124 = arith.mulf %110, %123 : vector<2x16x16xf32>
    %125 = vector.broadcast %99 : vector<1x16x1xf32> to vector<2x16x16xf32>
    %126 = arith.mulf %124, %125 : vector<2x16x16xf32>
    %127 = vector.broadcast %100 : vector<1x16x1xf32> to vector<2x16x16xf32>
    %128 = arith.addf %126, %127 : vector<2x16x16xf32>
    %cst_79 = arith.constant 0.000000e+00 : f32
    %129 = vector.broadcast %cst_79 : f32 to vector<2x16x16xf32>
    %130 = arith.maximumf %128, %129 : vector<2x16x16xf32>
    %cst_80 = arith.constant dense<0.000000e+00> : vector<2x16xf32>
    %131 = vector.multi_reduction <add>, %130, %cst_80 [2] : vector<2x16x16xf32> to vector<2x16xf32>
    %cst_81 = arith.constant 1.600000e+01 : f32
    %132 = vector.broadcast %cst_81 : f32 to vector<2x16xf32>
    %133 = arith.divf %131, %132 : vector<2x16xf32>
    %c0_82 = arith.constant 0 : index
    %c0_83 = arith.constant 0 : index
    %134 = vector.load %arg6[%c0_82, %c0_83] : memref<16x5xf32, #tpu.memory_space<vmem>>, vector<16x5xf32>
    %cst_84 = arith.constant dense<0.000000e+00> : vector<2x5xf32>
    %135 = tpu.matmul %133, %134, %cst_84 {dimension_numbers = #tpu.dot_dimension_numbers<[1], [0], [0], [1], [0, 0, 1, 1], [], []>} : vector<2x16xf32>, vector<16x5xf32>, vector<2x5xf32> -> vector<2x5xf32>
    %cst_85 = arith.constant 0.000000e+00 : f32
    %136 = vector.broadcast %cst_85 : f32 to vector<2x5xf32>
    %137 = arith.maximumf %135, %136 : vector<2x5xf32>
    %c0_86 = arith.constant 0 : index
    %c0_87 = arith.constant 0 : index
    %138 = vector.load %arg7[%c0_86, %c0_87] : memref<5x4xf32, #tpu.memory_space<vmem>>, vector<5x4xf32>
    %cst_88 = arith.constant dense<0.000000e+00> : vector<2x4xf32>
    %139 = tpu.matmul %137, %138, %cst_88 {dimension_numbers = #tpu.dot_dimension_numbers<[1], [0], [0], [1], [0, 0, 1, 1], [], []>} : vector<2x5xf32>, vector<5x4xf32>, vector<2x4xf32> -> vector<2x4xf32>
    %c0_89 = arith.constant 0 : index
    %c0_90 = arith.constant 0 : index
    %140 = vector.load %arg8[%c0_89, %c0_90] : memref<1x4xf32, #tpu.memory_space<vmem>>, vector<1x4xf32>
    %141 = vector.broadcast %140 : vector<1x4xf32> to vector<2x4xf32>
    %142 = arith.addf %139, %141 : vector<2x4xf32>
    %cst_91 = arith.constant 0.0294117648 : f32
    %143 = vector.broadcast %cst_91 : f32 to vector<2x4xf32>
    %144 = arith.mulf %142, %143 : vector<2x4xf32>
    %cst_92 = arith.constant dense<0xFF800000> : vector<2xf32>
    %145 = vector.multi_reduction <maximumf>, %144, %cst_92 [1] : vector<2x4xf32> to vector<2xf32>
    %146 = vector.shape_cast %145 : vector<2xf32> to vector<2x1xf32>
    %147 = vector.broadcast %146 : vector<2x1xf32> to vector<2x4xf32>
    %148 = arith.subf %144, %147 : vector<2x4xf32>
    %149 = math.exp %148 : vector<2x4xf32>
    %cst_93 = arith.constant dense<0.000000e+00> : vector<2xf32>
    %150 = vector.multi_reduction <add>, %149, %cst_93 [1] : vector<2x4xf32> to vector<2xf32>
    %151 = vector.shape_cast %150 : vector<2xf32> to vector<2x1xf32>
    %152 = tpu.reciprocal %151 {approx = true} : vector<2x1xf32> -> vector<2x1xf32>
    %153 = vector.broadcast %152 : vector<2x1xf32> to vector<2x4xf32>
    %154 = arith.mulf %149, %153 : vector<2x4xf32>
    %cst_94 = arith.constant 0.000000e+00 : f32
    %155 = vector.broadcast %cst_94 : f32 to vector<2x48x16xf32>
    %c0_95 = arith.constant 0 : index
    %c0_96 = arith.constant 0 : index
    %c0_97 = arith.constant 0 : index
    %156 = vector.load %arg28[%c0_95, %c0_96, %c0_97] : memref<2x48x16xf32, #tpu.memory_space<vmem>>, vector<2x48x16xf32>
    tpu.vector_store %arg28[%c0_95, %c0_96, %c0_97], %155 {strides = array<i32>} : memref<2x48x16xf32, #tpu.memory_space<vmem>>, vector<2x48x16xf32>,
    %157 = vector.extract_strided_slice %130 {offsets = [0, 0, 0], sizes = [2, 16, 15], strides = [1, 1, 1]} : vector<2x16x16xf32> to vector<2x16x15xf32>
    %c0_98 = arith.constant 0 : index
    %c0_99 = arith.constant 0 : index
    %c1_100 = arith.constant 1 : index
    %158 = vector.load %arg28[%c0_98, %c0_99, %c1_100] : memref<2x48x16xf32, #tpu.memory_space<vmem>>, vector<2x16x15xf32>
    tpu.vector_store %arg28[%c0_98, %c0_99, %c1_100], %157 {strides = array<i32>} : memref<2x48x16xf32, #tpu.memory_space<vmem>>, vector<2x16x15xf32>,
    %c0_101 = arith.constant 0 : index
    %c16_102 = arith.constant 16 : index
    %c0_103 = arith.constant 0 : index
    %159 = vector.load %arg28[%c0_101, %c16_102, %c0_103] : memref<2x48x16xf32, #tpu.memory_space<vmem>>, vector<2x16x16xf32>
    tpu.vector_store %arg28[%c0_101, %c16_102, %c0_103], %130 {strides = array<i32>} : memref<2x48x16xf32, #tpu.memory_space<vmem>>, vector<2x16x16xf32>,
    %160 = vector.extract_strided_slice %130 {offsets = [0, 0, 1], sizes = [2, 16, 15], strides = [1, 1, 1]} : vector<2x16x16xf32> to vector<2x16x15xf32>
    %c0_104 = arith.constant 0 : index
    %c32 = arith.constant 32 : index
    %c0_105 = arith.constant 0 : index
    %161 = vector.load %arg28[%c0_104, %c32, %c0_105] : memref<2x48x16xf32, #tpu.memory_space<vmem>>, vector<2x16x15xf32>
    tpu.vector_store %arg28[%c0_104, %c32, %c0_105], %160 {strides = array<i32>} : memref<2x48x16xf32, #tpu.memory_space<vmem>>, vector<2x16x15xf32>,
    %162 = vector.extract_strided_slice %154 {offsets = [0, 0], sizes = [1, 1], strides = [1, 1]} : vector<2x4xf32> to vector<1x1xf32>
    %163 = vector.extract %162[0, 0] : f32 from vector<1x1xf32>
    %c0_106 = arith.constant 0 : index
    %c0_107 = arith.constant 0 : index
    %c0_108 = arith.constant 0 : index
    %164 = vector.load %arg5[%c0_106, %c0_107, %c0_108] : memref<4x16x48xf32, #tpu.memory_space<vmem>>, vector<1x16x48xf32>
    %165 = vector.shape_cast %164 : vector<1x16x48xf32> to vector<16x48xf32>
    %166 = vector.broadcast %163 : f32 to vector<16x48xf32>
    %167 = arith.mulf %166, %165 : vector<16x48xf32>
    %168 = vector.extract_strided_slice %154 {offsets = [0, 1], sizes = [1, 1], strides = [1, 1]} : vector<2x4xf32> to vector<1x1xf32>
    %169 = vector.extract %168[0, 0] : f32 from vector<1x1xf32>
    %c1_109 = arith.constant 1 : index
    %c0_110 = arith.constant 0 : index
    %c0_111 = arith.constant 0 : index
    %170 = vector.load %arg5[%c1_109, %c0_110, %c0_111] : memref<4x16x48xf32, #tpu.memory_space<vmem>>, vector<1x16x48xf32>
    %171 = vector.shape_cast %170 : vector<1x16x48xf32> to vector<16x48xf32>
    %172 = vector.broadcast %169 : f32 to vector<16x48xf32>
    %173 = arith.mulf %172, %171 : vector<16x48xf32>
    %174 = arith.addf %167, %173 : vector<16x48xf32>
    %175 = vector.extract_strided_slice %154 {offsets = [0, 2], sizes = [1, 1], strides = [1, 1]} : vector<2x4xf32> to vector<1x1xf32>
    %176 = vector.extract %175[0, 0] : f32 from vector<1x1xf32>
    %c2_112 = arith.constant 2 : index
    %c0_113 = arith.constant 0 : index
    %c0_114 = arith.constant 0 : index
    %177 = vector.load %arg5[%c2_112, %c0_113, %c0_114] : memref<4x16x48xf32, #tpu.memory_space<vmem>>, vector<1x16x48xf32>
    %178 = vector.shape_cast %177 : vector<1x16x48xf32> to vector<16x48xf32>
    %179 = vector.broadcast %176 : f32 to vector<16x48xf32>
    %180 = arith.mulf %179, %178 : vector<16x48xf32>
    %181 = arith.addf %174, %180 : vector<16x48xf32>
    %182 = vector.extract_strided_slice %154 {offsets = [0, 3], sizes = [1, 1], strides = [1, 1]} : vector<2x4xf32> to vector<1x1xf32>
    %183 = vector.extract %182[0, 0] : f32 from vector<1x1xf32>
    %c3_115 = arith.constant 3 : index
    %c0_116 = arith.constant 0 : index
    %c0_117 = arith.constant 0 : index
    %184 = vector.load %arg5[%c3_115, %c0_116, %c0_117] : memref<4x16x48xf32, #tpu.memory_space<vmem>>, vector<1x16x48xf32>
    %185 = vector.shape_cast %184 : vector<1x16x48xf32> to vector<16x48xf32>
    %186 = vector.broadcast %183 : f32 to vector<16x48xf32>
    %187 = arith.mulf %186, %185 : vector<16x48xf32>
    %188 = arith.addf %181, %187 : vector<16x48xf32>
    %c0_118 = arith.constant 0 : index
    %c0_119 = arith.constant 0 : index
    %c0_120 = arith.constant 0 : index
    %189 = vector.load %arg28[%c0_118, %c0_119, %c0_120] : memref<2x48x16xf32, #tpu.memory_space<vmem>>, vector<1x48x16xf32>
    %190 = vector.shape_cast %189 : vector<1x48x16xf32> to vector<48x16xf32>
    %cst_121 = arith.constant dense<0.000000e+00> : vector<16x16xf32>
    %191 = tpu.matmul %188, %190, %cst_121 {dimension_numbers = #tpu.dot_dimension_numbers<[1], [0], [0], [1], [0, 0, 1, 1], [], []>} : vector<16x48xf32>, vector<48x16xf32>, vector<16x16xf32> -> vector<16x16xf32>
    %c0_122 = arith.constant 0 : index
    %c0_123 = arith.constant 0 : index
    %c0_124 = arith.constant 0 : index
    %192 = vector.load %arg29[%c0_122, %c0_123, %c0_124] : memref<2x16x16xf32, #tpu.memory_space<vmem>>, vector<1x16x16xf32>
    %193 = vector.shape_cast %192 : vector<1x16x16xf32> to vector<16x16xf32>
    %194 = vector.shape_cast %191 : vector<16x16xf32> to vector<1x16x16xf32>
    tpu.vector_store %arg29[%c0_122, %c0_123, %c0_124], %194 {strides = array<i32>} : memref<2x16x16xf32, #tpu.memory_space<vmem>>, vector<1x16x16xf32>,
    %195 = vector.extract_strided_slice %154 {offsets = [1, 0], sizes = [1, 1], strides = [1, 1]} : vector<2x4xf32> to vector<1x1xf32>
    %196 = vector.extract %195[0, 0] : f32 from vector<1x1xf32>
    %c0_125 = arith.constant 0 : index
    %c0_126 = arith.constant 0 : index
    %c0_127 = arith.constant 0 : index
    %197 = vector.load %arg5[%c0_125, %c0_126, %c0_127] : memref<4x16x48xf32, #tpu.memory_space<vmem>>, vector<1x16x48xf32>
    %198 = vector.shape_cast %197 : vector<1x16x48xf32> to vector<16x48xf32>
    %199 = vector.broadcast %196 : f32 to vector<16x48xf32>
    %200 = arith.mulf %199, %198 : vector<16x48xf32>
    %201 = vector.extract_strided_slice %154 {offsets = [1, 1], sizes = [1, 1], strides = [1, 1]} : vector<2x4xf32> to vector<1x1xf32>
    %202 = vector.extract %201[0, 0] : f32 from vector<1x1xf32>
    %c1_128 = arith.constant 1 : index
    %c0_129 = arith.constant 0 : index
    %c0_130 = arith.constant 0 : index
    %203 = vector.load %arg5[%c1_128, %c0_129, %c0_130] : memref<4x16x48xf32, #tpu.memory_space<vmem>>, vector<1x16x48xf32>
    %204 = vector.shape_cast %203 : vector<1x16x48xf32> to vector<16x48xf32>
    %205 = vector.broadcast %202 : f32 to vector<16x48xf32>
    %206 = arith.mulf %205, %204 : vector<16x48xf32>
    %207 = arith.addf %200, %206 : vector<16x48xf32>
    %208 = vector.extract_strided_slice %154 {offsets = [1, 2], sizes = [1, 1], strides = [1, 1]} : vector<2x4xf32> to vector<1x1xf32>
    %209 = vector.extract %208[0, 0] : f32 from vector<1x1xf32>
    %c2_131 = arith.constant 2 : index
    %c0_132 = arith.constant 0 : index
    %c0_133 = arith.constant 0 : index
    %210 = vector.load %arg5[%c2_131, %c0_132, %c0_133] : memref<4x16x48xf32, #tpu.memory_space<vmem>>, vector<1x16x48xf32>
    %211 = vector.shape_cast %210 : vector<1x16x48xf32> to vector<16x48xf32>
    %212 = vector.broadcast %209 : f32 to vector<16x48xf32>
    %213 = arith.mulf %212, %211 : vector<16x48xf32>
    %214 = arith.addf %207, %213 : vector<16x48xf32>
    %215 = vector.extract_strided_slice %154 {offsets = [1, 3], sizes = [1, 1], strides = [1, 1]} : vector<2x4xf32> to vector<1x1xf32>
    %216 = vector.extract %215[0, 0] : f32 from vector<1x1xf32>
    %c3_134 = arith.constant 3 : index
    %c0_135 = arith.constant 0 : index
    %c0_136 = arith.constant 0 : index
    %217 = vector.load %arg5[%c3_134, %c0_135, %c0_136] : memref<4x16x48xf32, #tpu.memory_space<vmem>>, vector<1x16x48xf32>
    %218 = vector.shape_cast %217 : vector<1x16x48xf32> to vector<16x48xf32>
    %219 = vector.broadcast %216 : f32 to vector<16x48xf32>
    %220 = arith.mulf %219, %218 : vector<16x48xf32>
    %221 = arith.addf %214, %220 : vector<16x48xf32>
    %c1_137 = arith.constant 1 : index
    %c0_138 = arith.constant 0 : index
    %c0_139 = arith.constant 0 : index
    %222 = vector.load %arg28[%c1_137, %c0_138, %c0_139] : memref<2x48x16xf32, #tpu.memory_space<vmem>>, vector<1x48x16xf32>
    %223 = vector.shape_cast %222 : vector<1x48x16xf32> to vector<48x16xf32>
    %cst_140 = arith.constant dense<0.000000e+00> : vector<16x16xf32>
    %224 = tpu.matmul %221, %223, %cst_140 {dimension_numbers = #tpu.dot_dimension_numbers<[1], [0], [0], [1], [0, 0, 1, 1], [], []>} : vector<16x48xf32>, vector<48x16xf32>, vector<16x16xf32> -> vector<16x16xf32>
    %c1_141 = arith.constant 1 : index
    %c0_142 = arith.constant 0 : index
    %c0_143 = arith.constant 0 : index
    %225 = vector.load %arg29[%c1_141, %c0_142, %c0_143] : memref<2x16x16xf32, #tpu.memory_space<vmem>>, vector<1x16x16xf32>
    %226 = vector.shape_cast %225 : vector<1x16x16xf32> to vector<16x16xf32>
    %227 = vector.shape_cast %224 : vector<16x16xf32> to vector<1x16x16xf32>
    tpu.vector_store %arg29[%c1_141, %c0_142, %c0_143], %227 {strides = array<i32>} : memref<2x16x16xf32, #tpu.memory_space<vmem>>, vector<1x16x16xf32>,
    %c0_144 = arith.constant 0 : index
    %c0_145 = arith.constant 0 : index
    %c0_146 = arith.constant 0 : index
    %228 = vector.load %arg29[%c0_144, %c0_145, %c0_146] : memref<2x16x16xf32, #tpu.memory_space<vmem>>, vector<2x16x16xf32>
    %c0_147 = arith.constant 0 : index
    %c0_148 = arith.constant 0 : index
    %c0_149 = arith.constant 0 : index
    %229 = vector.load %arg15[%c0_147, %c0_148, %c0_149] : memref<1x16x1xf32, #tpu.memory_space<vmem>>, vector<1x16x1xf32>
    %c0_150 = arith.constant 0 : index
    %c0_151 = arith.constant 0 : index
    %c0_152 = arith.constant 0 : index
    %230 = vector.load %arg16[%c0_150, %c0_151, %c0_152] : memref<1x16x1xf32, #tpu.memory_space<vmem>>, vector<1x16x1xf32>
    %cst_153 = arith.constant dense<0.000000e+00> : vector<2x16xf32>
    %231 = vector.multi_reduction <add>, %228, %cst_153 [2] : vector<2x16x16xf32> to vector<2x16xf32>
    %232 = vector.shape_cast %231 : vector<2x16xf32> to vector<2x16x1xf32>
    %cst_154 = arith.constant 1.600000e+01 : f32
    %233 = vector.broadcast %cst_154 : f32 to vector<2x16x1xf32>
    %234 = arith.divf %232, %233 : vector<2x16x1xf32>
    %cst_155 = arith.constant dense<0.000000e+00> : vector<16x1xf32>
    %235 = vector.multi_reduction <add>, %234, %cst_155 [0] : vector<2x16x1xf32> to vector<16x1xf32>
    %236 = vector.shape_cast %235 : vector<16x1xf32> to vector<1x16x1xf32>
    %cst_156 = arith.constant 2.000000e+00 : f32
    %237 = vector.broadcast %cst_156 : f32 to vector<1x16x1xf32>
    %238 = arith.divf %236, %237 : vector<1x16x1xf32>
    %239 = vector.broadcast %238 : vector<1x16x1xf32> to vector<2x16x16xf32>
    %240 = arith.subf %228, %239 : vector<2x16x16xf32>
    %241 = arith.mulf %240, %240 : vector<2x16x16xf32>
    %cst_157 = arith.constant dense<0.000000e+00> : vector<2x16xf32>
    %242 = vector.multi_reduction <add>, %241, %cst_157 [2] : vector<2x16x16xf32> to vector<2x16xf32>
    %243 = vector.shape_cast %242 : vector<2x16xf32> to vector<2x16x1xf32>
    %cst_158 = arith.constant 1.600000e+01 : f32
    %244 = vector.broadcast %cst_158 : f32 to vector<2x16x1xf32>
    %245 = arith.divf %243, %244 : vector<2x16x1xf32>
    %cst_159 = arith.constant dense<0.000000e+00> : vector<16x1xf32>
    %246 = vector.multi_reduction <add>, %245, %cst_159 [0] : vector<2x16x1xf32> to vector<16x1xf32>
    %247 = vector.shape_cast %246 : vector<16x1xf32> to vector<1x16x1xf32>
    %cst_160 = arith.constant 2.000000e+00 : f32
    %248 = vector.broadcast %cst_160 : f32 to vector<1x16x1xf32>
    %249 = arith.divf %247, %248 : vector<1x16x1xf32>
    %cst_161 = arith.constant 9.99999974E-6 : f32
    %250 = vector.broadcast %cst_161 : f32 to vector<1x16x1xf32>
    %251 = arith.addf %249, %250 : vector<1x16x1xf32>
    %252 = math.rsqrt %251 : vector<1x16x1xf32>
    %253 = vector.broadcast %252 : vector<1x16x1xf32> to vector<2x16x16xf32>
    %254 = arith.mulf %240, %253 : vector<2x16x16xf32>
    %255 = vector.broadcast %229 : vector<1x16x1xf32> to vector<2x16x16xf32>
    %256 = arith.mulf %254, %255 : vector<2x16x16xf32>
    %257 = vector.broadcast %230 : vector<1x16x1xf32> to vector<2x16x16xf32>
    %258 = arith.addf %256, %257 : vector<2x16x16xf32>
    %c0_162 = arith.constant 0 : index
    %c0_163 = arith.constant 0 : index
    %259 = vector.load %arg19[%c0_162, %c0_163] : memref<16x16xf32, #tpu.memory_space<vmem>>, vector<16x16xf32>
    %c0_164 = arith.constant 0 : index
    %c0_165 = arith.constant 0 : index
    %260 = vector.load %arg20[%c0_164, %c0_165] : memref<1x16xf32, #tpu.memory_space<vmem>>, vector<1x16xf32>
    %c0_166 = arith.constant 0 : index
    %c0_167 = arith.constant 0 : index
    %261 = vector.load %arg21[%c0_166, %c0_167] : memref<1x16xf32, #tpu.memory_space<vmem>>, vector<1x16xf32>
    %c0_168 = arith.constant 0 : index
    %c0_169 = arith.constant 0 : index
    %262 = vector.load %arg22[%c0_168, %c0_169] : memref<1x16xf32, #tpu.memory_space<vmem>>, vector<1x16xf32>
    %c0_170 = arith.constant 0 : index
    %c0_171 = arith.constant 0 : index
    %263 = vector.load %arg23[%c0_170, %c0_171] : memref<16x16xf32, #tpu.memory_space<vmem>>, vector<16x16xf32>
    %c0_172 = arith.constant 0 : index
    %c0_173 = arith.constant 0 : index
    %264 = vector.load %arg24[%c0_172, %c0_173] : memref<1x16xf32, #tpu.memory_space<vmem>>, vector<1x16xf32>
    %265 = math.absf %258 : vector<2x16x16xf32>
    %cst_174 = arith.constant dense<0.000000e+00> : vector<2x16xf32>
    %266 = vector.multi_reduction <add>, %265, %cst_174 [2] : vector<2x16x16xf32> to vector<2x16xf32>
    %cst_175 = arith.constant 1.600000e+01 : f32
    %267 = vector.broadcast %cst_175 : f32 to vector<2x16xf32>
    %268 = arith.divf %266, %267 : vector<2x16xf32>
    %cst_176 = arith.constant dense<0.000000e+00> : vector<2xf32>
    %269 = vector.multi_reduction <add>, %268, %cst_176 [1] : vector<2x16xf32> to vector<2xf32>
    %270 = vector.shape_cast %269 : vector<2xf32> to vector<2x1xf32>
    %cst_177 = arith.constant 1.600000e+01 : f32
    %271 = vector.broadcast %cst_177 : f32 to vector<2x1xf32>
    %272 = arith.divf %270, %271 : vector<2x1xf32>
    %cst_178 = arith.constant dense<0.000000e+00> : vector<2x16xf32>
    %273 = tpu.matmul %268, %259, %cst_178 {dimension_numbers = #tpu.dot_dimension_numbers<[1], [0], [0], [1], [0, 0, 1, 1], [], []>} : vector<2x16xf32>, vector<16x16xf32>, vector<2x16xf32> -> vector<2x16xf32>
    %274 = vector.broadcast %260 : vector<1x16xf32> to vector<2x16xf32>
    %275 = arith.addf %273, %274 : vector<2x16xf32>
    %cst_179 = arith.constant dense<0.000000e+00> : vector<16xf32>
    %276 = vector.multi_reduction <add>, %275, %cst_179 [0] : vector<2x16xf32> to vector<16xf32>
    %277 = vector.shape_cast %276 : vector<16xf32> to vector<1x16xf32>
    %cst_180 = arith.constant 2.000000e+00 : f32
    %278 = vector.broadcast %cst_180 : f32 to vector<1x16xf32>
    %279 = arith.divf %277, %278 : vector<1x16xf32>
    %280 = vector.broadcast %279 : vector<1x16xf32> to vector<2x16xf32>
    %281 = arith.subf %275, %280 : vector<2x16xf32>
    %282 = arith.mulf %281, %281 : vector<2x16xf32>
    %cst_181 = arith.constant dense<0.000000e+00> : vector<16xf32>
    %283 = vector.multi_reduction <add>, %282, %cst_181 [0] : vector<2x16xf32> to vector<16xf32>
    %284 = vector.shape_cast %283 : vector<16xf32> to vector<1x16xf32>
    %cst_182 = arith.constant 2.000000e+00 : f32
    %285 = vector.broadcast %cst_182 : f32 to vector<1x16xf32>
    %286 = arith.divf %284, %285 : vector<1x16xf32>
    %287 = vector.broadcast %279 : vector<1x16xf32> to vector<2x16xf32>
    %288 = arith.subf %275, %287 : vector<2x16xf32>
    %cst_183 = arith.constant 9.99999974E-6 : f32
    %289 = vector.broadcast %cst_183 : f32 to vector<1x16xf32>
    %290 = arith.addf %286, %289 : vector<1x16xf32>
    %291 = math.rsqrt %290 : vector<1x16xf32>
    %292 = vector.broadcast %291 : vector<1x16xf32> to vector<2x16xf32>
    %293 = arith.mulf %288, %292 : vector<2x16xf32>
    %294 = vector.broadcast %261 : vector<1x16xf32> to vector<2x16xf32>
    %295 = arith.mulf %293, %294 : vector<2x16xf32>
    %296 = vector.broadcast %262 : vector<1x16xf32> to vector<2x16xf32>
    %297 = arith.addf %295, %296 : vector<2x16xf32>
    %cst_184 = arith.constant 0.000000e+00 : f32
    %298 = vector.broadcast %cst_184 : f32 to vector<2x16xf32>
    %299 = arith.maximumf %297, %298 : vector<2x16xf32>
    %cst_185 = arith.constant dense<0.000000e+00> : vector<2x16xf32>
    %300 = tpu.matmul %299, %263, %cst_185 {dimension_numbers = #tpu.dot_dimension_numbers<[1], [0], [0], [1], [0, 0, 1, 1], [], []>} : vector<2x16xf32>, vector<16x16xf32>, vector<2x16xf32> -> vector<2x16xf32>
    %301 = vector.broadcast %264 : vector<1x16xf32> to vector<2x16xf32>
    %302 = arith.addf %300, %301 : vector<2x16xf32>
    %cst_186 = arith.constant 0.000000e+00 : f32
    %303 = vector.broadcast %cst_186 : f32 to vector<2x16xf32>
    %304 = arith.subf %303, %302 : vector<2x16xf32>
    %305 = math.exp %304 : vector<2x16xf32>
    %cst_187 = arith.constant 1.000000e+00 : f32
    %306 = vector.broadcast %cst_187 : f32 to vector<2x16xf32>
    %307 = arith.addf %306, %305 : vector<2x16xf32>
    %308 = tpu.reciprocal %307 {approx = true} : vector<2x16xf32> -> vector<2x16xf32>
    %309 = vector.broadcast %272 : vector<2x1xf32> to vector<2x16xf32>
    %310 = arith.mulf %309, %308 : vector<2x16xf32>
    %311 = vector.shape_cast %310 : vector<2x16xf32> to vector<2x16x1xf32>
    %312 = vector.broadcast %311 : vector<2x16x1xf32> to vector<2x16x16xf32>
    %313 = arith.subf %265, %312 : vector<2x16x16xf32>
    %cst_188 = arith.constant 0.000000e+00 : f32
    %314 = vector.broadcast %cst_188 : f32 to vector<2x16x16xf32>
    %315 = arith.maximumf %313, %314 : vector<2x16x16xf32>
    %cst_189 = arith.constant 0.000000e+00 : f32
    %316 = vector.broadcast %cst_189 : f32 to vector<2x16x16xf32>
    %317 = arith.cmpf ogt, %258, %316 : vector<2x16x16xf32>
    %cst_190 = arith.constant 0.000000e+00 : f32
    %318 = vector.broadcast %cst_190 : f32 to vector<2x16x16xf32>
    %319 = arith.cmpf olt, %258, %318 : vector<2x16x16xf32>
    %cst_191 = arith.constant -1.000000e+00 : f32
    %cst_192 = arith.constant 0.000000e+00 : f32
    %320 = vector.broadcast %cst_191 : f32 to vector<2x16x16xf32>
    %321 = vector.broadcast %cst_192 : f32 to vector<2x16x16xf32>
    %322 = arith.select %319, %320, %321 : vector<2x16x16xi1>, vector<2x16x16xf32>
    %cst_193 = arith.constant 1.000000e+00 : f32
    %323 = vector.broadcast %cst_193 : f32 to vector<2x16x16xf32>
    %324 = arith.select %317, %323, %322 : vector<2x16x16xi1>, vector<2x16x16xf32>
    %325 = arith.mulf %324, %315 : vector<2x16x16xf32>
    %cst_194 = arith.constant dense<0.000000e+00> : vector<2x8xf32>
    %326 = vector.multi_reduction <add>, %0, %cst_194 [2] : vector<2x8x16xf32> to vector<2x8xf32>
    %cst_195 = arith.constant 1.600000e+01 : f32
    %327 = vector.broadcast %cst_195 : f32 to vector<2x8xf32>
    %328 = arith.divf %326, %327 : vector<2x8xf32>
    %c0_196 = arith.constant 0 : index
    %c0_197 = arith.constant 0 : index
    %329 = vector.load %arg10[%c0_196, %c0_197] : memref<8x3xf32, #tpu.memory_space<vmem>>, vector<8x3xf32>
    %cst_198 = arith.constant dense<0.000000e+00> : vector<2x3xf32>
    %330 = tpu.matmul %328, %329, %cst_198 {dimension_numbers = #tpu.dot_dimension_numbers<[1], [0], [0], [1], [0, 0, 1, 1], [], []>} : vector<2x8xf32>, vector<8x3xf32>, vector<2x3xf32> -> vector<2x3xf32>
    %cst_199 = arith.constant 0.000000e+00 : f32
    %331 = vector.broadcast %cst_199 : f32 to vector<2x3xf32>
    %332 = arith.maximumf %330, %331 : vector<2x3xf32>
    %c0_200 = arith.constant 0 : index
    %c0_201 = arith.constant 0 : index
    %333 = vector.load %arg11[%c0_200, %c0_201] : memref<3x4xf32, #tpu.memory_space<vmem>>, vector<3x4xf32>
    %cst_202 = arith.constant dense<0.000000e+00> : vector<2x4xf32>
    %334 = tpu.matmul %332, %333, %cst_202 {dimension_numbers = #tpu.dot_dimension_numbers<[1], [0], [0], [1], [0, 0, 1, 1], [], []>} : vector<2x3xf32>, vector<3x4xf32>, vector<2x4xf32> -> vector<2x4xf32>
    %c0_203 = arith.constant 0 : index
    %c0_204 = arith.constant 0 : index
    %335 = vector.load %arg12[%c0_203, %c0_204] : memref<1x4xf32, #tpu.memory_space<vmem>>, vector<1x4xf32>
    %336 = vector.broadcast %335 : vector<1x4xf32> to vector<2x4xf32>
    %337 = arith.addf %334, %336 : vector<2x4xf32>
    %cst_205 = arith.constant 0.0294117648 : f32
    %338 = vector.broadcast %cst_205 : f32 to vector<2x4xf32>
    %339 = arith.mulf %337, %338 : vector<2x4xf32>
    %cst_206 = arith.constant dense<0xFF800000> : vector<2xf32>
    %340 = vector.multi_reduction <maximumf>, %339, %cst_206 [1] : vector<2x4xf32> to vector<2xf32>
    %341 = vector.shape_cast %340 : vector<2xf32> to vector<2x1xf32>
    %342 = vector.broadcast %341 : vector<2x1xf32> to vector<2x4xf32>
    %343 = arith.subf %339, %342 : vector<2x4xf32>
    %344 = math.exp %343 : vector<2x4xf32>
    %cst_207 = arith.constant dense<0.000000e+00> : vector<2xf32>
    %345 = vector.multi_reduction <add>, %344, %cst_207 [1] : vector<2x4xf32> to vector<2xf32>
    %346 = vector.shape_cast %345 : vector<2xf32> to vector<2x1xf32>
    %347 = tpu.reciprocal %346 {approx = true} : vector<2x1xf32> -> vector<2x1xf32>
    %348 = vector.broadcast %347 : vector<2x1xf32> to vector<2x4xf32>
    %349 = arith.mulf %344, %348 : vector<2x4xf32>
    %350 = vector.extract_strided_slice %349 {offsets = [0, 0], sizes = [1, 1], strides = [1, 1]} : vector<2x4xf32> to vector<1x1xf32>
    %351 = vector.extract %350[0, 0] : f32 from vector<1x1xf32>
    %c0_208 = arith.constant 0 : index
    %c0_209 = arith.constant 0 : index
    %c0_210 = arith.constant 0 : index
    %352 = vector.load %arg9[%c0_208, %c0_209, %c0_210] : memref<4x16x8xf32, #tpu.memory_space<vmem>>, vector<1x16x8xf32>
    %353 = vector.shape_cast %352 : vector<1x16x8xf32> to vector<16x8xf32>
    %354 = vector.broadcast %351 : f32 to vector<16x8xf32>
    %355 = arith.mulf %354, %353 : vector<16x8xf32>
    %356 = vector.extract_strided_slice %349 {offsets = [0, 1], sizes = [1, 1], strides = [1, 1]} : vector<2x4xf32> to vector<1x1xf32>
    %357 = vector.extract %356[0, 0] : f32 from vector<1x1xf32>
    %c1_211 = arith.constant 1 : index
    %c0_212 = arith.constant 0 : index
    %c0_213 = arith.constant 0 : index
    %358 = vector.load %arg9[%c1_211, %c0_212, %c0_213] : memref<4x16x8xf32, #tpu.memory_space<vmem>>, vector<1x16x8xf32>
    %359 = vector.shape_cast %358 : vector<1x16x8xf32> to vector<16x8xf32>
    %360 = vector.broadcast %357 : f32 to vector<16x8xf32>
    %361 = arith.mulf %360, %359 : vector<16x8xf32>
    %362 = arith.addf %355, %361 : vector<16x8xf32>
    %363 = vector.extract_strided_slice %349 {offsets = [0, 2], sizes = [1, 1], strides = [1, 1]} : vector<2x4xf32> to vector<1x1xf32>
    %364 = vector.extract %363[0, 0] : f32 from vector<1x1xf32>
    %c2_214 = arith.constant 2 : index
    %c0_215 = arith.constant 0 : index
    %c0_216 = arith.constant 0 : index
    %365 = vector.load %arg9[%c2_214, %c0_215, %c0_216] : memref<4x16x8xf32, #tpu.memory_space<vmem>>, vector<1x16x8xf32>
    %366 = vector.shape_cast %365 : vector<1x16x8xf32> to vector<16x8xf32>
    %367 = vector.broadcast %364 : f32 to vector<16x8xf32>
    %368 = arith.mulf %367, %366 : vector<16x8xf32>
    %369 = arith.addf %362, %368 : vector<16x8xf32>
    %370 = vector.extract_strided_slice %349 {offsets = [0, 3], sizes = [1, 1], strides = [1, 1]} : vector<2x4xf32> to vector<1x1xf32>
    %371 = vector.extract %370[0, 0] : f32 from vector<1x1xf32>
    %c3_217 = arith.constant 3 : index
    %c0_218 = arith.constant 0 : index
    %c0_219 = arith.constant 0 : index
    %372 = vector.load %arg9[%c3_217, %c0_218, %c0_219] : memref<4x16x8xf32, #tpu.memory_space<vmem>>, vector<1x16x8xf32>
    %373 = vector.shape_cast %372 : vector<1x16x8xf32> to vector<16x8xf32>
    %374 = vector.broadcast %371 : f32 to vector<16x8xf32>
    %375 = arith.mulf %374, %373 : vector<16x8xf32>
    %376 = arith.addf %369, %375 : vector<16x8xf32>
    %377 = vector.extract_strided_slice %0 {offsets = [0, 0, 0], sizes = [1, 8, 16], strides = [1, 1, 1]} : vector<2x8x16xf32> to vector<1x8x16xf32>
    %378 = vector.shape_cast %377 : vector<1x8x16xf32> to vector<8x16xf32>
    %cst_220 = arith.constant dense<0.000000e+00> : vector<16x16xf32>
    %379 = tpu.matmul %376, %378, %cst_220 {dimension_numbers = #tpu.dot_dimension_numbers<[1], [0], [0], [1], [0, 0, 1, 1], [], []>} : vector<16x8xf32>, vector<8x16xf32>, vector<16x16xf32> -> vector<16x16xf32>
    %c0_221 = arith.constant 0 : index
    %c0_222 = arith.constant 0 : index
    %c0_223 = arith.constant 0 : index
    %380 = vector.load %arg30[%c0_221, %c0_222, %c0_223] : memref<2x16x16xf32, #tpu.memory_space<vmem>>, vector<1x16x16xf32>
    %381 = vector.shape_cast %380 : vector<1x16x16xf32> to vector<16x16xf32>
    %382 = vector.shape_cast %379 : vector<16x16xf32> to vector<1x16x16xf32>
    tpu.vector_store %arg30[%c0_221, %c0_222, %c0_223], %382 {strides = array<i32>} : memref<2x16x16xf32, #tpu.memory_space<vmem>>, vector<1x16x16xf32>,
    %383 = vector.extract_strided_slice %349 {offsets = [1, 0], sizes = [1, 1], strides = [1, 1]} : vector<2x4xf32> to vector<1x1xf32>
    %384 = vector.extract %383[0, 0] : f32 from vector<1x1xf32>
    %c0_224 = arith.constant 0 : index
    %c0_225 = arith.constant 0 : index
    %c0_226 = arith.constant 0 : index
    %385 = vector.load %arg9[%c0_224, %c0_225, %c0_226] : memref<4x16x8xf32, #tpu.memory_space<vmem>>, vector<1x16x8xf32>
    %386 = vector.shape_cast %385 : vector<1x16x8xf32> to vector<16x8xf32>
    %387 = vector.broadcast %384 : f32 to vector<16x8xf32>
    %388 = arith.mulf %387, %386 : vector<16x8xf32>
    %389 = vector.extract_strided_slice %349 {offsets = [1, 1], sizes = [1, 1], strides = [1, 1]} : vector<2x4xf32> to vector<1x1xf32>
    %390 = vector.extract %389[0, 0] : f32 from vector<1x1xf32>
    %c1_227 = arith.constant 1 : index
    %c0_228 = arith.constant 0 : index
    %c0_229 = arith.constant 0 : index
    %391 = vector.load %arg9[%c1_227, %c0_228, %c0_229] : memref<4x16x8xf32, #tpu.memory_space<vmem>>, vector<1x16x8xf32>
    %392 = vector.shape_cast %391 : vector<1x16x8xf32> to vector<16x8xf32>
    %393 = vector.broadcast %390 : f32 to vector<16x8xf32>
    %394 = arith.mulf %393, %392 : vector<16x8xf32>
    %395 = arith.addf %388, %394 : vector<16x8xf32>
    %396 = vector.extract_strided_slice %349 {offsets = [1, 2], sizes = [1, 1], strides = [1, 1]} : vector<2x4xf32> to vector<1x1xf32>
    %397 = vector.extract %396[0, 0] : f32 from vector<1x1xf32>
    %c2_230 = arith.constant 2 : index
    %c0_231 = arith.constant 0 : index
    %c0_232 = arith.constant 0 : index
    %398 = vector.load %arg9[%c2_230, %c0_231, %c0_232] : memref<4x16x8xf32, #tpu.memory_space<vmem>>, vector<1x16x8xf32>
    %399 = vector.shape_cast %398 : vector<1x16x8xf32> to vector<16x8xf32>
    %400 = vector.broadcast %397 : f32 to vector<16x8xf32>
    %401 = arith.mulf %400, %399 : vector<16x8xf32>
    %402 = arith.addf %395, %401 : vector<16x8xf32>
    %403 = vector.extract_strided_slice %349 {offsets = [1, 3], sizes = [1, 1], strides = [1, 1]} : vector<2x4xf32> to vector<1x1xf32>
    %404 = vector.extract %403[0, 0] : f32 from vector<1x1xf32>
    %c3_233 = arith.constant 3 : index
    %c0_234 = arith.constant 0 : index
    %c0_235 = arith.constant 0 : index
    %405 = vector.load %arg9[%c3_233, %c0_234, %c0_235] : memref<4x16x8xf32, #tpu.memory_space<vmem>>, vector<1x16x8xf32>
    %406 = vector.shape_cast %405 : vector<1x16x8xf32> to vector<16x8xf32>
    %407 = vector.broadcast %404 : f32 to vector<16x8xf32>
    %408 = arith.mulf %407, %406 : vector<16x8xf32>
    %409 = arith.addf %402, %408 : vector<16x8xf32>
    %410 = vector.extract_strided_slice %0 {offsets = [1, 0, 0], sizes = [1, 8, 16], strides = [1, 1, 1]} : vector<2x8x16xf32> to vector<1x8x16xf32>
    %411 = vector.shape_cast %410 : vector<1x8x16xf32> to vector<8x16xf32>
    %cst_236 = arith.constant dense<0.000000e+00> : vector<16x16xf32>
    %412 = tpu.matmul %409, %411, %cst_236 {dimension_numbers = #tpu.dot_dimension_numbers<[1], [0], [0], [1], [0, 0, 1, 1], [], []>} : vector<16x8xf32>, vector<8x16xf32>, vector<16x16xf32> -> vector<16x16xf32>
    %c1_237 = arith.constant 1 : index
    %c0_238 = arith.constant 0 : index
    %c0_239 = arith.constant 0 : index
    %413 = vector.load %arg30[%c1_237, %c0_238, %c0_239] : memref<2x16x16xf32, #tpu.memory_space<vmem>>, vector<1x16x16xf32>
    %414 = vector.shape_cast %413 : vector<1x16x16xf32> to vector<16x16xf32>
    %415 = vector.shape_cast %412 : vector<16x16xf32> to vector<1x16x16xf32>
    tpu.vector_store %arg30[%c1_237, %c0_238, %c0_239], %415 {strides = array<i32>} : memref<2x16x16xf32, #tpu.memory_space<vmem>>, vector<1x16x16xf32>,
    %c0_240 = arith.constant 0 : index
    %c0_241 = arith.constant 0 : index
    %c0_242 = arith.constant 0 : index
    %416 = vector.load %arg30[%c0_240, %c0_241, %c0_242] : memref<2x16x16xf32, #tpu.memory_space<vmem>>, vector<2x16x16xf32>
    %c0_243 = arith.constant 0 : index
    %c0_244 = arith.constant 0 : index
    %c0_245 = arith.constant 0 : index
    %417 = vector.load %arg17[%c0_243, %c0_244, %c0_245] : memref<1x16x1xf32, #tpu.memory_space<vmem>>, vector<1x16x1xf32>
    %c0_246 = arith.constant 0 : index
    %c0_247 = arith.constant 0 : index
    %c0_248 = arith.constant 0 : index
    %418 = vector.load %arg18[%c0_246, %c0_247, %c0_248] : memref<1x16x1xf32, #tpu.memory_space<vmem>>, vector<1x16x1xf32>
    %cst_249 = arith.constant dense<0.000000e+00> : vector<2x16xf32>
    %419 = vector.multi_reduction <add>, %416, %cst_249 [2] : vector<2x16x16xf32> to vector<2x16xf32>
    %420 = vector.shape_cast %419 : vector<2x16xf32> to vector<2x16x1xf32>
    %cst_250 = arith.constant 1.600000e+01 : f32
    %421 = vector.broadcast %cst_250 : f32 to vector<2x16x1xf32>
    %422 = arith.divf %420, %421 : vector<2x16x1xf32>
    %cst_251 = arith.constant dense<0.000000e+00> : vector<16x1xf32>
    %423 = vector.multi_reduction <add>, %422, %cst_251 [0] : vector<2x16x1xf32> to vector<16x1xf32>
    %424 = vector.shape_cast %423 : vector<16x1xf32> to vector<1x16x1xf32>
    %cst_252 = arith.constant 2.000000e+00 : f32
    %425 = vector.broadcast %cst_252 : f32 to vector<1x16x1xf32>
    %426 = arith.divf %424, %425 : vector<1x16x1xf32>
    %427 = vector.broadcast %426 : vector<1x16x1xf32> to vector<2x16x16xf32>
    %428 = arith.subf %416, %427 : vector<2x16x16xf32>
    %429 = arith.mulf %428, %428 : vector<2x16x16xf32>
    %cst_253 = arith.constant dense<0.000000e+00> : vector<2x16xf32>
    %430 = vector.multi_reduction <add>, %429, %cst_253 [2] : vector<2x16x16xf32> to vector<2x16xf32>
    %431 = vector.shape_cast %430 : vector<2x16xf32> to vector<2x16x1xf32>
    %cst_254 = arith.constant 1.600000e+01 : f32
    %432 = vector.broadcast %cst_254 : f32 to vector<2x16x1xf32>
    %433 = arith.divf %431, %432 : vector<2x16x1xf32>
    %cst_255 = arith.constant dense<0.000000e+00> : vector<16x1xf32>
    %434 = vector.multi_reduction <add>, %433, %cst_255 [0] : vector<2x16x1xf32> to vector<16x1xf32>
    %435 = vector.shape_cast %434 : vector<16x1xf32> to vector<1x16x1xf32>
    %cst_256 = arith.constant 2.000000e+00 : f32
    %436 = vector.broadcast %cst_256 : f32 to vector<1x16x1xf32>
    %437 = arith.divf %435, %436 : vector<1x16x1xf32>
    %cst_257 = arith.constant 9.99999974E-6 : f32
    %438 = vector.broadcast %cst_257 : f32 to vector<1x16x1xf32>
    %439 = arith.addf %437, %438 : vector<1x16x1xf32>
    %440 = math.rsqrt %439 : vector<1x16x1xf32>
    %441 = vector.broadcast %440 : vector<1x16x1xf32> to vector<2x16x16xf32>
    %442 = arith.mulf %428, %441 : vector<2x16x16xf32>
    %443 = vector.broadcast %417 : vector<1x16x1xf32> to vector<2x16x16xf32>
    %444 = arith.mulf %442, %443 : vector<2x16x16xf32>
    %445 = vector.broadcast %418 : vector<1x16x1xf32> to vector<2x16x16xf32>
    %446 = arith.addf %444, %445 : vector<2x16x16xf32>
    %447 = arith.addf %325, %446 : vector<2x16x16xf32>
    %cst_258 = arith.constant 0.000000e+00 : f32
    %448 = vector.broadcast %cst_258 : f32 to vector<2x16x16xf32>
    %449 = arith.maximumf %447, %448 : vector<2x16x16xf32>
    %c0_259 = arith.constant 0 : index
    %c0_260 = arith.constant 0 : index
    %c0_261 = arith.constant 0 : index
    %450 = vector.load %arg25[%c0_259, %c0_260, %c0_261] : memref<2x16x16xf32, #tpu.memory_space<vmem>>, vector<2x16x16xf32>
    tpu.vector_store %arg25[%c0_259, %c0_260, %c0_261], %449 {strides = array<i32>} : memref<2x16x16xf32, #tpu.memory_space<vmem>>, vector<2x16x16xf32>,
    return
  }
}

</mosaic_0001>

<llo_original>
// kernel: tpu_custom_call.1
$region0: #{tpu_custom_call.1}
  #allocation0 [shape = 'u32[]', space=smem, size = 0x4, offset = 0x4, fixed_abs, tag = 'smem constant byte address 0x4 - core index']
  #allocation1 [shape = 'u32[144,128]{1,0:T(1,128)}', space=vmem, size = 0x12000, scoped, tag = 'internal scratch']
  #allocation2 [shape = 'f32[2,24,16]{2,1,0:T(8,128)}', space=vmem, size = 0x6000, scoped, tag = 'scratch operand']
  #allocation3 [shape = 'f32[2,16,16]{2,1,0:T(8,128)}', space=vmem, size = 0x4000, scoped, tag = 'scratch operand']
  #allocation4 [shape = 'f32[2,48,16]{2,1,0:T(8,128)}', space=vmem, size = 0xc000, scoped, tag = 'scratch operand']
  #allocation5 [shape = 'f32[2,16,16]{2,1,0:T(8,128)}', space=vmem, size = 0x4000, scoped, tag = 'scratch operand']
  #allocation6 [shape = 'f32[2,16,16]{2,1,0:T(8,128)}', space=vmem, size = 0x4000, scoped, tag = 'scratch operand']
  %s0 = inlined_call_operand.vmem [shape: f32[2,8,16], index: 0, kind: input, shape index: {}]
  %s1 = inlined_call_operand.vmem [shape: f32[4,16,24], index: 1, kind: input, shape index: {}]
  %s2 = inlined_call_operand.vmem [shape: f32[8,3], index: 2, kind: input, shape index: {}]
  %s3 = inlined_call_operand.vmem [shape: f32[3,4], index: 3, kind: input, shape index: {}]
  %s4 = inlined_call_operand.vmem [shape: f32[1,4], index: 4, kind: input, shape index: {}]
  %s5 = inlined_call_operand.vmem [shape: f32[4,16,48], index: 5, kind: input, shape index: {}]
  %s6 = inlined_call_operand.vmem [shape: f32[16,5], index: 6, kind: input, shape index: {}]
  %s7 = inlined_call_operand.vmem [shape: f32[5,4], index: 7, kind: input, shape index: {}]
  %s8 = inlined_call_operand.vmem [shape: f32[1,4], index: 8, kind: input, shape index: {}]
  %s9 = inlined_call_operand.vmem [shape: f32[4,16,8], index: 9, kind: input, shape index: {}]
  %s10 = inlined_call_operand.vmem [shape: f32[8,3], index: 10, kind: input, shape index: {}]
  %s11 = inlined_call_operand.vmem [shape: f32[3,4], index: 11, kind: input, shape index: {}]
  %s12 = inlined_call_operand.vmem [shape: f32[1,4], index: 12, kind: input, shape index: {}]
  %s13 = inlined_call_operand.vmem [shape: f32[1,16,1], index: 13, kind: input, shape index: {}]
  %s14 = inlined_call_operand.vmem [shape: f32[1,16,1], index: 14, kind: input, shape index: {}]
  %s15 = inlined_call_operand.vmem [shape: f32[1,16,1], index: 15, kind: input, shape index: {}]
  %s16 = inlined_call_operand.vmem [shape: f32[1,16,1], index: 16, kind: input, shape index: {}]
  %s17 = inlined_call_operand.vmem [shape: f32[1,16,1], index: 17, kind: input, shape index: {}]
  %s18 = inlined_call_operand.vmem [shape: f32[1,16,1], index: 18, kind: input, shape index: {}]
  %s19 = inlined_call_operand.vmem [shape: f32[16,16], index: 19, kind: input, shape index: {}]
  %s20 = inlined_call_operand.vmem [shape: f32[1,16], index: 20, kind: input, shape index: {}]
  %s21 = inlined_call_operand.vmem [shape: f32[1,16], index: 21, kind: input, shape index: {}]
  %s22 = inlined_call_operand.vmem [shape: f32[1,16], index: 22, kind: input, shape index: {}]
  %s23 = inlined_call_operand.vmem [shape: f32[16,16], index: 23, kind: input, shape index: {}]
  %s24 = inlined_call_operand.vmem [shape: f32[1,16], index: 24, kind: input, shape index: {}]
  %s25 = inlined_call_operand.hbm [shape: f32[2,16,16], index: 25, kind: output, shape index: {}]
  %s26 = sld [smem:[#allocation0]]
  $region110: #{tpu_custom_call.1} parent=0
    _
  %s28 = ssub.s32 1, %s26
  %s29 = scalar_select 0, %s28, %s26
  $region1: #{tpu_custom_call.1} parent=0
    #allocation7 [shape = 'u8[16384]{0}', space=vmem, size = 0x4000, scoped, tag = 'output window, operand 0, single buffered']
    #allocation8 [shape = 's32[1]{0}', space=sflag, size = 0x4, scoped, tag = 'scoped memory for tpu_custom_call.1']
    %30 = vsyncpa [#allocation8], 0
    // Predicated region
    $region2: #{tpu_custom_call.1} parent=1 // pred_check
      _
    $region3: #{tpu_custom_call.1} parent=1 // pred_check_branch
      %32 = sbr.rel (0) target = $region5
    $region4: #{tpu_custom_call.1} parent=1 // pred_region
      _
    $region5: #{tpu_custom_call.1} parent=1 // pred_fallthru
      _
    // Predicated region
    $region6: #{tpu_custom_call.1} parent=1 // pred_check
      _
    $region7: #{tpu_custom_call.1} parent=1 // pred_check_branch
      %34 = sbr.rel (0) target = $region9
    $region8: #{tpu_custom_call.1} parent=1 // pred_region
      _
    $region9: #{tpu_custom_call.1} parent=1 // pred_fallthru
      _
    // Predicated region
    $region10: #{tpu_custom_call.1} parent=1 // pred_check
      _
    $region11: #{tpu_custom_call.1} parent=1 // pred_check_branch
      %36 = sbr.rel (0) target = $region13
    $region12: #{tpu_custom_call.1} parent=1 // pred_region
      _
    $region13: #{tpu_custom_call.1} parent=1 // pred_fallthru
      _
    // Predicated region
    $region14: #{tpu_custom_call.1} parent=1 // pred_check
      _
    $region15: #{tpu_custom_call.1} parent=1 // pred_check_branch
      %38 = sbr.rel (0) target = $region17
    $region16: #{tpu_custom_call.1} parent=1 // pred_region
      _
    $region17: #{tpu_custom_call.1} parent=1 // pred_fallthru
      _
    // Predicated region
    $region18: #{tpu_custom_call.1} parent=1 // pred_check
      _
    $region19: #{tpu_custom_call.1} parent=1 // pred_check_branch
      %40 = sbr.rel (0) target = $region21
    $region20: #{tpu_custom_call.1} parent=1 // pred_region
      _
    $region21: #{tpu_custom_call.1} parent=1 // pred_fallthru
      _
    // Predicated region
    $region22: #{tpu_custom_call.1} parent=1 // pred_check
      _
    $region23: #{tpu_custom_call.1} parent=1 // pred_check_branch
      %42 = sbr.rel (0) target = $region25
    $region24: #{tpu_custom_call.1} parent=1 // pred_region
      _
    $region25: #{tpu_custom_call.1} parent=1 // pred_fallthru
      _
    // Predicated region
    $region26: #{tpu_custom_call.1} parent=1 // pred_check
      _
    $region27: #{tpu_custom_call.1} parent=1 // pred_check_branch
      %44 = sbr.rel (0) target = $region29
    $region28: #{tpu_custom_call.1} parent=1 // pred_region
      _
    $region29: #{tpu_custom_call.1} parent=1 // pred_fallthru
      _
    // Predicated region
    $region30: #{tpu_custom_call.1} parent=1 // pred_check
      _
    $region31: #{tpu_custom_call.1} parent=1 // pred_check_branch
      %46 = sbr.rel (0) target = $region33
    $region32: #{tpu_custom_call.1} parent=1 // pred_region
      _
    $region33: #{tpu_custom_call.1} parent=1 // pred_fallthru
      _
    // Predicated region
    $region34: #{tpu_custom_call.1} parent=1 // pred_check
      _
    $region35: #{tpu_custom_call.1} parent=1 // pred_check_branch
      %48 = sbr.rel (0) target = $region37
    $region36: #{tpu_custom_call.1} parent=1 // pred_region
      _
    $region37: #{tpu_custom_call.1} parent=1 // pred_fallthru
      _
    // Predicated region
    $region38: #{tpu_custom_call.1} parent=1 // pred_check
      _
    $region39: #{tpu_custom_call.1} parent=1 // pred_check_branch
      %50 = sbr.rel (0) target = $region41
    $region40: #{tpu_custom_call.1} parent=1 // pred_region
      _
    $region41: #{tpu_custom_call.1} parent=1 // pred_fallthru
      _
    // Predicated region
    $region42: #{tpu_custom_call.1} parent=1 // pred_check
      _
    $region43: #{tpu_custom_call.1} parent=1 // pred_check_branch
      %52 = sbr.rel (0) target = $region45
    $region44: #{tpu_custom_call.1} parent=1 // pred_region
      _
    $region45: #{tpu_custom_call.1} parent=1 // pred_fallthru
      _
    // Predicated region
    $region46: #{tpu_custom_call.1} parent=1 // pred_check
      _
    $region47: #{tpu_custom_call.1} parent=1 // pred_check_branch
      %54 = sbr.rel (0) target = $region49
    $region48: #{tpu_custom_call.1} parent=1 // pred_region
      _
    $region49: #{tpu_custom_call.1} parent=1 // pred_fallthru
      _
    // Predicated region
    $region50: #{tpu_custom_call.1} parent=1 // pred_check
      _
    $region51: #{tpu_custom_call.1} parent=1 // pred_check_branch
      %56 = sbr.rel (0) target = $region53
    $region52: #{tpu_custom_call.1} parent=1 // pred_region
      _
    $region53: #{tpu_custom_call.1} parent=1 // pred_fallthru
      _
    // Predicated region
    $region54: #{tpu_custom_call.1} parent=1 // pred_check
      _
    $region55: #{tpu_custom_call.1} parent=1 // pred_check_branch
      %58 = sbr.rel (0) target = $region57
    $region56: #{tpu_custom_call.1} parent=1 // pred_region
      _
    $region57: #{tpu_custom_call.1} parent=1 // pred_fallthru
      _
    // Predicated region
    $region58: #{tpu_custom_call.1} parent=1 // pred_check
      _
    $region59: #{tpu_custom_call.1} parent=1 // pred_check_branch
      %60 = sbr.rel (0) target = $region61
    $region60: #{tpu_custom_call.1} parent=1 // pred_region
      _
    $region61: #{tpu_custom_call.1} parent=1 // pred_fallthru
      _
    // Predicated region
    $region62: #{tpu_custom_call.1} parent=1 // pred_check
      _
    $region63: #{tpu_custom_call.1} parent=1 // pred_check_branch
      %62 = sbr.rel (0) target = $region65
    $region64: #{tpu_custom_call.1} parent=1 // pred_region
      _
    $region65: #{tpu_custom_call.1} parent=1 // pred_fallthru
      _
    // Predicated region
    $region66: #{tpu_custom_call.1} parent=1 // pred_check
      _
    $region67: #{tpu_custom_call.1} parent=1 // pred_check_branch
      %64 = sbr.rel (0) target = $region69
    $region68: #{tpu_custom_call.1} parent=1 // pred_region
      _
    $region69: #{tpu_custom_call.1} parent=1 // pred_fallthru
      _
    // Predicated region
    $region70: #{tpu_custom_call.1} parent=1 // pred_check
      _
    $region71: #{tpu_custom_call.1} parent=1 // pred_check_branch
      %66 = sbr.rel (0) target = $region73
    $region72: #{tpu_custom_call.1} parent=1 // pred_region
      _
    $region73: #{tpu_custom_call.1} parent=1 // pred_fallthru
      _
    // Predicated region
    $region74: #{tpu_custom_call.1} parent=1 // pred_check
      _
    $region75: #{tpu_custom_call.1} parent=1 // pred_check_branch
      %68 = sbr.rel (0) target = $region77
    $region76: #{tpu_custom_call.1} parent=1 // pred_region
      _
    $region77: #{tpu_custom_call.1} parent=1 // pred_fallthru
      _
    // Predicated region
    $region78: #{tpu_custom_call.1} parent=1 // pred_check
      _
    $region79: #{tpu_custom_call.1} parent=1 // pred_check_branch
      %70 = sbr.rel (0) target = $region81
    $region80: #{tpu_custom_call.1} parent=1 // pred_region
      _
    $region81: #{tpu_custom_call.1} parent=1 // pred_fallthru
      _
    // Predicated region
    $region82: #{tpu_custom_call.1} parent=1 // pred_check
      _
    $region83: #{tpu_custom_call.1} parent=1 // pred_check_branch
      %72 = sbr.rel (0) target = $region85
    $region84: #{tpu_custom_call.1} parent=1 // pred_region
      _
    $region85: #{tpu_custom_call.1} parent=1 // pred_fallthru
      _
    // Predicated region
    $region86: #{tpu_custom_call.1} parent=1 // pred_check
      _
    $region87: #{tpu_custom_call.1} parent=1 // pred_check_branch
      %74 = sbr.rel (0) target = $region89
    $region88: #{tpu_custom_call.1} parent=1 // pred_region
      _
    $region89: #{tpu_custom_call.1} parent=1 // pred_fallthru
      _
    // Predicated region
    $region90: #{tpu_custom_call.1} parent=1 // pred_check
      _
    $region91: #{tpu_custom_call.1} parent=1 // pred_check_branch
      %76 = sbr.rel (0) target = $region93
    $region92: #{tpu_custom_call.1} parent=1 // pred_region
      _
    $region93: #{tpu_custom_call.1} parent=1 // pred_fallthru
      _
    // Predicated region
    $region94: #{tpu_custom_call.1} parent=1 // pred_check
      _
    $region95: #{tpu_custom_call.1} parent=1 // pred_check_branch
      %78 = sbr.rel (0) target = $region97
    $region96: #{tpu_custom_call.1} parent=1 // pred_region
      _
    $region97: #{tpu_custom_call.1} parent=1 // pred_fallthru
      _
    // Predicated region
    $region98: #{tpu_custom_call.1} parent=1 // pred_check
      _
    $region99: #{tpu_custom_call.1} parent=1 // pred_check_branch
      %80 = sbr.rel (0) target = $region101
    $region100: #{tpu_custom_call.1} parent=1 // pred_region
      _
    $region101: #{tpu_custom_call.1} parent=1 // pred_fallthru
      _
    %v81 = vld [vmem:[%s0] sm:$0xff]
    %v82 = vld [vmem:[%s0 + $0x8] sm:$0xff]
    %vm83 = vcmask 130048
    %v84 = vsel %vm83, %v81, 0.0
    %85 = vadd.xlane.f32.xlu0 %v84
    %v86 = vpop.xlane.xlu0 %85
    %v87 = vsel %vm83, %v82, 0.0
    %88 = vadd.xlane.f32.xlu0 %v87
    %v89 = vpop.xlane.xlu0 %88
    %v90 = vrcp.pop 16.0
    %v91 = vmul.f32 %v86, %v90
    %v92 = vmul.f32 %v89, %v90
    %v93 = vld [vmem:[%s2] sm:$0xff]
    %v96 = vlaneseq
    %v97 = vand.u32 %v96, 127
    %v98 = vlaneseq
    %v99 = vshrl.u32 %v98, 7
    %v100 = vsub.s32 %v97, %v99
    %v101 = vrot.slane %v91, %v100
    %v102 = vlaneseq
    %v103 = vshrl.u32 %v102, 7
    %v104 = vsub.s32 %v97, %v103
    %v105 = vrot.slane %v92, %v104
    %vm106 = vcmask 1041409
    %v107 = vsel %vm106, %v105, %v101
    %vm108 = vcmask 64512
    %v109 = vsel %vm108, %v107, 0
    %111 = vmatprep.subr.mxu0 0.0
    %112 = vmatpush1.msra.mxu0 %v93
    %113 = vmatprep.subr.mxu0 0.0
    %114 = vmatpush1.msra.mxu0 0.0
    %115 = vmatprep.subr.mxu0 0.0
    %116 = vmatpush1.msra.mxu0 0.0
    %117 = vmatprep.subr.mxu0 0.0
    %118 = vmatpush1.msra.mxu0 0.0
    %119 = vmatprep.subr.mxu0 0.0
    %120 = vmatpush1.msra.mxu0 0.0
    %121 = vmatprep.subr.mxu0 0.0
    %122 = vmatpush1.msra.mxu0 0.0
    %123 = vmatprep.subr.mxu0 0.0
    %124 = vmatpush1.msra.mxu0 0.0
    %125 = vmatprep.subr.mxu0 0.0
    %126 = vmatpush1.msra.mxu0 0.0
    %127 = vmatprep.subr.mxu0 0.0
    %128 = vmatpush1.msra.mxu0 0.0
    %129 = vmatprep.subr.mxu0 0.0
    %130 = vmatpush1.msra.mxu0 0.0
    %131 = vmatprep.subr.mxu0 0.0
    %132 = vmatpush1.msra.mxu0 0.0
    %133 = vmatprep.subr.mxu0 0.0
    %134 = vmatpush1.msra.mxu0 0.0
    %135 = vmatprep.subr.mxu0 0.0
    %136 = vmatpush1.msra.mxu0 0.0
    %137 = vmatprep.subr.mxu0 0.0
    %138 = vmatpush1.msra.mxu0 0.0
    %139 = vmatprep.subr.mxu0 0.0
    %140 = vmatpush1.msra.mxu0 0.0
    %141 = vmatprep.subr.mxu0 0.0
    %142 = vmatpush1.msra.mxu0 0.0
    %143 = vmatprep.subr.mxu0 0.0
    %144 = vmatpush1.msra.mxu0 0.0
    %145 = vmatprep.subr.mxu0 0.0
    %146 = vmatpush1.msra.mxu0 0.0
    %147 = vmatprep.subr.mxu0 0.0
    %148 = vmatpush1.msra.mxu0 0.0
    %149 = vmatprep.subr.mxu0 0.0
    %150 = vmatpush1.msra.mxu0 0.0
    %151 = vmatprep.subr.mxu0 0.0
    %152 = vmatpush1.msra.mxu0 0.0
    %153 = vmatprep.subr.mxu0 0.0
    %154 = vmatpush1.msra.mxu0 0.0
    %155 = vmatprep.subr.mxu0 0.0
    %156 = vmatpush1.msra.mxu0 0.0
    %157 = vmatprep.subr.mxu0 0.0
    %158 = vmatpush1.msra.mxu0 0.0
    %159 = vmatprep.subr.mxu0 0.0
    %160 = vmatpush1.msra.mxu0 0.0
    %161 = vmatprep.subr.mxu0 0.0
    %162 = vmatpush1.msra.mxu0 0.0
    %163 = vmatprep.subr.mxu0 0.0
    %164 = vmatpush1.msra.mxu0 0.0
    %165 = vmatprep.subr.mxu0 0.0
    %166 = vmatpush1.msra.mxu0 0.0
    %167 = vmatprep.subr.mxu0 0.0
    %168 = vmatpush1.msra.mxu0 0.0
    %169 = vmatprep.subr.mxu0 0.0
    %170 = vmatpush1.msra.mxu0 0.0
    %171 = vmatprep.subr.mxu0 0.0
    %172 = vmatpush1.msra.mxu0 0.0
    %173 = vmatprep.subr.mxu0 0.0
    %174 = vmatpush1.msra.mxu0 0.0
    %175 = vmatprep.mubr.f32.mxu0 0.0
    %176 = vmatmul.mubr.f32.gmra.mrb[0].mxu0 %v109
    %v177 = vpop.f32.mrb[0].mxu0
    %v178 = vadd.f32 0.0, %v177
    %v179 = vpop.f32.mrb[0].mxu0
    %180 = vdwg.mxu0
    %v181 = vmax.f32 %v178, 0.0
    %v182 = vld [vmem:[%s3] sm:$0x7]
    %v183 = vld [vmem:[%s4] sm:$0x1]
    %v185 = vlaneseq
    %v186 = vshrl.u32 %v185, 7
    %v187 = vsub.s32 0, %v186
    %v188 = vrot.slane %v183, %v187
    %vm190 = vcmask 23552
    %v192 = vsel %vm190, %v181, 0
    %vm194 = vcmask 1042432
    %v196 = vsel %vm194, %v182, 0
    %198 = vmatprep.subr.mxu0 0.0
    %199 = vmatpush1.msra.mxu0 %v196
    %200 = vmatprep.subr.mxu0 0.0
    %201 = vmatpush1.msra.mxu0 0.0
    %202 = vmatprep.subr.mxu0 0.0
    %203 = vmatpush1.msra.mxu0 0.0
    %204 = vmatprep.subr.mxu0 0.0
    %205 = vmatpush1.msra.mxu0 0.0
    %206 = vmatprep.subr.mxu0 0.0
    %207 = vmatpush1.msra.mxu0 0.0
    %208 = vmatprep.subr.mxu0 0.0
    %209 = vmatpush1.msra.mxu0 0.0
    %210 = vmatprep.subr.mxu0 0.0
    %211 = vmatpush1.msra.mxu0 0.0
    %212 = vmatprep.subr.mxu0 0.0
    %213 = vmatpush1.msra.mxu0 0.0
    %214 = vmatprep.subr.mxu0 0.0
    %215 = vmatpush1.msra.mxu0 0.0
    %216 = vmatprep.subr.mxu0 0.0
    %217 = vmatpush1.msra.mxu0 0.0
    %218 = vmatprep.subr.mxu0 0.0
    %219 = vmatpush1.msra.mxu0 0.0
    %220 = vmatprep.subr.mxu0 0.0
    %221 = vmatpush1.msra.mxu0 0.0
    %222 = vmatprep.subr.mxu0 0.0
    %223 = vmatpush1.msra.mxu0 0.0
    %224 = vmatprep.subr.mxu0 0.0
    %225 = vmatpush1.msra.mxu0 0.0
    %226 = vmatprep.subr.mxu0 0.0
    %227 = vmatpush1.msra.mxu0 0.0
    %228 = vmatprep.subr.mxu0 0.0
    %229 = vmatpush1.msra.mxu0 0.0
    %230 = vmatprep.subr.mxu0 0.0
    %231 = vmatpush1.msra.mxu0 0.0
    %232 = vmatprep.subr.mxu0 0.0
    %233 = vmatpush1.msra.mxu0 0.0
    %234 = vmatprep.subr.mxu0 0.0
    %235 = vmatpush1.msra.mxu0 0.0
    %236 = vmatprep.subr.mxu0 0.0
    %237 = vmatpush1.msra.mxu0 0.0
    %238 = vmatprep.subr.mxu0 0.0
    %239 = vmatpush1.msra.mxu0 0.0
    %240 = vmatprep.subr.mxu0 0.0
    %241 = vmatpush1.msra.mxu0 0.0
    %242 = vmatprep.subr.mxu0 0.0
    %243 = vmatpush1.msra.mxu0 0.0
    %244 = vmatprep.subr.mxu0 0.0
    %245 = vmatpush1.msra.mxu0 0.0
    %246 = vmatprep.subr.mxu0 0.0
    %247 = vmatpush1.msra.mxu0 0.0
    %248 = vmatprep.subr.mxu0 0.0
    %249 = vmatpush1.msra.mxu0 0.0
    %250 = vmatprep.subr.mxu0 0.0
    %251 = vmatpush1.msra.mxu0 0.0
    %252 = vmatprep.subr.mxu0 0.0
    %253 = vmatpush1.msra.mxu0 0.0
    %254 = vmatprep.subr.mxu0 0.0
    %255 = vmatpush1.msra.mxu0 0.0
    %256 = vmatprep.subr.mxu0 0.0
    %257 = vmatpush1.msra.mxu0 0.0
    %258 = vmatprep.subr.mxu0 0.0
    %259 = vmatpush1.msra.mxu0 0.0
    %260 = vmatprep.subr.mxu0 0.0
    %261 = vmatpush1.msra.mxu0 0.0
    %262 = vmatprep.mubr.f32.mxu0 0.0
    %263 = vmatmul.mubr.f32.gmra.mrb[0].mxu0 %v192
    %v264 = vpop.f32.mrb[0].mxu0
    %v265 = vadd.f32 %v188, %v264
    %v266 = vpop.f32.mrb[0].mxu0
    %267 = vdwg.mxu0
    %v268 = vmul.f32 %v265, 0.029411765
    %vm269 = vcmask 25600
    %v270 = vsel %vm269, %v268, -inf
    %271 = vmax.xlane.f32.xlu0 %v270
    %v272 = vpop.xlane.xlu0 %271
    %v273 = vsub.f32 %v268, %v272
    %v274 = vmul.f32 %v273, 1.442695
    %v275 = vpow.pop %v274
    %v276 = vsel %vm269, %v275, 0.0
    %277 = vadd.xlane.f32.xlu0 %v276
    %v278 = vpop.xlane.xlu0 %277
    %v279 = vrcp.pop %v278
    %v280 = vmul.f32 %v275, %v279
    %281 = vst.msk [vmem:[#allocation2] sm:$0xff] %vm83, 0.0
    %282 = vst.msk [vmem:[#allocation2 + $0x8] sm:$0xff] %vm83, 0.0
    %283 = vst.msk [vmem:[#allocation2 + $0x10] sm:$0xff] %vm83, 0.0
    %284 = vst.msk [vmem:[#allocation2 + $0x18] sm:$0xff] %vm83, 0.0
    %285 = vst.msk [vmem:[#allocation2 + $0x20] sm:$0xff] %vm83, 0.0
    %286 = vst.msk [vmem:[#allocation2 + $0x28] sm:$0xff] %vm83, 0.0
    %289 = vrot.lane.b32.xlu0 %v81, 1
    %v290 = vpop.permute.xlu0 %289
    %291 = vrot.lane.b32.xlu0 %v82, 1
    %v292 = vpop.permute.xlu0 %291
    %vm295 = vcmask 130056
    %296 = vst.msk [vmem:[#allocation2] sm:$0xff] %vm295, %v290
    %297 = vst.msk [vmem:[#allocation2 + $0x18] sm:$0xff] %vm295, %v292
    %298 = vst.msk [vmem:[#allocation2 + $0x8] sm:$0xff] %vm83, %v81
    %299 = vst.msk [vmem:[#allocation2 + $0x20] sm:$0xff] %vm83, %v82
    %300 = vrot.lane.b32.xlu0 %v81, 127
    %v301 = vpop.permute.xlu0 %300
    %302 = vrot.lane.b32.xlu0 %v82, 127
    %v303 = vpop.permute.xlu0 %302
    %vm306 = vcmask 121856
    %307 = vst.msk [vmem:[#allocation2 + $0x10] sm:$0xff] %vm306, %v301
    %308 = vst.msk [vmem:[#allocation2 + $0x28] sm:$0xff] %vm306, %v303
    %s309 = vtos %v280
    %v310 = vld [vmem:[%s1] sm:$0xff]
    %v311 = vld [vmem:[%s1 + $0x8] sm:$0xff]
    %v312 = vstv %s309
    %v313 = vmul.f32 %v312, %v310
    %v314 = vmul.f32 %v312, %v311
    %315 = vrot.lane.b32.xlu0 %v280, 127
    %v316 = vpop.permute.xlu0 %315
    %s317 = vtos %v316
    %s318 = scalar_lea.vmem %s1, 16
    %v319 = vld [vmem:[%s318] sm:$0xff]
    %v320 = vld [vmem:[%s318 + $0x8] sm:$0xff]
    %v321 = vstv %s317
    %v322 = vmul.f32 %v321, %v319
    %v323 = vmul.f32 %v321, %v320
    %v324 = vadd.f32 %v313, %v322
    %v325 = vadd.f32 %v314, %v323
    %326 = vrot.lane.b32.xlu0 %v280, 126
    %v327 = vpop.permute.xlu0 %326
    %s328 = vtos %v327
    %s329 = scalar_lea.vmem %s1, 32
    %v330 = vld [vmem:[%s329] sm:$0xff]
    %v331 = vld [vmem:[%s329 + $0x8] sm:$0xff]
    %v332 = vstv %s328
    %v333 = vmul.f32 %v332, %v330
    %v334 = vmul.f32 %v332, %v331
    %v335 = vadd.f32 %v324, %v333
    %v336 = vadd.f32 %v325, %v334
    %337 = vrot.lane.b32.xlu0 %v280, 125
    %v338 = vpop.permute.xlu0 %337
    %s339 = vtos %v338
    %s340 = scalar_lea.vmem %s1, 48
    %v341 = vld [vmem:[%s340] sm:$0xff]
    %v342 = vld [vmem:[%s340 + $0x8] sm:$0xff]
    %v343 = vstv %s339
    %v344 = vmul.f32 %v343, %v341
    %v345 = vmul.f32 %v343, %v342
    %v346 = vadd.f32 %v335, %v344
    %v347 = vadd.f32 %v336, %v345
    %v348 = vld [vmem:[#allocation2] sm:$0xff]
    %v349 = vld [vmem:[#allocation2 + $0x8] sm:$0xff]
    %v350 = vld [vmem:[#allocation2 + $0x10] sm:$0xff]
    %vm351 = vcmask 195584
    %v353 = vsel %vm351, %v346, 0
    %v356 = vsel %vm351, %v347, 0
    %358 = vmatprep.subr.mxu0 0.0
    %359 = vmatpush1.msra.mxu0 %v348
    %360 = vmatprep.subr.mxu0 0.0
    %361 = vmatpush1.msra.mxu0 %v349
    %362 = vmatprep.subr.mxu0 0.0
    %363 = vmatpush1.msra.mxu0 %v350
    %364 = vmatprep.subr.mxu0 0.0
    %365 = vmatpush1.msra.mxu0 0.0
    %366 = vmatprep.subr.mxu0 0.0
    %367 = vmatpush1.msra.mxu0 0.0
    %368 = vmatprep.subr.mxu0 0.0
    %369 = vmatpush1.msra.mxu0 0.0
    %370 = vmatprep.subr.mxu0 0.0
    %371 = vmatpush1.msra.mxu0 0.0
    %372 = vmatprep.subr.mxu0 0.0
    %373 = vmatpush1.msra.mxu0 0.0
    %374 = vmatprep.subr.mxu0 0.0
    %375 = vmatpush1.msra.mxu0 0.0
    %376 = vmatprep.subr.mxu0 0.0
    %377 = vmatpush1.msra.mxu0 0.0
    %378 = vmatprep.subr.mxu0 0.0
    %379 = vmatpush1.msra.mxu0 0.0
    %380 = vmatprep.subr.mxu0 0.0
    %381 = vmatpush1.msra.mxu0 0.0
    %382 = vmatprep.subr.mxu0 0.0
    %383 = vmatpush1.msra.mxu0 0.0
    %384 = vmatprep.subr.mxu0 0.0
    %385 = vmatpush1.msra.mxu0 0.0
    %386 = vmatprep.subr.mxu0 0.0
    %387 = vmatpush1.msra.mxu0 0.0
    %388 = vmatprep.subr.mxu0 0.0
    %389 = vmatpush1.msra.mxu0 0.0
    %390 = vmatprep.subr.mxu0 0.0
    %391 = vmatpush1.msra.mxu0 0.0
    %392 = vmatprep.subr.mxu0 0.0
    %393 = vmatpush1.msra.mxu0 0.0
    %394 = vmatprep.subr.mxu0 0.0
    %395 = vmatpush1.msra.mxu0 0.0
    %396 = vmatprep.subr.mxu0 0.0
    %397 = vmatpush1.msra.mxu0 0.0
    %398 = vmatprep.subr.mxu0 0.0
    %399 = vmatpush1.msra.mxu0 0.0
    %400 = vmatprep.subr.mxu0 0.0
    %401 = vmatpush1.msra.mxu0 0.0
    %402 = vmatprep.subr.mxu0 0.0
    %403 = vmatpush1.msra.mxu0 0.0
    %404 = vmatprep.subr.mxu0 0.0
    %405 = vmatpush1.msra.mxu0 0.0
    %406 = vmatprep.subr.mxu0 0.0
    %407 = vmatpush1.msra.mxu0 0.0
    %408 = vmatprep.subr.mxu0 0.0
    %409 = vmatpush1.msra.mxu0 0.0
    %410 = vmatprep.subr.mxu0 0.0
    %411 = vmatpush1.msra.mxu0 0.0
    %412 = vmatprep.subr.mxu0 0.0
    %413 = vmatpush1.msra.mxu0 0.0
    %414 = vmatprep.subr.mxu0 0.0
    %415 = vmatpush1.msra.mxu0 0.0
    %416 = vmatprep.subr.mxu0 0.0
    %417 = vmatpush1.msra.mxu0 0.0
    %418 = vmatprep.subr.mxu0 0.0
    %419 = vmatpush1.msra.mxu0 0.0
    %420 = vmatprep.subr.mxu0 0.0
    %421 = vmatpush1.msra.mxu0 0.0
    %422 = vmatprep.mubr.f32.mxu0 0.0
    %423 = vmatmul.mubr.f32.gmra.mrb[0].mxu0 %v353
    %v424 = vpop.f32.mrb[0].mxu0
    %v425 = vadd.f32 0.0, %v424
    %v426 = vpop.f32.mrb[0].mxu0
    %427 = vmatprep.mubr.f32.mxu0 0.0
    %428 = vmatmul.mubr.f32.gmra.mrb[0].mxu0 %v356
    %v429 = vpop.f32.mrb[0].mxu0
    %v430 = vadd.f32 0.0, %v429
    %v431 = vpop.f32.mrb[0].mxu0
    %432 = vdwg.mxu0
    %433 = vst.msk [vmem:[#allocation3] sm:$0xff] %vm83, %v425
    %434 = vst.msk [vmem:[#allocation3 + $0x8] sm:$0xff] %vm83, %v430
    %v435 = vrot.slane %v280, 1
    %s436 = vtos %v435
    %v437 = vld [vmem:[%s1] sm:$0xff]
    %v438 = vld [vmem:[%s1 + $0x8] sm:$0xff]
    %v439 = vstv %s436
    %v440 = vmul.f32 %v439, %v437
    %v441 = vmul.f32 %v439, %v438
    %442 = vrot.lane.b32.xlu0 %v435, 127
    %v443 = vpop.permute.xlu0 %442
    %s444 = vtos %v443
    %v445 = vld [vmem:[%s318] sm:$0xff]
    %v446 = vld [vmem:[%s318 + $0x8] sm:$0xff]
    %v447 = vstv %s444
    %v448 = vmul.f32 %v447, %v445
    %v449 = vmul.f32 %v447, %v446
    %v450 = vadd.f32 %v440, %v448
    %v451 = vadd.f32 %v441, %v449
    %452 = vrot.lane.b32.xlu0 %v435, 126
    %v453 = vpop.permute.xlu0 %452
    %s454 = vtos %v453
    %v455 = vld [vmem:[%s329] sm:$0xff]
    %v456 = vld [vmem:[%s329 + $0x8] sm:$0xff]
    %v457 = vstv %s454
    %v458 = vmul.f32 %v457, %v455
    %v459 = vmul.f32 %v457, %v456
    %v460 = vadd.f32 %v450, %v458
    %v461 = vadd.f32 %v451, %v459
    %462 = vrot.lane.b32.xlu0 %v435, 125
    %v463 = vpop.permute.xlu0 %462
    %s464 = vtos %v463
    %v465 = vld [vmem:[%s340] sm:$0xff]
    %v466 = vld [vmem:[%s340 + $0x8] sm:$0xff]
    %v467 = vstv %s464
    %v468 = vmul.f32 %v467, %v465
    %v469 = vmul.f32 %v467, %v466
    %v470 = vadd.f32 %v460, %v468
    %v471 = vadd.f32 %v461, %v469
    %s472 = scalar_lea.vmem [#allocation2], 24
    %v473 = vld [vmem:[%s472] sm:$0xff]
    %v474 = vld [vmem:[%s472 + $0x8] sm:$0xff]
    %v475 = vld [vmem:[%s472 + $0x10] sm:$0xff]
    %v477 = vsel %vm351, %v470, 0
    %v480 = vsel %vm351, %v471, 0
    %482 = vmatprep.subr.mxu0 0.0
    %483 = vmatpush1.msra.mxu0 %v473
    %484 = vmatprep.subr.mxu0 0.0
    %485 = vmatpush1.msra.mxu0 %v474
    %486 = vmatprep.subr.mxu0 0.0
    %487 = vmatpush1.msra.mxu0 %v475
    %488 = vmatprep.subr.mxu0 0.0
    %489 = vmatpush1.msra.mxu0 0.0
    %490 = vmatprep.subr.mxu0 0.0
    %491 = vmatpush1.msra.mxu0 0.0
    %492 = vmatprep.subr.mxu0 0.0
    %493 = vmatpush1.msra.mxu0 0.0
    %494 = vmatprep.subr.mxu0 0.0
    %495 = vmatpush1.msra.mxu0 0.0
    %496 = vmatprep.subr.mxu0 0.0
    %497 = vmatpush1.msra.mxu0 0.0
    %498 = vmatprep.subr.mxu0 0.0
    %499 = vmatpush1.msra.mxu0 0.0
    %500 = vmatprep.subr.mxu0 0.0
    %501 = vmatpush1.msra.mxu0 0.0
    %502 = vmatprep.subr.mxu0 0.0
    %503 = vmatpush1.msra.mxu0 0.0
    %504 = vmatprep.subr.mxu0 0.0
    %505 = vmatpush1.msra.mxu0 0.0
    %506 = vmatprep.subr.mxu0 0.0
    %507 = vmatpush1.msra.mxu0 0.0
    %508 = vmatprep.subr.mxu0 0.0
    %509 = vmatpush1.msra.mxu0 0.0
    %510 = vmatprep.subr.mxu0 0.0
    %511 = vmatpush1.msra.mxu0 0.0
    %512 = vmatprep.subr.mxu0 0.0
    %513 = vmatpush1.msra.mxu0 0.0
    %514 = vmatprep.subr.mxu0 0.0
    %515 = vmatpush1.msra.mxu0 0.0
    %516 = vmatprep.subr.mxu0 0.0
    %517 = vmatpush1.msra.mxu0 0.0
    %518 = vmatprep.subr.mxu0 0.0
    %519 = vmatpush1.msra.mxu0 0.0
    %520 = vmatprep.subr.mxu0 0.0
    %521 = vmatpush1.msra.mxu0 0.0
    %522 = vmatprep.subr.mxu0 0.0
    %523 = vmatpush1.msra.mxu0 0.0
    %524 = vmatprep.subr.mxu0 0.0
    %525 = vmatpush1.msra.mxu0 0.0
    %526 = vmatprep.subr.mxu0 0.0
    %527 = vmatpush1.msra.mxu0 0.0
    %528 = vmatprep.subr.mxu0 0.0
    %529 = vmatpush1.msra.mxu0 0.0
    %530 = vmatprep.subr.mxu0 0.0
    %531 = vmatpush1.msra.mxu0 0.0
    %532 = vmatprep.subr.mxu0 0.0
    %533 = vmatpush1.msra.mxu0 0.0
    %534 = vmatprep.subr.mxu0 0.0
    %535 = vmatpush1.msra.mxu0 0.0
    %536 = vmatprep.subr.mxu0 0.0
    %537 = vmatpush1.msra.mxu0 0.0
    %538 = vmatprep.subr.mxu0 0.0
    %539 = vmatpush1.msra.mxu0 0.0
    %540 = vmatprep.subr.mxu0 0.0
    %541 = vmatpush1.msra.mxu0 0.0
    %542 = vmatprep.subr.mxu0 0.0
    %543 = vmatpush1.msra.mxu0 0.0
    %544 = vmatprep.subr.mxu0 0.0
    %545 = vmatpush1.msra.mxu0 0.0
    %546 = vmatprep.mubr.f32.mxu0 0.0
    %547 = vmatmul.mubr.f32.gmra.mrb[0].mxu0 %v477
    %v548 = vpop.f32.mrb[0].mxu0
    %v549 = vadd.f32 0.0, %v548
    %v550 = vpop.f32.mrb[0].mxu0
    %551 = vmatprep.mubr.f32.mxu0 0.0
    %552 = vmatmul.mubr.f32.gmra.mrb[0].mxu0 %v480
    %v553 = vpop.f32.mrb[0].mxu0
    %v554 = vadd.f32 0.0, %v553
    %v555 = vpop.f32.mrb[0].mxu0
    %556 = vdwg.mxu0
    %s557 = scalar_lea.vmem [#allocation3], 16
    %558 = vst.msk [vmem:[%s557] sm:$0xff] %vm83, %v549
    %559 = vst.msk [vmem:[%s557 + $0x8] sm:$0xff] %vm83, %v554
    %v560 = vld [vmem:[#allocation3] sm:$0xff]
    %v561 = vld [vmem:[#allocation3 + $0x8] sm:$0xff]
    %v562 = vld [vmem:[#allocation3 + $0x10] sm:$0xff]
    %v563 = vld [vmem:[#allocation3 + $0x18] sm:$0xff]
    %v564 = vld [vmem:[%s13] sm:$0xff]
    %v565 = vld [vmem:[%s13 + $0x8] sm:$0xff]
    %v566 = vld [vmem:[%s14] sm:$0xff]
    %v567 = vld [vmem:[%s14 + $0x8] sm:$0xff]
    %v568 = vsel %vm83, %v560, 0.0
    %569 = vadd.xlane.f32.xlu0 %v568
    %v570 = vpop.xlane.xlu0 %569
    %v571 = vsel %vm83, %v561, 0.0
    %572 = vadd.xlane.f32.xlu0 %v571
    %v573 = vpop.xlane.xlu0 %572
    %v574 = vsel %vm83, %v562, 0.0
    %575 = vadd.xlane.f32.xlu0 %v574
    %v576 = vpop.xlane.xlu0 %575
    %v577 = vsel %vm83, %v563, 0.0
    %578 = vadd.xlane.f32.xlu0 %v577
    %v579 = vpop.xlane.xlu0 %578
    %v580 = vmul.f32 %v570, %v90
    %v581 = vmul.f32 %v573, %v90
    %v582 = vmul.f32 %v576, %v90
    %v583 = vmul.f32 %v579, %v90
    %v584 = vadd.f32 %v580, %v582
    %v585 = vadd.f32 %v581, %v583
    %v586 = vrcp.pop 2.0
    %v587 = vmul.f32 %v584, %v586
    %v588 = vmul.f32 %v585, %v586
    %v589 = vsub.f32 %v560, %v587
    %v590 = vsub.f32 %v561, %v588
    %v591 = vsub.f32 %v562, %v587
    %v592 = vsub.f32 %v563, %v588
    %v593 = vmul.f32 %v589, %v589
    %v594 = vmul.f32 %v590, %v590
    %v595 = vmul.f32 %v591, %v591
    %v596 = vmul.f32 %v592, %v592
    %v597 = vsel %vm83, %v593, 0.0
    %598 = vadd.xlane.f32.xlu0 %v597
    %v599 = vpop.xlane.xlu0 %598
    %v600 = vsel %vm83, %v594, 0.0
    %601 = vadd.xlane.f32.xlu0 %v600
    %v602 = vpop.xlane.xlu0 %601
    %v603 = vsel %vm83, %v595, 0.0
    %604 = vadd.xlane.f32.xlu0 %v603
    %v605 = vpop.xlane.xlu0 %604
    %v606 = vsel %vm83, %v596, 0.0
    %607 = vadd.xlane.f32.xlu0 %v606
    %v608 = vpop.xlane.xlu0 %607
    %v609 = vmul.f32 %v599, %v90
    %v610 = vmul.f32 %v602, %v90
    %v611 = vmul.f32 %v605, %v90
    %v612 = vmul.f32 %v608, %v90
    %v613 = vadd.f32 %v609, %v611
    %v614 = vadd.f32 %v610, %v612
    %v615 = vmul.f32 %v613, %v586
    %v616 = vmul.f32 %v614, %v586
    %v617 = vadd.f32 %v615, 1e-05
    %v618 = vadd.f32 %v616, 1e-05
    %v619 = vrsqrt.pop %v617
    %v620 = vrsqrt.pop %v618
    %v621 = vmul.f32 %v589, %v619
    %v622 = vmul.f32 %v590, %v620
    %v623 = vmul.f32 %v591, %v619
    %v624 = vmul.f32 %v592, %v620
    %626 = vset.pattern.permute.xlu0 0
    %627 = vperm.xlu0 %626, %v564
    %v628 = vpop.permute.xlu0 %627
    %631 = vset.pattern.permute.xlu0 0
    %632 = vperm.xlu0 %631, %v565
    %v633 = vpop.permute.xlu0 %632
    %v635 = vmul.f32 %v621, %v628
    %v636 = vmul.f32 %v622, %v633
    %v637 = vmul.f32 %v623, %v628
    %v638 = vmul.f32 %v624, %v633
    %640 = vset.pattern.permute.xlu0 0
    %641 = vperm.xlu0 %640, %v566
    %v642 = vpop.permute.xlu0 %641
    %645 = vset.pattern.permute.xlu0 0
    %646 = vperm.xlu0 %645, %v567
    %v647 = vpop.permute.xlu0 %646
    %v649 = vadd.f32 %v635, %v642
    %v650 = vadd.f32 %v636, %v647
    %v651 = vadd.f32 %v637, %v642
    %v652 = vadd.f32 %v638, %v647
    %v653 = vmax.f32 %v649, 0.0
    %v654 = vmax.f32 %v650, 0.0
    %v655 = vmax.f32 %v651, 0.0
    %v656 = vmax.f32 %v652, 0.0
    %v657 = vsel %vm83, %v653, 0.0
    %658 = vadd.xlane.f32.xlu0 %v657
    %v659 = vpop.xlane.xlu0 %658
    %v660 = vsel %vm83, %v654, 0.0
    %661 = vadd.xlane.f32.xlu0 %v660
    %v662 = vpop.xlane.xlu0 %661
    %v663 = vsel %vm83, %v655, 0.0
    %664 = vadd.xlane.f32.xlu0 %v663
    %v665 = vpop.xlane.xlu0 %664
    %v666 = vsel %vm83, %v656, 0.0
    %667 = vadd.xlane.f32.xlu0 %v666
    %v668 = vpop.xlane.xlu0 %667
    %v669 = vmul.f32 %v659, %v90
    %v670 = vmul.f32 %v662, %v90
    %v671 = vmul.f32 %v665, %v90
    %v672 = vmul.f32 %v668, %v90
    %v673 = vld [vmem:[%s6] sm:$0xff]
    %v674 = vld [vmem:[%s6 + $0x8] sm:$0xff]
    %v679 = vlaneseq
    %v680 = vshrl.u32 %v679, 7
    %v681 = vsub.s32 %v97, %v680
    %v682 = vrot.slane %v669, %v681
    %v683 = vadd.s32 %v97, 4294967288
    %v684 = vlaneseq
    %v685 = vshrl.u32 %v684, 7
    %v686 = vsub.s32 %v683, %v685
    %v687 = vrot.slane %v670, %v686
    %vm688 = vcmask 130112
    %v689 = vsel %vm688, %v687, %v682
    %v690 = vlaneseq
    %v691 = vshrl.u32 %v690, 7
    %v692 = vsub.s32 %v97, %v691
    %v693 = vrot.slane %v671, %v692
    %v694 = vlaneseq
    %v695 = vshrl.u32 %v694, 7
    %v696 = vsub.s32 %v683, %v695
    %v697 = vrot.slane %v672, %v696
    %v698 = vsel %vm688, %v697, %v693
    %v699 = vsel %vm106, %v698, %v689
    %v700 = vsel %vm83, %v699, 0
    %702 = vmatprep.subr.mxu0 0.0
    %703 = vmatpush1.msra.mxu0 %v673
    %704 = vmatprep.subr.mxu0 0.0
    %705 = vmatpush1.msra.mxu0 %v674
    %706 = vmatprep.subr.mxu0 0.0
    %707 = vmatpush1.msra.mxu0 0.0
    %708 = vmatprep.subr.mxu0 0.0
    %709 = vmatpush1.msra.mxu0 0.0
    %710 = vmatprep.subr.mxu0 0.0
    %711 = vmatpush1.msra.mxu0 0.0
    %712 = vmatprep.subr.mxu0 0.0
    %713 = vmatpush1.msra.mxu0 0.0
    %714 = vmatprep.subr.mxu0 0.0
    %715 = vmatpush1.msra.mxu0 0.0
    %716 = vmatprep.subr.mxu0 0.0
    %717 = vmatpush1.msra.mxu0 0.0
    %718 = vmatprep.subr.mxu0 0.0
    %719 = vmatpush1.msra.mxu0 0.0
    %720 = vmatprep.subr.mxu0 0.0
    %721 = vmatpush1.msra.mxu0 0.0
    %722 = vmatprep.subr.mxu0 0.0
    %723 = vmatpush1.msra.mxu0 0.0
    %724 = vmatprep.subr.mxu0 0.0
    %725 = vmatpush1.msra.mxu0 0.0
    %726 = vmatprep.subr.mxu0 0.0
    %727 = vmatpush1.msra.mxu0 0.0
    %728 = vmatprep.subr.mxu0 0.0
    %729 = vmatpush1.msra.mxu0 0.0
    %730 = vmatprep.subr.mxu0 0.0
    %731 = vmatpush1.msra.mxu0 0.0
    %732 = vmatprep.subr.mxu0 0.0
    %733 = vmatpush1.msra.mxu0 0.0
    %734 = vmatprep.subr.mxu0 0.0
    %735 = vmatpush1.msra.mxu0 0.0
    %736 = vmatprep.subr.mxu0 0.0
    %737 = vmatpush1.msra.mxu0 0.0
    %738 = vmatprep.subr.mxu0 0.0
    %739 = vmatpush1.msra.mxu0 0.0
    %740 = vmatprep.subr.mxu0 0.0
    %741 = vmatpush1.msra.mxu0 0.0
    %742 = vmatprep.subr.mxu0 0.0
    %743 = vmatpush1.msra.mxu0 0.0
    %744 = vmatprep.subr.mxu0 0.0
    %745 = vmatpush1.msra.mxu0 0.0
    %746 = vmatprep.subr.mxu0 0.0
    %747 = vmatpush1.msra.mxu0 0.0
    %748 = vmatprep.subr.mxu0 0.0
    %749 = vmatpush1.msra.mxu0 0.0
    %750 = vmatprep.subr.mxu0 0.0
    %751 = vmatpush1.msra.mxu0 0.0
    %752 = vmatprep.subr.mxu0 0.0
    %753 = vmatpush1.msra.mxu0 0.0
    %754 = vmatprep.subr.mxu0 0.0
    %755 = vmatpush1.msra.mxu0 0.0
    %756 = vmatprep.subr.mxu0 0.0
    %757 = vmatpush1.msra.mxu0 0.0
    %758 = vmatprep.subr.mxu0 0.0
    %759 = vmatpush1.msra.mxu0 0.0
    %760 = vmatprep.subr.mxu0 0.0
    %761 = vmatpush1.msra.mxu0 0.0
    %762 = vmatprep.subr.mxu0 0.0
    %763 = vmatpush1.msra.mxu0 0.0
    %764 = vmatprep.subr.mxu0 0.0
    %765 = vmatpush1.msra.mxu0 0.0
    %766 = vmatprep.mubr.f32.mxu0 0.0
    %767 = vmatmul.mubr.f32.gmra.mrb[0].mxu0 %v700
    %v768 = vpop.f32.mrb[0].mxu0
    %v769 = vadd.f32 0.0, %v768
    %v770 = vpop.f32.mrb[0].mxu0
    %771 = vdwg.mxu0
    %v772 = vmax.f32 %v769, 0.0
    %v773 = vld [vmem:[%s7] sm:$0x1f]
    %v774 = vld [vmem:[%s8] sm:$0x1]
    %v776 = vlaneseq
    %v777 = vshrl.u32 %v776, 7
    %v778 = vsub.s32 0, %v777
    %v779 = vrot.slane %v774, %v778
    %vm781 = vcmask 39936
    %v783 = vsel %vm781, %v772, 0
    %vm785 = vcmask 1044480
    %v787 = vsel %vm785, %v773, 0
    %789 = vmatprep.subr.mxu0 0.0
    %790 = vmatpush1.msra.mxu0 %v787
    %791 = vmatprep.subr.mxu0 0.0
    %792 = vmatpush1.msra.mxu0 0.0
    %793 = vmatprep.subr.mxu0 0.0
    %794 = vmatpush1.msra.mxu0 0.0
    %795 = vmatprep.subr.mxu0 0.0
    %796 = vmatpush1.msra.mxu0 0.0
    %797 = vmatprep.subr.mxu0 0.0
    %798 = vmatpush1.msra.mxu0 0.0
    %799 = vmatprep.subr.mxu0 0.0
    %800 = vmatpush1.msra.mxu0 0.0
    %801 = vmatprep.subr.mxu0 0.0
    %802 = vmatpush1.msra.mxu0 0.0
    %803 = vmatprep.subr.mxu0 0.0
    %804 = vmatpush1.msra.mxu0 0.0
    %805 = vmatprep.subr.mxu0 0.0
    %806 = vmatpush1.msra.mxu0 0.0
    %807 = vmatprep.subr.mxu0 0.0
    %808 = vmatpush1.msra.mxu0 0.0
    %809 = vmatprep.subr.mxu0 0.0
    %810 = vmatpush1.msra.mxu0 0.0
    %811 = vmatprep.subr.mxu0 0.0
    %812 = vmatpush1.msra.mxu0 0.0
    %813 = vmatprep.subr.mxu0 0.0
    %814 = vmatpush1.msra.mxu0 0.0
    %815 = vmatprep.subr.mxu0 0.0
    %816 = vmatpush1.msra.mxu0 0.0
    %817 = vmatprep.subr.mxu0 0.0
    %818 = vmatpush1.msra.mxu0 0.0
    %819 = vmatprep.subr.mxu0 0.0
    %820 = vmatpush1.msra.mxu0 0.0
    %821 = vmatprep.subr.mxu0 0.0
    %822 = vmatpush1.msra.mxu0 0.0
    %823 = vmatprep.subr.mxu0 0.0
    %824 = vmatpush1.msra.mxu0 0.0
    %825 = vmatprep.subr.mxu0 0.0
    %826 = vmatpush1.msra.mxu0 0.0
    %827 = vmatprep.subr.mxu0 0.0
    %828 = vmatpush1.msra.mxu0 0.0
    %829 = vmatprep.subr.mxu0 0.0
    %830 = vmatpush1.msra.mxu0 0.0
    %831 = vmatprep.subr.mxu0 0.0
    %832 = vmatpush1.msra.mxu0 0.0
    %833 = vmatprep.subr.mxu0 0.0
    %834 = vmatpush1.msra.mxu0 0.0
    %835 = vmatprep.subr.mxu0 0.0
    %836 = vmatpush1.msra.mxu0 0.0
    %837 = vmatprep.subr.mxu0 0.0
    %838 = vmatpush1.msra.mxu0 0.0
    %839 = vmatprep.subr.mxu0 0.0
    %840 = vmatpush1.msra.mxu0 0.0
    %841 = vmatprep.subr.mxu0 0.0
    %842 = vmatpush1.msra.mxu0 0.0
    %843 = vmatprep.subr.mxu0 0.0
    %844 = vmatpush1.msra.mxu0 0.0
    %845 = vmatprep.subr.mxu0 0.0
    %846 = vmatpush1.msra.mxu0 0.0
    %847 = vmatprep.subr.mxu0 0.0
    %848 = vmatpush1.msra.mxu0 0.0
    %849 = vmatprep.subr.mxu0 0.0
    %850 = vmatpush1.msra.mxu0 0.0
    %851 = vmatprep.subr.mxu0 0.0
    %852 = vmatpush1.msra.mxu0 0.0
    %853 = vmatprep.mubr.f32.mxu0 0.0
    %854 = vmatmul.mubr.f32.gmra.mrb[0].mxu0 %v783
    %v855 = vpop.f32.mrb[0].mxu0
    %v856 = vadd.f32 %v779, %v855
    %v857 = vpop.f32.mrb[0].mxu0
    %858 = vdwg.mxu0
    %v859 = vmul.f32 %v856, 0.029411765
    %v860 = vsel %vm269, %v859, -inf
    %861 = vmax.xlane.f32.xlu0 %v860
    %v862 = vpop.xlane.xlu0 %861
    %v863 = vsub.f32 %v859, %v862
    %v864 = vmul.f32 %v863, 1.442695
    %v865 = vpow.pop %v864
    %v866 = vsel %vm269, %v865, 0.0
    %867 = vadd.xlane.f32.xlu0 %v866
    %v868 = vpop.xlane.xlu0 %867
    %v869 = vrcp.pop %v868
    %v870 = vmul.f32 %v865, %v869
    %871 = vst.msk [vmem:[#allocation4] sm:$0xff] %vm83, 0.0
    %872 = vst.msk [vmem:[#allocation4 + $0x8] sm:$0xff] %vm83, 0.0
    %873 = vst.msk [vmem:[#allocation4 + $0x10] sm:$0xff] %vm83, 0.0
    %874 = vst.msk [vmem:[#allocation4 + $0x18] sm:$0xff] %vm83, 0.0
    %875 = vst.msk [vmem:[#allocation4 + $0x20] sm:$0xff] %vm83, 0.0
    %876 = vst.msk [vmem:[#allocation4 + $0x28] sm:$0xff] %vm83, 0.0
    %877 = vst.msk [vmem:[#allocation4 + $0x30] sm:$0xff] %vm83, 0.0
    %878 = vst.msk [vmem:[#allocation4 + $0x38] sm:$0xff] %vm83, 0.0
    %879 = vst.msk [vmem:[#allocation4 + $0x40] sm:$0xff] %vm83, 0.0
    %880 = vst.msk [vmem:[#allocation4 + $0x48] sm:$0xff] %vm83, 0.0
    %881 = vst.msk [vmem:[#allocation4 + $0x50] sm:$0xff] %vm83, 0.0
    %882 = vst.msk [vmem:[#allocation4 + $0x58] sm:$0xff] %vm83, 0.0
    %887 = vrot.lane.b32.xlu0 %v653, 1
    %v888 = vpop.permute.xlu0 %887
    %889 = vrot.lane.b32.xlu0 %v654, 1
    %v890 = vpop.permute.xlu0 %889
    %891 = vrot.lane.b32.xlu0 %v655, 1
    %v892 = vpop.permute.xlu0 %891
    %893 = vrot.lane.b32.xlu0 %v656, 1
    %v894 = vpop.permute.xlu0 %893
    %899 = vst.msk [vmem:[#allocation4] sm:$0xff] %vm295, %v888
    %900 = vst.msk [vmem:[#allocation4 + $0x8] sm:$0xff] %vm295, %v890
    %901 = vst.msk [vmem:[#allocation4 + $0x30] sm:$0xff] %vm295, %v892
    %902 = vst.msk [vmem:[#allocation4 + $0x38] sm:$0xff] %vm295, %v894
    %903 = vst.msk [vmem:[#allocation4 + $0x10] sm:$0xff] %vm83, %v653
    %904 = vst.msk [vmem:[#allocation4 + $0x18] sm:$0xff] %vm83, %v654
    %905 = vst.msk [vmem:[#allocation4 + $0x40] sm:$0xff] %vm83, %v655
    %906 = vst.msk [vmem:[#allocation4 + $0x48] sm:$0xff] %vm83, %v656
    %907 = vrot.lane.b32.xlu0 %v653, 127
    %v908 = vpop.permute.xlu0 %907
    %909 = vrot.lane.b32.xlu0 %v654, 127
    %v910 = vpop.permute.xlu0 %909
    %911 = vrot.lane.b32.xlu0 %v655, 127
    %v912 = vpop.permute.xlu0 %911
    %913 = vrot.lane.b32.xlu0 %v656, 127
    %v914 = vpop.permute.xlu0 %913
    %919 = vst.msk [vmem:[#allocation4 + $0x20] sm:$0xff] %vm306, %v908
    %920 = vst.msk [vmem:[#allocation4 + $0x28] sm:$0xff] %vm306, %v910
    %921 = vst.msk [vmem:[#allocation4 + $0x50] sm:$0xff] %vm306, %v912
    %922 = vst.msk [vmem:[#allocation4 + $0x58] sm:$0xff] %vm306, %v914
    %s923 = vtos %v870
    %v924 = vld [vmem:[%s5] sm:$0xff]
    %v925 = vld [vmem:[%s5 + $0x8] sm:$0xff]
    %v926 = vstv %s923
    %v927 = vmul.f32 %v926, %v924
    %v928 = vmul.f32 %v926, %v925
    %929 = vrot.lane.b32.xlu0 %v870, 127
    %v930 = vpop.permute.xlu0 %929
    %s931 = vtos %v930
    %s932 = scalar_lea.vmem %s5, 16
    %v933 = vld [vmem:[%s932] sm:$0xff]
    %v934 = vld [vmem:[%s932 + $0x8] sm:$0xff]
    %v935 = vstv %s931
    %v936 = vmul.f32 %v935, %v933
    %v937 = vmul.f32 %v935, %v934
    %v938 = vadd.f32 %v927, %v936
    %v939 = vadd.f32 %v928, %v937
    %940 = vrot.lane.b32.xlu0 %v870, 126
    %v941 = vpop.permute.xlu0 %940
    %s942 = vtos %v941
    %s943 = scalar_lea.vmem %s5, 32
    %v944 = vld [vmem:[%s943] sm:$0xff]
    %v945 = vld [vmem:[%s943 + $0x8] sm:$0xff]
    %v946 = vstv %s942
    %v947 = vmul.f32 %v946, %v944
    %v948 = vmul.f32 %v946, %v945
    %v949 = vadd.f32 %v938, %v947
    %v950 = vadd.f32 %v939, %v948
    %951 = vrot.lane.b32.xlu0 %v870, 125
    %v952 = vpop.permute.xlu0 %951
    %s953 = vtos %v952
    %s954 = scalar_lea.vmem %s5, 48
    %v955 = vld [vmem:[%s954] sm:$0xff]
    %v956 = vld [vmem:[%s954 + $0x8] sm:$0xff]
    %v957 = vstv %s953
    %v958 = vmul.f32 %v957, %v955
    %v959 = vmul.f32 %v957, %v956
    %v960 = vadd.f32 %v949, %v958
    %v961 = vadd.f32 %v950, %v959
    %v962 = vld [vmem:[#allocation4] sm:$0xff]
    %v963 = vld [vmem:[#allocation4 + $0x8] sm:$0xff]
    %v964 = vld [vmem:[#allocation4 + $0x10] sm:$0xff]
    %v965 = vld [vmem:[#allocation4 + $0x18] sm:$0xff]
    %v966 = vld [vmem:[#allocation4 + $0x20] sm:$0xff]
    %v967 = vld [vmem:[#allocation4 + $0x28] sm:$0xff]
    %vm968 = vcmask 392192
    %v970 = vsel %vm968, %v960, 0
    %v973 = vsel %vm968, %v961, 0
    %975 = vmatprep.subr.mxu0 0.0
    %976 = vmatpush1.msra.mxu0 %v962
    %977 = vmatprep.subr.mxu0 0.0
    %978 = vmatpush1.msra.mxu0 %v963
    %979 = vmatprep.subr.mxu0 0.0
    %980 = vmatpush1.msra.mxu0 %v964
    %981 = vmatprep.subr.mxu0 0.0
    %982 = vmatpush1.msra.mxu0 %v965
    %983 = vmatprep.subr.mxu0 0.0
    %984 = vmatpush1.msra.mxu0 %v966
    %985 = vmatprep.subr.mxu0 0.0
    %986 = vmatpush1.msra.mxu0 %v967
    %987 = vmatprep.subr.mxu0 0.0
    %988 = vmatpush1.msra.mxu0 0.0
    %989 = vmatprep.subr.mxu0 0.0
    %990 = vmatpush1.msra.mxu0 0.0
    %991 = vmatprep.subr.mxu0 0.0
    %992 = vmatpush1.msra.mxu0 0.0
    %993 = vmatprep.subr.mxu0 0.0
    %994 = vmatpush1.msra.mxu0 0.0
    %995 = vmatprep.subr.mxu0 0.0
    %996 = vmatpush1.msra.mxu0 0.0
    %997 = vmatprep.subr.mxu0 0.0
    %998 = vmatpush1.msra.mxu0 0.0
    %999 = vmatprep.subr.mxu0 0.0
    %1000 = vmatpush1.msra.mxu0 0.0
    %1001 = vmatprep.subr.mxu0 0.0
    %1002 = vmatpush1.msra.mxu0 0.0
    %1003 = vmatprep.subr.mxu0 0.0
    %1004 = vmatpush1.msra.mxu0 0.0
    %1005 = vmatprep.subr.mxu0 0.0
    %1006 = vmatpush1.msra.mxu0 0.0
    %1007 = vmatprep.subr.mxu0 0.0
    %1008 = vmatpush1.msra.mxu0 0.0
    %1009 = vmatprep.subr.mxu0 0.0
    %1010 = vmatpush1.msra.mxu0 0.0
    %1011 = vmatprep.subr.mxu0 0.0
    %1012 = vmatpush1.msra.mxu0 0.0
    %1013 = vmatprep.subr.mxu0 0.0
    %1014 = vmatpush1.msra.mxu0 0.0
    %1015 = vmatprep.subr.mxu0 0.0
    %1016 = vmatpush1.msra.mxu0 0.0
    %1017 = vmatprep.subr.mxu0 0.0
    %1018 = vmatpush1.msra.mxu0 0.0
    %1019 = vmatprep.subr.mxu0 0.0
    %1020 = vmatpush1.msra.mxu0 0.0
    %1021 = vmatprep.subr.mxu0 0.0
    %1022 = vmatpush1.msra.mxu0 0.0
    %1023 = vmatprep.subr.mxu0 0.0
    %1024 = vmatpush1.msra.mxu0 0.0
    %1025 = vmatprep.subr.mxu0 0.0
    %1026 = vmatpush1.msra.mxu0 0.0
    %1027 = vmatprep.subr.mxu0 0.0
    %1028 = vmatpush1.msra.mxu0 0.0
    %1029 = vmatprep.subr.mxu0 0.0
    %1030 = vmatpush1.msra.mxu0 0.0
    %1031 = vmatprep.subr.mxu0 0.0
    %1032 = vmatpush1.msra.mxu0 0.0
    %1033 = vmatprep.subr.mxu0 0.0
    %1034 = vmatpush1.msra.mxu0 0.0
    %1035 = vmatprep.subr.mxu0 0.0
    %1036 = vmatpush1.msra.mxu0 0.0
    %1037 = vmatprep.subr.mxu0 0.0
    %1038 = vmatpush1.msra.mxu0 0.0
    %1039 = vmatprep.mubr.f32.mxu0 0.0
    %1040 = vmatmul.mubr.f32.gmra.mrb[0].mxu0 %v970
    %v1041 = vpop.f32.mrb[0].mxu0
    %v1042 = vadd.f32 0.0, %v1041
    %v1043 = vpop.f32.mrb[0].mxu0
    %1044 = vmatprep.mubr.f32.mxu0 0.0
    %1045 = vmatmul.mubr.f32.gmra.mrb[0].mxu0 %v973
    %v1046 = vpop.f32.mrb[0].mxu0
    %v1047 = vadd.f32 0.0, %v1046
    %v1048 = vpop.f32.mrb[0].mxu0
    %1049 = vdwg.mxu0
    %1050 = vst.msk [vmem:[#allocation5] sm:$0xff] %vm83, %v1042
    %1051 = vst.msk [vmem:[#allocation5 + $0x8] sm:$0xff] %vm83, %v1047
    %v1052 = vrot.slane %v870, 1
    %s1053 = vtos %v1052
    %v1054 = vld [vmem:[%s5] sm:$0xff]
    %v1055 = vld [vmem:[%s5 + $0x8] sm:$0xff]
    %v1056 = vstv %s1053
    %v1057 = vmul.f32 %v1056, %v1054
    %v1058 = vmul.f32 %v1056, %v1055
    %1059 = vrot.lane.b32.xlu0 %v1052, 127
    %v1060 = vpop.permute.xlu0 %1059
    %s1061 = vtos %v1060
    %v1062 = vld [vmem:[%s932] sm:$0xff]
    %v1063 = vld [vmem:[%s932 + $0x8] sm:$0xff]
    %v1064 = vstv %s1061
    %v1065 = vmul.f32 %v1064, %v1062
    %v1066 = vmul.f32 %v1064, %v1063
    %v1067 = vadd.f32 %v1057, %v1065
    %v1068 = vadd.f32 %v1058, %v1066
    %1069 = vrot.lane.b32.xlu0 %v1052, 126
    %v1070 = vpop.permute.xlu0 %1069
    %s1071 = vtos %v1070
    %v1072 = vld [vmem:[%s943] sm:$0xff]
    %v1073 = vld [vmem:[%s943 + $0x8] sm:$0xff]
    %v1074 = vstv %s1071
    %v1075 = vmul.f32 %v1074, %v1072
    %v1076 = vmul.f32 %v1074, %v1073
    %v1077 = vadd.f32 %v1067, %v1075
    %v1078 = vadd.f32 %v1068, %v1076
    %1079 = vrot.lane.b32.xlu0 %v1052, 125
    %v1080 = vpop.permute.xlu0 %1079
    %s1081 = vtos %v1080
    %v1082 = vld [vmem:[%s954] sm:$0xff]
    %v1083 = vld [vmem:[%s954 + $0x8] sm:$0xff]
    %v1084 = vstv %s1081
    %v1085 = vmul.f32 %v1084, %v1082
    %v1086 = vmul.f32 %v1084, %v1083
    %v1087 = vadd.f32 %v1077, %v1085
    %v1088 = vadd.f32 %v1078, %v1086
    %s1089 = scalar_lea.vmem [#allocation4], 48
    %v1090 = vld [vmem:[%s1089] sm:$0xff]
    %v1091 = vld [vmem:[%s1089 + $0x8] sm:$0xff]
    %v1092 = vld [vmem:[%s1089 + $0x10] sm:$0xff]
    %v1093 = vld [vmem:[%s1089 + $0x18] sm:$0xff]
    %v1094 = vld [vmem:[%s1089 + $0x20] sm:$0xff]
    %v1095 = vld [vmem:[%s1089 + $0x28] sm:$0xff]
    %v1097 = vsel %vm968, %v1087, 0
    %v1100 = vsel %vm968, %v1088, 0
    %1102 = vmatprep.subr.mxu0 0.0
    %1103 = vmatpush1.msra.mxu0 %v1090
    %1104 = vmatprep.subr.mxu0 0.0
    %1105 = vmatpush1.msra.mxu0 %v1091
    %1106 = vmatprep.subr.mxu0 0.0
    %1107 = vmatpush1.msra.mxu0 %v1092
    %1108 = vmatprep.subr.mxu0 0.0
    %1109 = vmatpush1.msra.mxu0 %v1093
    %1110 = vmatprep.subr.mxu0 0.0
    %1111 = vmatpush1.msra.mxu0 %v1094
    %1112 = vmatprep.subr.mxu0 0.0
    %1113 = vmatpush1.msra.mxu0 %v1095
    %1114 = vmatprep.subr.mxu0 0.0
    %1115 = vmatpush1.msra.mxu0 0.0
    %1116 = vmatprep.subr.mxu0 0.0
    %1117 = vmatpush1.msra.mxu0 0.0
    %1118 = vmatprep.subr.mxu0 0.0
    %1119 = vmatpush1.msra.mxu0 0.0
    %1120 = vmatprep.subr.mxu0 0.0
    %1121 = vmatpush1.msra.mxu0 0.0
    %1122 = vmatprep.subr.mxu0 0.0
    %1123 = vmatpush1.msra.mxu0 0.0
    %1124 = vmatprep.subr.mxu0 0.0
    %1125 = vmatpush1.msra.mxu0 0.0
    %1126 = vmatprep.subr.mxu0 0.0
    %1127 = vmatpush1.msra.mxu0 0.0
    %1128 = vmatprep.subr.mxu0 0.0
    %1129 = vmatpush1.msra.mxu0 0.0
    %1130 = vmatprep.subr.mxu0 0.0
    %1131 = vmatpush1.msra.mxu0 0.0
    %1132 = vmatprep.subr.mxu0 0.0
    %1133 = vmatpush1.msra.mxu0 0.0
    %1134 = vmatprep.subr.mxu0 0.0
    %1135 = vmatpush1.msra.mxu0 0.0
    %1136 = vmatprep.subr.mxu0 0.0
    %1137 = vmatpush1.msra.mxu0 0.0
    %1138 = vmatprep.subr.mxu0 0.0
    %1139 = vmatpush1.msra.mxu0 0.0
    %1140 = vmatprep.subr.mxu0 0.0
    %1141 = vmatpush1.msra.mxu0 0.0
    %1142 = vmatprep.subr.mxu0 0.0
    %1143 = vmatpush1.msra.mxu0 0.0
    %1144 = vmatprep.subr.mxu0 0.0
    %1145 = vmatpush1.msra.mxu0 0.0
    %1146 = vmatprep.subr.mxu0 0.0
    %1147 = vmatpush1.msra.mxu0 0.0
    %1148 = vmatprep.subr.mxu0 0.0
    %1149 = vmatpush1.msra.mxu0 0.0
    %1150 = vmatprep.subr.mxu0 0.0
    %1151 = vmatpush1.msra.mxu0 0.0
    %1152 = vmatprep.subr.mxu0 0.0
    %1153 = vmatpush1.msra.mxu0 0.0
    %1154 = vmatprep.subr.mxu0 0.0
    %1155 = vmatpush1.msra.mxu0 0.0
    %1156 = vmatprep.subr.mxu0 0.0
    %1157 = vmatpush1.msra.mxu0 0.0
    %1158 = vmatprep.subr.mxu0 0.0
    %1159 = vmatpush1.msra.mxu0 0.0
    %1160 = vmatprep.subr.mxu0 0.0
    %1161 = vmatpush1.msra.mxu0 0.0
    %1162 = vmatprep.subr.mxu0 0.0
    %1163 = vmatpush1.msra.mxu0 0.0
    %1164 = vmatprep.subr.mxu0 0.0
    %1165 = vmatpush1.msra.mxu0 0.0
    %1166 = vmatprep.mubr.f32.mxu0 0.0
    %1167 = vmatmul.mubr.f32.gmra.mrb[0].mxu0 %v1097
    %v1168 = vpop.f32.mrb[0].mxu0
    %v1169 = vadd.f32 0.0, %v1168
    %v1170 = vpop.f32.mrb[0].mxu0
    %1171 = vmatprep.mubr.f32.mxu0 0.0
    %1172 = vmatmul.mubr.f32.gmra.mrb[0].mxu0 %v1100
    %v1173 = vpop.f32.mrb[0].mxu0
    %v1174 = vadd.f32 0.0, %v1173
    %v1175 = vpop.f32.mrb[0].mxu0
    %1176 = vdwg.mxu0
    %s1177 = scalar_lea.vmem [#allocation5], 16
    %1178 = vst.msk [vmem:[%s1177] sm:$0xff] %vm83, %v1169
    %1179 = vst.msk [vmem:[%s1177 + $0x8] sm:$0xff] %vm83, %v1174
    %v1180 = vld [vmem:[#allocation5] sm:$0xff]
    %v1181 = vld [vmem:[#allocation5 + $0x8] sm:$0xff]
    %v1182 = vld [vmem:[#allocation5 + $0x10] sm:$0xff]
    %v1183 = vld [vmem:[#allocation5 + $0x18] sm:$0xff]
    %v1184 = vld [vmem:[%s15] sm:$0xff]
    %v1185 = vld [vmem:[%s15 + $0x8] sm:$0xff]
    %v1186 = vld [vmem:[%s16] sm:$0xff]
    %v1187 = vld [vmem:[%s16 + $0x8] sm:$0xff]
    %v1188 = vsel %vm83, %v1180, 0.0
    %1189 = vadd.xlane.f32.xlu0 %v1188
    %v1190 = vpop.xlane.xlu0 %1189
    %v1191 = vsel %vm83, %v1181, 0.0
    %1192 = vadd.xlane.f32.xlu0 %v1191
    %v1193 = vpop.xlane.xlu0 %1192
    %v1194 = vsel %vm83, %v1182, 0.0
    %1195 = vadd.xlane.f32.xlu0 %v1194
    %v1196 = vpop.xlane.xlu0 %1195
    %v1197 = vsel %vm83, %v1183, 0.0
    %1198 = vadd.xlane.f32.xlu0 %v1197
    %v1199 = vpop.xlane.xlu0 %1198
    %v1200 = vmul.f32 %v1190, %v90
    %v1201 = vmul.f32 %v1193, %v90
    %v1202 = vmul.f32 %v1196, %v90
    %v1203 = vmul.f32 %v1199, %v90
    %v1204 = vadd.f32 %v1200, %v1202
    %v1205 = vadd.f32 %v1201, %v1203
    %v1206 = vmul.f32 %v1204, %v586
    %v1207 = vmul.f32 %v1205, %v586
    %v1208 = vsub.f32 %v1180, %v1206
    %v1209 = vsub.f32 %v1181, %v1207
    %v1210 = vsub.f32 %v1182, %v1206
    %v1211 = vsub.f32 %v1183, %v1207
    %v1212 = vmul.f32 %v1208, %v1208
    %v1213 = vmul.f32 %v1209, %v1209
    %v1214 = vmul.f32 %v1210, %v1210
    %v1215 = vmul.f32 %v1211, %v1211
    %v1216 = vsel %vm83, %v1212, 0.0
    %1217 = vadd.xlane.f32.xlu0 %v1216
    %v1218 = vpop.xlane.xlu0 %1217
    %v1219 = vsel %vm83, %v1213, 0.0
    %1220 = vadd.xlane.f32.xlu0 %v1219
    %v1221 = vpop.xlane.xlu0 %1220
    %v1222 = vsel %vm83, %v1214, 0.0
    %1223 = vadd.xlane.f32.xlu0 %v1222
    %v1224 = vpop.xlane.xlu0 %1223
    %v1225 = vsel %vm83, %v1215, 0.0
    %1226 = vadd.xlane.f32.xlu0 %v1225
    %v1227 = vpop.xlane.xlu0 %1226
    %v1228 = vmul.f32 %v1218, %v90
    %v1229 = vmul.f32 %v1221, %v90
    %v1230 = vmul.f32 %v1224, %v90
    %v1231 = vmul.f32 %v1227, %v90
    %v1232 = vadd.f32 %v1228, %v1230
    %v1233 = vadd.f32 %v1229, %v1231
    %v1234 = vmul.f32 %v1232, %v586
    %v1235 = vmul.f32 %v1233, %v586
    %v1236 = vadd.f32 %v1234, 1e-05
    %v1237 = vadd.f32 %v1235, 1e-05
    %v1238 = vrsqrt.pop %v1236
    %v1239 = vrsqrt.pop %v1237
    %v1240 = vmul.f32 %v1208, %v1238
    %v1241 = vmul.f32 %v1209, %v1239
    %v1242 = vmul.f32 %v1210, %v1238
    %v1243 = vmul.f32 %v1211, %v1239
    %1245 = vset.pattern.permute.xlu0 0
    %1246 = vperm.xlu0 %1245, %v1184
    %v1247 = vpop.permute.xlu0 %1246
    %1250 = vset.pattern.permute.xlu0 0
    %1251 = vperm.xlu0 %1250, %v1185
    %v1252 = vpop.permute.xlu0 %1251
    %v1254 = vmul.f32 %v1240, %v1247
    %v1255 = vmul.f32 %v1241, %v1252
    %v1256 = vmul.f32 %v1242, %v1247
    %v1257 = vmul.f32 %v1243, %v1252
    %1259 = vset.pattern.permute.xlu0 0
    %1260 = vperm.xlu0 %1259, %v1186
    %v1261 = vpop.permute.xlu0 %1260
    %1264 = vset.pattern.permute.xlu0 0
    %1265 = vperm.xlu0 %1264, %v1187
    %v1266 = vpop.permute.xlu0 %1265
    %v1268 = vadd.f32 %v1254, %v1261
    %v1269 = vadd.f32 %v1255, %v1266
    %v1270 = vadd.f32 %v1256, %v1261
    %v1271 = vadd.f32 %v1257, %v1266
    %v1272 = vld [vmem:[%s19] sm:$0xff]
    %v1273 = vld [vmem:[%s19 + $0x8] sm:$0xff]
    %v1274 = vld [vmem:[%s20] sm:$0x1]
    %v1275 = vld [vmem:[%s21] sm:$0x1]
    %v1276 = vld [vmem:[%s22] sm:$0x1]
    %v1277 = vld [vmem:[%s23] sm:$0xff]
    %v1278 = vld [vmem:[%s23 + $0x8] sm:$0xff]
    %v1279 = vld [vmem:[%s24] sm:$0x1]
    %v1280 = vand.u32 2147483647, %v1268
    %v1281 = vand.u32 2147483647, %v1269
    %v1282 = vand.u32 2147483647, %v1270
    %v1283 = vand.u32 2147483647, %v1271
    %v1284 = vsel %vm83, %v1280, 0.0
    %1285 = vadd.xlane.f32.xlu0 %v1284
    %v1286 = vpop.xlane.xlu0 %1285
    %v1287 = vsel %vm83, %v1281, 0.0
    %1288 = vadd.xlane.f32.xlu0 %v1287
    %v1289 = vpop.xlane.xlu0 %1288
    %v1290 = vsel %vm83, %v1282, 0.0
    %1291 = vadd.xlane.f32.xlu0 %v1290
    %v1292 = vpop.xlane.xlu0 %1291
    %v1293 = vsel %vm83, %v1283, 0.0
    %1294 = vadd.xlane.f32.xlu0 %v1293
    %v1295 = vpop.xlane.xlu0 %1294
    %v1296 = vmul.f32 %v1286, %v90
    %v1297 = vmul.f32 %v1289, %v90
    %v1298 = vmul.f32 %v1292, %v90
    %v1299 = vmul.f32 %v1295, %v90
    %v1304 = vlaneseq
    %v1305 = vshrl.u32 %v1304, 7
    %v1306 = vsub.s32 %v97, %v1305
    %v1307 = vrot.slane %v1296, %v1306
    %v1308 = vlaneseq
    %v1309 = vshrl.u32 %v1308, 7
    %v1310 = vsub.s32 %v683, %v1309
    %v1311 = vrot.slane %v1297, %v1310
    %v1312 = vsel %vm688, %v1311, %v1307
    %v1313 = vlaneseq
    %v1314 = vshrl.u32 %v1313, 7
    %v1315 = vsub.s32 %v97, %v1314
    %v1316 = vrot.slane %v1298, %v1315
    %v1317 = vlaneseq
    %v1318 = vshrl.u32 %v1317, 7
    %v1319 = vsub.s32 %v683, %v1318
    %v1320 = vrot.slane %v1299, %v1319
    %v1321 = vsel %vm688, %v1320, %v1316
    %v1322 = vsel %vm106, %v1321, %v1312
    %vm1324 = vcmask 123904
    %v1325 = vsel %vm1324, %v1322, 0.0
    %1326 = vadd.xlane.f32.xlu0 %v1325
    %v1327 = vpop.xlane.xlu0 %1326
    %v1328 = vmul.f32 %v1327, %v90
    %v1330 = vlaneseq
    %v1331 = vshrl.u32 %v1330, 7
    %v1332 = vsub.s32 0, %v1331
    %v1333 = vrot.slane %v1274, %v1332
    %v1335 = vsel %vm83, %v1322, 0
    %1337 = vmatprep.subr.mxu0 0.0
    %1338 = vmatpush1.msra.mxu0 %v1272
    %1339 = vmatprep.subr.mxu0 0.0
    %1340 = vmatpush1.msra.mxu0 %v1273
    %1341 = vmatprep.subr.mxu0 0.0
    %1342 = vmatpush1.msra.mxu0 0.0
    %1343 = vmatprep.subr.mxu0 0.0
    %1344 = vmatpush1.msra.mxu0 0.0
    %1345 = vmatprep.subr.mxu0 0.0
    %1346 = vmatpush1.msra.mxu0 0.0
    %1347 = vmatprep.subr.mxu0 0.0
    %1348 = vmatpush1.msra.mxu0 0.0
    %1349 = vmatprep.subr.mxu0 0.0
    %1350 = vmatpush1.msra.mxu0 0.0
    %1351 = vmatprep.subr.mxu0 0.0
    %1352 = vmatpush1.msra.mxu0 0.0
    %1353 = vmatprep.subr.mxu0 0.0
    %1354 = vmatpush1.msra.mxu0 0.0
    %1355 = vmatprep.subr.mxu0 0.0
    %1356 = vmatpush1.msra.mxu0 0.0
    %1357 = vmatprep.subr.mxu0 0.0
    %1358 = vmatpush1.msra.mxu0 0.0
    %1359 = vmatprep.subr.mxu0 0.0
    %1360 = vmatpush1.msra.mxu0 0.0
    %1361 = vmatprep.subr.mxu0 0.0
    %1362 = vmatpush1.msra.mxu0 0.0
    %1363 = vmatprep.subr.mxu0 0.0
    %1364 = vmatpush1.msra.mxu0 0.0
    %1365 = vmatprep.subr.mxu0 0.0
    %1366 = vmatpush1.msra.mxu0 0.0
    %1367 = vmatprep.subr.mxu0 0.0
    %1368 = vmatpush1.msra.mxu0 0.0
    %1369 = vmatprep.subr.mxu0 0.0
    %1370 = vmatpush1.msra.mxu0 0.0
    %1371 = vmatprep.subr.mxu0 0.0
    %1372 = vmatpush1.msra.mxu0 0.0
    %1373 = vmatprep.subr.mxu0 0.0
    %1374 = vmatpush1.msra.mxu0 0.0
    %1375 = vmatprep.subr.mxu0 0.0
    %1376 = vmatpush1.msra.mxu0 0.0
    %1377 = vmatprep.subr.mxu0 0.0
    %1378 = vmatpush1.msra.mxu0 0.0
    %1379 = vmatprep.subr.mxu0 0.0
    %1380 = vmatpush1.msra.mxu0 0.0
    %1381 = vmatprep.subr.mxu0 0.0
    %1382 = vmatpush1.msra.mxu0 0.0
    %1383 = vmatprep.subr.mxu0 0.0
    %1384 = vmatpush1.msra.mxu0 0.0
    %1385 = vmatprep.subr.mxu0 0.0
    %1386 = vmatpush1.msra.mxu0 0.0
    %1387 = vmatprep.subr.mxu0 0.0
    %1388 = vmatpush1.msra.mxu0 0.0
    %1389 = vmatprep.subr.mxu0 0.0
    %1390 = vmatpush1.msra.mxu0 0.0
    %1391 = vmatprep.subr.mxu0 0.0
    %1392 = vmatpush1.msra.mxu0 0.0
    %1393 = vmatprep.subr.mxu0 0.0
    %1394 = vmatpush1.msra.mxu0 0.0
    %1395 = vmatprep.subr.mxu0 0.0
    %1396 = vmatpush1.msra.mxu0 0.0
    %1397 = vmatprep.subr.mxu0 0.0
    %1398 = vmatpush1.msra.mxu0 0.0
    %1399 = vmatprep.subr.mxu0 0.0
    %1400 = vmatpush1.msra.mxu0 0.0
    %1401 = vmatprep.mubr.f32.mxu0 0.0
    %1402 = vmatmul.mubr.f32.gmra.mrb[0].mxu0 %v1335
    %v1403 = vpop.f32.mrb[0].mxu0
    %v1404 = vadd.f32 %v1333, %v1403
    %v1405 = vpop.f32.mrb[0].mxu0
    %1406 = vdwg.mxu0
    %v1407 = vsel %vm1324, %v1404, 0.0
    %v1408 = vrot.slane %v1407, 4
    %v1409 = vadd.f32 %v1407, %v1408
    %v1410 = vrot.slane %v1409, 2
    %v1411 = vadd.f32 %v1409, %v1410
    %v1412 = vrot.slane %v1411, 1
    %v1413 = vadd.f32 %v1411, %v1412
    %v1414 = vmul.f32 %v1413, %v586
    %v1415 = vsub.f32 %v1404, %v1414
    %v1416 = vmul.f32 %v1415, %v1415
    %v1417 = vsel %vm1324, %v1416, 0.0
    %v1418 = vrot.slane %v1417, 4
    %v1419 = vadd.f32 %v1417, %v1418
    %v1420 = vrot.slane %v1419, 2
    %v1421 = vadd.f32 %v1419, %v1420
    %v1422 = vrot.slane %v1421, 1
    %v1423 = vadd.f32 %v1421, %v1422
    %v1424 = vmul.f32 %v1423, %v586
    %v1425 = vadd.f32 %v1424, 1e-05
    %v1426 = vrsqrt.pop %v1425
    %v1427 = vmul.f32 %v1415, %v1426
    %v1429 = vlaneseq
    %v1430 = vshrl.u32 %v1429, 7
    %v1431 = vsub.s32 0, %v1430
    %v1432 = vrot.slane %v1275, %v1431
    %v1434 = vmul.f32 %v1427, %v1432
    %v1436 = vlaneseq
    %v1437 = vshrl.u32 %v1436, 7
    %v1438 = vsub.s32 0, %v1437
    %v1439 = vrot.slane %v1276, %v1438
    %v1441 = vadd.f32 %v1434, %v1439
    %v1442 = vmax.f32 %v1441, 0.0
    %v1444 = vlaneseq
    %v1445 = vshrl.u32 %v1444, 7
    %v1446 = vsub.s32 0, %v1445
    %v1447 = vrot.slane %v1279, %v1446
    %v1450 = vsel %vm83, %v1442, 0
    %1452 = vmatprep.subr.mxu0 0.0
    %1453 = vmatpush1.msra.mxu0 %v1277
    %1454 = vmatprep.subr.mxu0 0.0
    %1455 = vmatpush1.msra.mxu0 %v1278
    %1456 = vmatprep.subr.mxu0 0.0
    %1457 = vmatpush1.msra.mxu0 0.0
    %1458 = vmatprep.subr.mxu0 0.0
    %1459 = vmatpush1.msra.mxu0 0.0
    %1460 = vmatprep.subr.mxu0 0.0
    %1461 = vmatpush1.msra.mxu0 0.0
    %1462 = vmatprep.subr.mxu0 0.0
    %1463 = vmatpush1.msra.mxu0 0.0
    %1464 = vmatprep.subr.mxu0 0.0
    %1465 = vmatpush1.msra.mxu0 0.0
    %1466 = vmatprep.subr.mxu0 0.0
    %1467 = vmatpush1.msra.mxu0 0.0
    %1468 = vmatprep.subr.mxu0 0.0
    %1469 = vmatpush1.msra.mxu0 0.0
    %1470 = vmatprep.subr.mxu0 0.0
    %1471 = vmatpush1.msra.mxu0 0.0
    %1472 = vmatprep.subr.mxu0 0.0
    %1473 = vmatpush1.msra.mxu0 0.0
    %1474 = vmatprep.subr.mxu0 0.0
    %1475 = vmatpush1.msra.mxu0 0.0
    %1476 = vmatprep.subr.mxu0 0.0
    %1477 = vmatpush1.msra.mxu0 0.0
    %1478 = vmatprep.subr.mxu0 0.0
    %1479 = vmatpush1.msra.mxu0 0.0
    %1480 = vmatprep.subr.mxu0 0.0
    %1481 = vmatpush1.msra.mxu0 0.0
    %1482 = vmatprep.subr.mxu0 0.0
    %1483 = vmatpush1.msra.mxu0 0.0
    %1484 = vmatprep.subr.mxu0 0.0
    %1485 = vmatpush1.msra.mxu0 0.0
    %1486 = vmatprep.subr.mxu0 0.0
    %1487 = vmatpush1.msra.mxu0 0.0
    %1488 = vmatprep.subr.mxu0 0.0
    %1489 = vmatpush1.msra.mxu0 0.0
    %1490 = vmatprep.subr.mxu0 0.0
    %1491 = vmatpush1.msra.mxu0 0.0
    %1492 = vmatprep.subr.mxu0 0.0
    %1493 = vmatpush1.msra.mxu0 0.0
    %1494 = vmatprep.subr.mxu0 0.0
    %1495 = vmatpush1.msra.mxu0 0.0
    %1496 = vmatprep.subr.mxu0 0.0
    %1497 = vmatpush1.msra.mxu0 0.0
    %1498 = vmatprep.subr.mxu0 0.0
    %1499 = vmatpush1.msra.mxu0 0.0
    %1500 = vmatprep.subr.mxu0 0.0
    %1501 = vmatpush1.msra.mxu0 0.0
    %1502 = vmatprep.subr.mxu0 0.0
    %1503 = vmatpush1.msra.mxu0 0.0
    %1504 = vmatprep.subr.mxu0 0.0
    %1505 = vmatpush1.msra.mxu0 0.0
    %1506 = vmatprep.subr.mxu0 0.0
    %1507 = vmatpush1.msra.mxu0 0.0
    %1508 = vmatprep.subr.mxu0 0.0
    %1509 = vmatpush1.msra.mxu0 0.0
    %1510 = vmatprep.subr.mxu0 0.0
    %1511 = vmatpush1.msra.mxu0 0.0
    %1512 = vmatprep.subr.mxu0 0.0
    %1513 = vmatpush1.msra.mxu0 0.0
    %1514 = vmatprep.subr.mxu0 0.0
    %1515 = vmatpush1.msra.mxu0 0.0
    %1516 = vmatprep.mubr.f32.mxu0 0.0
    %1517 = vmatmul.mubr.f32.gmra.mrb[0].mxu0 %v1450
    %v1518 = vpop.f32.mrb[0].mxu0
    %v1519 = vadd.f32 %v1447, %v1518
    %v1520 = vpop.f32.mrb[0].mxu0
    %1521 = vdwg.mxu0
    %v1522 = vsub.f32 0.0, %v1519
    %v1523 = vmul.f32 %v1522, 1.442695
    %v1524 = vpow.pop %v1523
    %v1525 = vadd.f32 %v1524, 1.0
    %v1526 = vrcp.pop %v1525
    %v1527 = vmul.f32 %v1328, %v1526
    %v1528 = vlaneseq
    %v1529 = vshrl.u32 %v1528, 7
    %v1530 = vsub.s32 0, %v1529
    %v1531 = vrot.slane %v1527, %v1530
    %1533 = vbcast.lane.b32.xlu0 %v1531, 256
    %v1534 = vpop.permute.xlu0 %1533
    %s1536 = sor.u32 256, 8
    %1537 = vbcast.lane.b32.xlu0 %v1531, %s1536
    %v1538 = vpop.permute.xlu0 %1537
    %v1539 = vlaneseq
    %v1540 = vshrl.u32 %v1539, 7
    %v1541 = vsub.s32 1, %v1540
    %v1542 = vrot.slane %v1527, %v1541
    %1544 = vbcast.lane.b32.xlu0 %v1542, 256
    %v1545 = vpop.permute.xlu0 %1544
    %s1547 = sor.u32 256, 8
    %1548 = vbcast.lane.b32.xlu0 %v1542, %s1547
    %v1549 = vpop.permute.xlu0 %1548
    %v1550 = vsub.f32 %v1280, %v1534
    %v1551 = vsub.f32 %v1281, %v1538
    %v1552 = vsub.f32 %v1282, %v1545
    %v1553 = vsub.f32 %v1283, %v1549
    %v1554 = vmax.f32 %v1550, 0.0
    %v1555 = vmax.f32 %v1551, 0.0
    %v1556 = vmax.f32 %v1552, 0.0
    %v1557 = vmax.f32 %v1553, 0.0
    %vm1558 = vcmp.gt.f32.partialorder %v1268, 0.0
    %vm1559 = vcmp.gt.f32.partialorder %v1269, 0.0
    %vm1560 = vcmp.gt.f32.partialorder %v1270, 0.0
    %vm1561 = vcmp.gt.f32.partialorder %v1271, 0.0
    %vm1562 = vcmp.lt.f32.partialorder %v1268, 0.0
    %vm1563 = vcmp.lt.f32.partialorder %v1269, 0.0
    %vm1564 = vcmp.lt.f32.partialorder %v1270, 0.0
    %vm1565 = vcmp.lt.f32.partialorder %v1271, 0.0
    %v1566 = vsel %vm1562, -1.0, 0.0
    %v1567 = vsel %vm1563, -1.0, 0.0
    %v1568 = vsel %vm1564, -1.0, 0.0
    %v1569 = vsel %vm1565, -1.0, 0.0
    %v1570 = vsel %vm1558, 1.0, %v1566
    %v1571 = vsel %vm1559, 1.0, %v1567
    %v1572 = vsel %vm1560, 1.0, %v1568
    %v1573 = vsel %vm1561, 1.0, %v1569
    %v1574 = vmul.f32 %v1570, %v1554
    %v1575 = vmul.f32 %v1571, %v1555
    %v1576 = vmul.f32 %v1572, %v1556
    %v1577 = vmul.f32 %v1573, %v1557
    %v1578 = vld [vmem:[%s10] sm:$0xff]
    %1579 = vmatprep.subr.mxu0 0.0
    %1580 = vmatpush1.msra.mxu0 %v1578
    %1581 = vmatprep.subr.mxu0 0.0
    %1582 = vmatpush1.msra.mxu0 0.0
    %1583 = vmatprep.subr.mxu0 0.0
    %1584 = vmatpush1.msra.mxu0 0.0
    %1585 = vmatprep.subr.mxu0 0.0
    %1586 = vmatpush1.msra.mxu0 0.0
    %1587 = vmatprep.subr.mxu0 0.0
    %1588 = vmatpush1.msra.mxu0 0.0
    %1589 = vmatprep.subr.mxu0 0.0
    %1590 = vmatpush1.msra.mxu0 0.0
    %1591 = vmatprep.subr.mxu0 0.0
    %1592 = vmatpush1.msra.mxu0 0.0
    %1593 = vmatprep.subr.mxu0 0.0
    %1594 = vmatpush1.msra.mxu0 0.0
    %1595 = vmatprep.subr.mxu0 0.0
    %1596 = vmatpush1.msra.mxu0 0.0
    %1597 = vmatprep.subr.mxu0 0.0
    %1598 = vmatpush1.msra.mxu0 0.0
    %1599 = vmatprep.subr.mxu0 0.0
    %1600 = vmatpush1.msra.mxu0 0.0
    %1601 = vmatprep.subr.mxu0 0.0
    %1602 = vmatpush1.msra.mxu0 0.0
    %1603 = vmatprep.subr.mxu0 0.0
    %1604 = vmatpush1.msra.mxu0 0.0
    %1605 = vmatprep.subr.mxu0 0.0
    %1606 = vmatpush1.msra.mxu0 0.0
    %1607 = vmatprep.subr.mxu0 0.0
    %1608 = vmatpush1.msra.mxu0 0.0
    %1609 = vmatprep.subr.mxu0 0.0
    %1610 = vmatpush1.msra.mxu0 0.0
    %1611 = vmatprep.subr.mxu0 0.0
    %1612 = vmatpush1.msra.mxu0 0.0
    %1613 = vmatprep.subr.mxu0 0.0
    %1614 = vmatpush1.msra.mxu0 0.0
    %1615 = vmatprep.subr.mxu0 0.0
    %1616 = vmatpush1.msra.mxu0 0.0
    %1617 = vmatprep.subr.mxu0 0.0
    %1618 = vmatpush1.msra.mxu0 0.0
    %1619 = vmatprep.subr.mxu0 0.0
    %1620 = vmatpush1.msra.mxu0 0.0
    %1621 = vmatprep.subr.mxu0 0.0
    %1622 = vmatpush1.msra.mxu0 0.0
    %1623 = vmatprep.subr.mxu0 0.0
    %1624 = vmatpush1.msra.mxu0 0.0
    %1625 = vmatprep.subr.mxu0 0.0
    %1626 = vmatpush1.msra.mxu0 0.0
    %1627 = vmatprep.subr.mxu0 0.0
    %1628 = vmatpush1.msra.mxu0 0.0
    %1629 = vmatprep.subr.mxu0 0.0
    %1630 = vmatpush1.msra.mxu0 0.0
    %1631 = vmatprep.subr.mxu0 0.0
    %1632 = vmatpush1.msra.mxu0 0.0
    %1633 = vmatprep.subr.mxu0 0.0
    %1634 = vmatpush1.msra.mxu0 0.0
    %1635 = vmatprep.subr.mxu0 0.0
    %1636 = vmatpush1.msra.mxu0 0.0
    %1637 = vmatprep.subr.mxu0 0.0
    %1638 = vmatpush1.msra.mxu0 0.0
    %1639 = vmatprep.subr.mxu0 0.0
    %1640 = vmatpush1.msra.mxu0 0.0
    %1641 = vmatprep.subr.mxu0 0.0
    %1642 = vmatpush1.msra.mxu0 0.0
    %1643 = vmatprep.mubr.f32.mxu0 0.0
    %1644 = vmatmul.mubr.f32.gmra.mrb[0].mxu0 %v109
    %v1645 = vpop.f32.mrb[0].mxu0
    %v1646 = vadd.f32 0.0, %v1645
    %v1647 = vpop.f32.mrb[0].mxu0
    %1648 = vdwg.mxu0
    %v1649 = vmax.f32 %v1646, 0.0
    %v1650 = vld [vmem:[%s11] sm:$0x7]
    %v1651 = vld [vmem:[%s12] sm:$0x1]
    %v1653 = vlaneseq
    %v1654 = vshrl.u32 %v1653, 7
    %v1655 = vsub.s32 0, %v1654
    %v1656 = vrot.slane %v1651, %v1655
    %v1659 = vsel %vm190, %v1649, 0
    %v1662 = vsel %vm194, %v1650, 0
    %1664 = vmatprep.subr.mxu0 0.0
    %1665 = vmatpush1.msra.mxu0 %v1662
    %1666 = vmatprep.subr.mxu0 0.0
    %1667 = vmatpush1.msra.mxu0 0.0
    %1668 = vmatprep.subr.mxu0 0.0
    %1669 = vmatpush1.msra.mxu0 0.0
    %1670 = vmatprep.subr.mxu0 0.0
    %1671 = vmatpush1.msra.mxu0 0.0
    %1672 = vmatprep.subr.mxu0 0.0
    %1673 = vmatpush1.msra.mxu0 0.0
    %1674 = vmatprep.subr.mxu0 0.0
    %1675 = vmatpush1.msra.mxu0 0.0
    %1676 = vmatprep.subr.mxu0 0.0
    %1677 = vmatpush1.msra.mxu0 0.0
    %1678 = vmatprep.subr.mxu0 0.0
    %1679 = vmatpush1.msra.mxu0 0.0
    %1680 = vmatprep.subr.mxu0 0.0
    %1681 = vmatpush1.msra.mxu0 0.0
    %1682 = vmatprep.subr.mxu0 0.0
    %1683 = vmatpush1.msra.mxu0 0.0
    %1684 = vmatprep.subr.mxu0 0.0
    %1685 = vmatpush1.msra.mxu0 0.0
    %1686 = vmatprep.subr.mxu0 0.0
    %1687 = vmatpush1.msra.mxu0 0.0
    %1688 = vmatprep.subr.mxu0 0.0
    %1689 = vmatpush1.msra.mxu0 0.0
    %1690 = vmatprep.subr.mxu0 0.0
    %1691 = vmatpush1.msra.mxu0 0.0
    %1692 = vmatprep.subr.mxu0 0.0
    %1693 = vmatpush1.msra.mxu0 0.0
    %1694 = vmatprep.subr.mxu0 0.0
    %1695 = vmatpush1.msra.mxu0 0.0
    %1696 = vmatprep.subr.mxu0 0.0
    %1697 = vmatpush1.msra.mxu0 0.0
    %1698 = vmatprep.subr.mxu0 0.0
    %1699 = vmatpush1.msra.mxu0 0.0
    %1700 = vmatprep.subr.mxu0 0.0
    %1701 = vmatpush1.msra.mxu0 0.0
    %1702 = vmatprep.subr.mxu0 0.0
    %1703 = vmatpush1.msra.mxu0 0.0
    %1704 = vmatprep.subr.mxu0 0.0
    %1705 = vmatpush1.msra.mxu0 0.0
    %1706 = vmatprep.subr.mxu0 0.0
    %1707 = vmatpush1.msra.mxu0 0.0
    %1708 = vmatprep.subr.mxu0 0.0
    %1709 = vmatpush1.msra.mxu0 0.0
    %1710 = vmatprep.subr.mxu0 0.0
    %1711 = vmatpush1.msra.mxu0 0.0
    %1712 = vmatprep.subr.mxu0 0.0
    %1713 = vmatpush1.msra.mxu0 0.0
    %1714 = vmatprep.subr.mxu0 0.0
    %1715 = vmatpush1.msra.mxu0 0.0
    %1716 = vmatprep.subr.mxu0 0.0
    %1717 = vmatpush1.msra.mxu0 0.0
    %1718 = vmatprep.subr.mxu0 0.0
    %1719 = vmatpush1.msra.mxu0 0.0
    %1720 = vmatprep.subr.mxu0 0.0
    %1721 = vmatpush1.msra.mxu0 0.0
    %1722 = vmatprep.subr.mxu0 0.0
    %1723 = vmatpush1.msra.mxu0 0.0
    %1724 = vmatprep.subr.mxu0 0.0
    %1725 = vmatpush1.msra.mxu0 0.0
    %1726 = vmatprep.subr.mxu0 0.0
    %1727 = vmatpush1.msra.mxu0 0.0
    %1728 = vmatprep.mubr.f32.mxu0 0.0
    %1729 = vmatmul.mubr.f32.gmra.mrb[0].mxu0 %v1659
    %v1730 = vpop.f32.mrb[0].mxu0
    %v1731 = vadd.f32 %v1656, %v1730
    %v1732 = vpop.f32.mrb[0].mxu0
    %1733 = vdwg.mxu0
    %v1734 = vmul.f32 %v1731, 0.029411765
    %v1735 = vsel %vm269, %v1734, -inf
    %1736 = vmax.xlane.f32.xlu0 %v1735
    %v1737 = vpop.xlane.xlu0 %1736
    %v1738 = vsub.f32 %v1734, %v1737
    %v1739 = vmul.f32 %v1738, 1.442695
    %v1740 = vpow.pop %v1739
    %v1741 = vsel %vm269, %v1740, 0.0
    %1742 = vadd.xlane.f32.xlu0 %v1741
    %v1743 = vpop.xlane.xlu0 %1742
    %v1744 = vrcp.pop %v1743
    %v1745 = vmul.f32 %v1740, %v1744
    %s1746 = vtos %v1745
    %v1747 = vld [vmem:[%s9] sm:$0xff]
    %v1748 = vld [vmem:[%s9 + $0x8] sm:$0xff]
    %v1749 = vstv %s1746
    %v1750 = vmul.f32 %v1749, %v1747
    %v1751 = vmul.f32 %v1749, %v1748
    %1752 = vrot.lane.b32.xlu0 %v1745, 127
    %v1753 = vpop.permute.xlu0 %1752
    %s1754 = vtos %v1753
    %s1755 = scalar_lea.vmem %s9, 16
    %v1756 = vld [vmem:[%s1755] sm:$0xff]
    %v1757 = vld [vmem:[%s1755 + $0x8] sm:$0xff]
    %v1758 = vstv %s1754
    %v1759 = vmul.f32 %v1758, %v1756
    %v1760 = vmul.f32 %v1758, %v1757
    %v1761 = vadd.f32 %v1750, %v1759
    %v1762 = vadd.f32 %v1751, %v1760
    %1763 = vrot.lane.b32.xlu0 %v1745, 126
    %v1764 = vpop.permute.xlu0 %1763
    %s1765 = vtos %v1764
    %s1766 = scalar_lea.vmem %s9, 32
    %v1767 = vld [vmem:[%s1766] sm:$0xff]
    %v1768 = vld [vmem:[%s1766 + $0x8] sm:$0xff]
    %v1769 = vstv %s1765
    %v1770 = vmul.f32 %v1769, %v1767
    %v1771 = vmul.f32 %v1769, %v1768
    %v1772 = vadd.f32 %v1761, %v1770
    %v1773 = vadd.f32 %v1762, %v1771
    %1774 = vrot.lane.b32.xlu0 %v1745, 125
    %v1775 = vpop.permute.xlu0 %1774
    %s1776 = vtos %v1775
    %s1777 = scalar_lea.vmem %s9, 48
    %v1778 = vld [vmem:[%s1777] sm:$0xff]
    %v1779 = vld [vmem:[%s1777 + $0x8] sm:$0xff]
    %v1780 = vstv %s1776
    %v1781 = vmul.f32 %v1780, %v1778
    %v1782 = vmul.f32 %v1780, %v1779
    %v1783 = vadd.f32 %v1772, %v1781
    %v1784 = vadd.f32 %v1773, %v1782
    %v1786 = vsel %vm108, %v1783, 0
    %v1789 = vsel %vm108, %v1784, 0
    %1791 = vmatprep.subr.mxu0 0.0
    %1792 = vmatpush1.msra.mxu0 %v81
    %1793 = vmatprep.subr.mxu0 0.0
    %1794 = vmatpush1.msra.mxu0 0.0
    %1795 = vmatprep.subr.mxu0 0.0
    %1796 = vmatpush1.msra.mxu0 0.0
    %1797 = vmatprep.subr.mxu0 0.0
    %1798 = vmatpush1.msra.mxu0 0.0
    %1799 = vmatprep.subr.mxu0 0.0
    %1800 = vmatpush1.msra.mxu0 0.0
    %1801 = vmatprep.subr.mxu0 0.0
    %1802 = vmatpush1.msra.mxu0 0.0
    %1803 = vmatprep.subr.mxu0 0.0
    %1804 = vmatpush1.msra.mxu0 0.0
    %1805 = vmatprep.subr.mxu0 0.0
    %1806 = vmatpush1.msra.mxu0 0.0
    %1807 = vmatprep.subr.mxu0 0.0
    %1808 = vmatpush1.msra.mxu0 0.0
    %1809 = vmatprep.subr.mxu0 0.0
    %1810 = vmatpush1.msra.mxu0 0.0
    %1811 = vmatprep.subr.mxu0 0.0
    %1812 = vmatpush1.msra.mxu0 0.0
    %1813 = vmatprep.subr.mxu0 0.0
    %1814 = vmatpush1.msra.mxu0 0.0
    %1815 = vmatprep.subr.mxu0 0.0
    %1816 = vmatpush1.msra.mxu0 0.0
    %1817 = vmatprep.subr.mxu0 0.0
    %1818 = vmatpush1.msra.mxu0 0.0
    %1819 = vmatprep.subr.mxu0 0.0
    %1820 = vmatpush1.msra.mxu0 0.0
    %1821 = vmatprep.subr.mxu0 0.0
    %1822 = vmatpush1.msra.mxu0 0.0
    %1823 = vmatprep.subr.mxu0 0.0
    %1824 = vmatpush1.msra.mxu0 0.0
    %1825 = vmatprep.subr.mxu0 0.0
    %1826 = vmatpush1.msra.mxu0 0.0
    %1827 = vmatprep.subr.mxu0 0.0
    %1828 = vmatpush1.msra.mxu0 0.0
    %1829 = vmatprep.subr.mxu0 0.0
    %1830 = vmatpush1.msra.mxu0 0.0
    %1831 = vmatprep.subr.mxu0 0.0
    %1832 = vmatpush1.msra.mxu0 0.0
    %1833 = vmatprep.subr.mxu0 0.0
    %1834 = vmatpush1.msra.mxu0 0.0
    %1835 = vmatprep.subr.mxu0 0.0
    %1836 = vmatpush1.msra.mxu0 0.0
    %1837 = vmatprep.subr.mxu0 0.0
    %1838 = vmatpush1.msra.mxu0 0.0
    %1839 = vmatprep.subr.mxu0 0.0
    %1840 = vmatpush1.msra.mxu0 0.0
    %1841 = vmatprep.subr.mxu0 0.0
    %1842 = vmatpush1.msra.mxu0 0.0
    %1843 = vmatprep.subr.mxu0 0.0
    %1844 = vmatpush1.msra.mxu0 0.0
    %1845 = vmatprep.subr.mxu0 0.0
    %1846 = vmatpush1.msra.mxu0 0.0
    %1847 = vmatprep.subr.mxu0 0.0
    %1848 = vmatpush1.msra.mxu0 0.0
    %1849 = vmatprep.subr.mxu0 0.0
    %1850 = vmatpush1.msra.mxu0 0.0
    %1851 = vmatprep.subr.mxu0 0.0
    %1852 = vmatpush1.msra.mxu0 0.0
    %1853 = vmatprep.subr.mxu0 0.0
    %1854 = vmatpush1.msra.mxu0 0.0
    %1855 = vmatprep.mubr.f32.mxu0 0.0
    %1856 = vmatmul.mubr.f32.gmra.mrb[0].mxu0 %v1786
    %v1857 = vpop.f32.mrb[0].mxu0
    %v1858 = vadd.f32 0.0, %v1857
    %v1859 = vpop.f32.mrb[0].mxu0
    %1860 = vmatprep.mubr.f32.mxu0 0.0
    %1861 = vmatmul.mubr.f32.gmra.mrb[0].mxu0 %v1789
    %v1862 = vpop.f32.mrb[0].mxu0
    %v1863 = vadd.f32 0.0, %v1862
    %v1864 = vpop.f32.mrb[0].mxu0
    %1865 = vdwg.mxu0
    %1866 = vst.msk [vmem:[#allocation6] sm:$0xff] %vm83, %v1858
    %1867 = vst.msk [vmem:[#allocation6 + $0x8] sm:$0xff] %vm83, %v1863
    %v1868 = vrot.slane %v1745, 1
    %s1869 = vtos %v1868
    %v1870 = vld [vmem:[%s9] sm:$0xff]
    %v1871 = vld [vmem:[%s9 + $0x8] sm:$0xff]
    %v1872 = vstv %s1869
    %v1873 = vmul.f32 %v1872, %v1870
    %v1874 = vmul.f32 %v1872, %v1871
    %1875 = vrot.lane.b32.xlu0 %v1868, 127
    %v1876 = vpop.permute.xlu0 %1875
    %s1877 = vtos %v1876
    %v1878 = vld [vmem:[%s1755] sm:$0xff]
    %v1879 = vld [vmem:[%s1755 + $0x8] sm:$0xff]
    %v1880 = vstv %s1877
    %v1881 = vmul.f32 %v1880, %v1878
    %v1882 = vmul.f32 %v1880, %v1879
    %v1883 = vadd.f32 %v1873, %v1881
    %v1884 = vadd.f32 %v1874, %v1882
    %1885 = vrot.lane.b32.xlu0 %v1868, 126
    %v1886 = vpop.permute.xlu0 %1885
    %s1887 = vtos %v1886
    %v1888 = vld [vmem:[%s1766] sm:$0xff]
    %v1889 = vld [vmem:[%s1766 + $0x8] sm:$0xff]
    %v1890 = vstv %s1887
    %v1891 = vmul.f32 %v1890, %v1888
    %v1892 = vmul.f32 %v1890, %v1889
    %v1893 = vadd.f32 %v1883, %v1891
    %v1894 = vadd.f32 %v1884, %v1892
    %1895 = vrot.lane.b32.xlu0 %v1868, 125
    %v1896 = vpop.permute.xlu0 %1895
    %s1897 = vtos %v1896
    %v1898 = vld [vmem:[%s1777] sm:$0xff]
    %v1899 = vld [vmem:[%s1777 + $0x8] sm:$0xff]
    %v1900 = vstv %s1897
    %v1901 = vmul.f32 %v1900, %v1898
    %v1902 = vmul.f32 %v1900, %v1899
    %v1903 = vadd.f32 %v1893, %v1901
    %v1904 = vadd.f32 %v1894, %v1902
    %v1906 = vsel %vm108, %v1903, 0
    %v1909 = vsel %vm108, %v1904, 0
    %1911 = vmatprep.subr.mxu0 0.0
    %1912 = vmatpush1.msra.mxu0 %v82
    %1913 = vmatprep.subr.mxu0 0.0
    %1914 = vmatpush1.msra.mxu0 0.0
    %1915 = vmatprep.subr.mxu0 0.0
    %1916 = vmatpush1.msra.mxu0 0.0
    %1917 = vmatprep.subr.mxu0 0.0
    %1918 = vmatpush1.msra.mxu0 0.0
    %1919 = vmatprep.subr.mxu0 0.0
    %1920 = vmatpush1.msra.mxu0 0.0
    %1921 = vmatprep.subr.mxu0 0.0
    %1922 = vmatpush1.msra.mxu0 0.0
    %1923 = vmatprep.subr.mxu0 0.0
    %1924 = vmatpush1.msra.mxu0 0.0
    %1925 = vmatprep.subr.mxu0 0.0
    %1926 = vmatpush1.msra.mxu0 0.0
    %1927 = vmatprep.subr.mxu0 0.0
    %1928 = vmatpush1.msra.mxu0 0.0
    %1929 = vmatprep.subr.mxu0 0.0
    %1930 = vmatpush1.msra.mxu0 0.0
    %1931 = vmatprep.subr.mxu0 0.0
    %1932 = vmatpush1.msra.mxu0 0.0
    %1933 = vmatprep.subr.mxu0 0.0
    %1934 = vmatpush1.msra.mxu0 0.0
    %1935 = vmatprep.subr.mxu0 0.0
    %1936 = vmatpush1.msra.mxu0 0.0
    %1937 = vmatprep.subr.mxu0 0.0
    %1938 = vmatpush1.msra.mxu0 0.0
    %1939 = vmatprep.subr.mxu0 0.0
    %1940 = vmatpush1.msra.mxu0 0.0
    %1941 = vmatprep.subr.mxu0 0.0
    %1942 = vmatpush1.msra.mxu0 0.0
    %1943 = vmatprep.subr.mxu0 0.0
    %1944 = vmatpush1.msra.mxu0 0.0
    %1945 = vmatprep.subr.mxu0 0.0
    %1946 = vmatpush1.msra.mxu0 0.0
    %1947 = vmatprep.subr.mxu0 0.0
    %1948 = vmatpush1.msra.mxu0 0.0
    %1949 = vmatprep.subr.mxu0 0.0
    %1950 = vmatpush1.msra.mxu0 0.0
    %1951 = vmatprep.subr.mxu0 0.0
    %1952 = vmatpush1.msra.mxu0 0.0
    %1953 = vmatprep.subr.mxu0 0.0
    %1954 = vmatpush1.msra.mxu0 0.0
    %1955 = vmatprep.subr.mxu0 0.0
    %1956 = vmatpush1.msra.mxu0 0.0
    %1957 = vmatprep.subr.mxu0 0.0
    %1958 = vmatpush1.msra.mxu0 0.0
    %1959 = vmatprep.subr.mxu0 0.0
    %1960 = vmatpush1.msra.mxu0 0.0
    %1961 = vmatprep.subr.mxu0 0.0
    %1962 = vmatpush1.msra.mxu0 0.0
    %1963 = vmatprep.subr.mxu0 0.0
    %1964 = vmatpush1.msra.mxu0 0.0
    %1965 = vmatprep.subr.mxu0 0.0
    %1966 = vmatpush1.msra.mxu0 0.0
    %1967 = vmatprep.subr.mxu0 0.0
    %1968 = vmatpush1.msra.mxu0 0.0
    %1969 = vmatprep.subr.mxu0 0.0
    %1970 = vmatpush1.msra.mxu0 0.0
    %1971 = vmatprep.subr.mxu0 0.0
    %1972 = vmatpush1.msra.mxu0 0.0
    %1973 = vmatprep.subr.mxu0 0.0
    %1974 = vmatpush1.msra.mxu0 0.0
    %1975 = vmatprep.mubr.f32.mxu0 0.0
    %1976 = vmatmul.mubr.f32.gmra.mrb[0].mxu0 %v1906
    %v1977 = vpop.f32.mrb[0].mxu0
    %v1978 = vadd.f32 0.0, %v1977
    %v1979 = vpop.f32.mrb[0].mxu0
    %1980 = vmatprep.mubr.f32.mxu0 0.0
    %1981 = vmatmul.mubr.f32.gmra.mrb[0].mxu0 %v1909
    %v1982 = vpop.f32.mrb[0].mxu0
    %v1983 = vadd.f32 0.0, %v1982
    %v1984 = vpop.f32.mrb[0].mxu0
    %1985 = vdwg.mxu0
    %s1986 = scalar_lea.vmem [#allocation6], 16
    %1987 = vst.msk [vmem:[%s1986] sm:$0xff] %vm83, %v1978
    %1988 = vst.msk [vmem:[%s1986 + $0x8] sm:$0xff] %vm83, %v1983
    %v1989 = vld [vmem:[#allocation6] sm:$0xff]
    %v1990 = vld [vmem:[#allocation6 + $0x8] sm:$0xff]
    %v1991 = vld [vmem:[#allocation6 + $0x10] sm:$0xff]
    %v1992 = vld [vmem:[#allocation6 + $0x18] sm:$0xff]
    %v1993 = vld [vmem:[%s17] sm:$0xff]
    %v1994 = vld [vmem:[%s17 + $0x8] sm:$0xff]
    %v1995 = vld [vmem:[%s18] sm:$0xff]
    %v1996 = vld [vmem:[%s18 + $0x8] sm:$0xff]
    %v1997 = vsel %vm83, %v1989, 0.0
    %1998 = vadd.xlane.f32.xlu0 %v1997
    %v1999 = vpop.xlane.xlu0 %1998
    %v2000 = vsel %vm83, %v1990, 0.0
    %2001 = vadd.xlane.f32.xlu0 %v2000
    %v2002 = vpop.xlane.xlu0 %2001
    %v2003 = vsel %vm83, %v1991, 0.0
    %2004 = vadd.xlane.f32.xlu0 %v2003
    %v2005 = vpop.xlane.xlu0 %2004
    %v2006 = vsel %vm83, %v1992, 0.0
    %2007 = vadd.xlane.f32.xlu0 %v2006
    %v2008 = vpop.xlane.xlu0 %2007
    %v2009 = vmul.f32 %v1999, %v90
    %v2010 = vmul.f32 %v2002, %v90
    %v2011 = vmul.f32 %v2005, %v90
    %v2012 = vmul.f32 %v2008, %v90
    %v2013 = vadd.f32 %v2009, %v2011
    %v2014 = vadd.f32 %v2010, %v2012
    %v2015 = vmul.f32 %v2013, %v586
    %v2016 = vmul.f32 %v2014, %v586
    %v2017 = vsub.f32 %v1989, %v2015
    %v2018 = vsub.f32 %v1990, %v2016
    %v2019 = vsub.f32 %v1991, %v2015
    %v2020 = vsub.f32 %v1992, %v2016
    %v2021 = vmul.f32 %v2017, %v2017
    %v2022 = vmul.f32 %v2018, %v2018
    %v2023 = vmul.f32 %v2019, %v2019
    %v2024 = vmul.f32 %v2020, %v2020
    %v2025 = vsel %vm83, %v2021, 0.0
    %2026 = vadd.xlane.f32.xlu0 %v2025
    %v2027 = vpop.xlane.xlu0 %2026
    %v2028 = vsel %vm83, %v2022, 0.0
    %2029 = vadd.xlane.f32.xlu0 %v2028
    %v2030 = vpop.xlane.xlu0 %2029
    %v2031 = vsel %vm83, %v2023, 0.0
    %2032 = vadd.xlane.f32.xlu0 %v2031
    %v2033 = vpop.xlane.xlu0 %2032
    %v2034 = vsel %vm83, %v2024, 0.0
    %2035 = vadd.xlane.f32.xlu0 %v2034
    %v2036 = vpop.xlane.xlu0 %2035
    %v2037 = vmul.f32 %v2027, %v90
    %v2038 = vmul.f32 %v2030, %v90
    %v2039 = vmul.f32 %v2033, %v90
    %v2040 = vmul.f32 %v2036, %v90
    %v2041 = vadd.f32 %v2037, %v2039
    %v2042 = vadd.f32 %v2038, %v2040
    %v2043 = vmul.f32 %v2041, %v586
    %v2044 = vmul.f32 %v2042, %v586
    %v2045 = vadd.f32 %v2043, 1e-05
    %v2046 = vadd.f32 %v2044, 1e-05
    %v2047 = vrsqrt.pop %v2045
    %v2048 = vrsqrt.pop %v2046
    %v2049 = vmul.f32 %v2017, %v2047
    %v2050 = vmul.f32 %v2018, %v2048
    %v2051 = vmul.f32 %v2019, %v2047
    %v2052 = vmul.f32 %v2020, %v2048
    %2054 = vset.pattern.permute.xlu0 0
    %2055 = vperm.xlu0 %2054, %v1993
    %v2056 = vpop.permute.xlu0 %2055
    %2059 = vset.pattern.permute.xlu0 0
    %2060 = vperm.xlu0 %2059, %v1994
    %v2061 = vpop.permute.xlu0 %2060
    %v2063 = vmul.f32 %v2049, %v2056
    %v2064 = vmul.f32 %v2050, %v2061
    %v2065 = vmul.f32 %v2051, %v2056
    %v2066 = vmul.f32 %v2052, %v2061
    %2068 = vset.pattern.permute.xlu0 0
    %2069 = vperm.xlu0 %2068, %v1995
    %v2070 = vpop.permute.xlu0 %2069
    %2073 = vset.pattern.permute.xlu0 0
    %2074 = vperm.xlu0 %2073, %v1996
    %v2075 = vpop.permute.xlu0 %2074
    %v2077 = vadd.f32 %v2063, %v2070
    %v2078 = vadd.f32 %v2064, %v2075
    %v2079 = vadd.f32 %v2065, %v2070
    %v2080 = vadd.f32 %v2066, %v2075
    %v2081 = vadd.f32 %v1574, %v2077
    %v2082 = vadd.f32 %v1575, %v2078
    %v2083 = vadd.f32 %v1576, %v2079
    %v2084 = vadd.f32 %v1577, %v2080
    %v2085 = vmax.f32 %v2081, 0.0
    %v2086 = vmax.f32 %v2082, 0.0
    %v2087 = vmax.f32 %v2083, 0.0
    %v2088 = vmax.f32 %v2084, 0.0
    %2089 = vst.msk [vmem:[#allocation7] sm:$0xff] %vm83, %v2085
    %2090 = vst.msk [vmem:[#allocation7 + $0x8] sm:$0xff] %vm83, %v2086
    %2091 = vst.msk [vmem:[#allocation7 + $0x10] sm:$0xff] %vm83, %v2087
    %2092 = vst.msk [vmem:[#allocation7 + $0x18] sm:$0xff] %vm83, %v2088
    // Predicated region
    $region102: #{tpu_custom_call.1} parent=1 // pred_check
      _
    $region103: #{tpu_custom_call.1} parent=1 // pred_check_branch
      %2094 = sbr.rel (0) target = $region105
    $region104: #{tpu_custom_call.1} parent=1 // pred_region
      %s2096 = ssub.s32 512, 512
      %2097 = vsyncadd [#allocation8], %s2096
      %s2098 = sshll.u32 [#allocation7], 4
      %s2099 = int_to_ptr.vmem [resolvable:$true] %s2098
      %2104 = dma.vmem_to_hbm [thread:$0]  %s2099, 512, %s25, [#allocation8], 128, 128, 8
    $region105: #{tpu_custom_call.1} parent=1 // pred_fallthru
      _
    // Predicated region
    $region106: #{tpu_custom_call.1} parent=1 // pred_check
      _
    $region107: #{tpu_custom_call.1} parent=1 // pred_check_branch
      %2106 = sbr.rel (0) target = $region109
    $region108: #{tpu_custom_call.1} parent=1 // pred_region
      %2107 = dma.done [#allocation8], 512
    $region109: #{tpu_custom_call.1} parent=1 // pred_fallthru
      _
    %2108 = vsyncpa [#allocation8], 1

</llo_original>
